<compile_context>
chip_gen: v7x
topology: tpu7x:2x2x1
jax: 0.10.0
libtpu: 0.0.40
codegen_flags: <defaults>
</compile_context>

<pallas_src>
import jax
import jax.numpy as jnp
from jax import lax
from jax.experimental import pallas as pl
from jax.experimental.pallas import tpu as pltpu

# Static module parameters (from the PyTorch spec).
K = 4                       # both transposed convs use 4x4 kernels
CIN1, COUT1 = 1, 2          # conv1 = ConvTranspose2d(1, 2, 4, stride=1, padding=0, bias=False)
CIN2, COUT2 = 2, 4          # conv2 = ConvTranspose2d(2, 4, 4, stride=2, padding=1, bias=False)
PAD1 = K - 1                # halo for the stride-1 / padding-0 transposed conv

# Sub-pixel taps for a stride=2, padding=1, K=4 transposed conv:
# output row i = 2*a + r only touches kernel rows u of matching parity, reading the
# (1-halo-padded) stage-1 output at row a + d.  Same table for columns.
_PHASE_TAPS = {0: ((1, 1), (3, 0)),    # r (or c) = 0 -> ((u, d), ...)
               1: ((0, 2), (2, 1))}    # r (or c) = 1


def _pad2d(a, p):
    """Zero-pad a 2-D register value by p on every side (concatenate: always lowers)."""
    h, w = a.shape
    zc = jnp.zeros((h, p), a.dtype)
    a = jnp.concatenate([zc, a, zc], axis=1)
    zr = jnp.zeros((p, w + 2 * p), a.dtype)
    return jnp.concatenate([zr, a, zr], axis=0)


def _fused_kernel(x_ref, w1_ref, w2_ref, o_ref):
    """o = relu(convT2(relu(convT1(x)))), written directly in final NCHW layout.

    x_ref : (1, CIN1, H, W)              VMEM input
    w1_ref: (CIN1*COUT1*K*K,) f32        SMEM, PyTorch (in,out,kh,kw) layout, flattened
    w2_ref: (CIN2*COUT2*K*K,) f32        SMEM, PyTorch layout, flattened
    o_ref : (1, COUT2, 2*H1, 2*W1)       VMEM output, H1 = H + K - 1
    """
    _, _, h, w = x_ref.shape
    h1 = h + K - 1
    w1 = w + K - 1

    # ---- stage 1: ConvTranspose2d(1 -> 2, k=4, s=1, p=0) + ReLU --------------------
    xpad = _pad2d(x_ref[0, 0], PAD1)                       # (h+6, w+6), registers
    acc1 = [jnp.zeros((h1, w1), jnp.float32) for _ in range(COUT1)]
    for u in range(K):
        for v in range(K):
            # Window is independent of the output channel -> hoisted above co.
            win = xpad[PAD1 - u:PAD1 - u + h1, PAD1 - v:PAD1 - v + w1]
            for co in range(COUT1):                         # ci == 0 (CIN1 == 1)
                acc1[co] = acc1[co] + win * w1_ref[(co * K + u) * K + v]
    v2p = [_pad2d(jnp.maximum(a, 0.0), 1) for a in acc1]    # (h1+2, w1+2) each

    # ---- stage 2: ConvTranspose2d(2 -> 4, k=4, s=2, p=1) + ReLU, phase form --------
    # Hoist the shifted stage-2 windows (shared by all output channels and phases).
    win2 = [[[v2p[ci][du:du + h1, dv:dv + w1] for dv in range(3)]
             for du in range(3)] for ci in range(CIN2)]

    # Constant 0/1 permutation matrices for the sub-pixel interleave, built once from
    # 2-D iotas (shared by all channels).  The matmuls run on the otherwise-idle MXU.
    jj = lax.broadcasted_iota(jnp.int32, (w1, 2 * w1), 0)
    qq = lax.broadcasted_iota(jnp.int32, (w1, 2 * w1), 1)
    e_col = [(qq == 2 * jj + c).astype(jnp.float32) for c in range(2)]   # (w1, 2*w1)
    ii = lax.broadcasted_iota(jnp.int32, (2 * h1, h1), 0)
    aa = lax.broadcasted_iota(jnp.int32, (2 * h1, h1), 1)
    p_row = [(ii == 2 * aa + r).astype(jnp.float32) for r in range(2)]   # (2*h1, h1)

    for co in range(COUT2):
        rows = []
        for r in range(2):
            phase_acc = []
            for c in range(2):
                acc = jnp.zeros((h1, w1), jnp.float32)
                for ci in range(CIN2):
                    for u, du in _PHASE_TAPS[r]:
                        for v, dv in _PHASE_TAPS[c]:
                            wgt = w2_ref[((ci * COUT2 + co) * K + u) * K + v]
                            acc = acc + win2[ci][du][dv] * wgt
                phase_acc.append(acc)
            # Column interleave: lane 2*b + c takes phase-c column b.  -> (h1, 2*w1)
            rows.append(jnp.dot(phase_acc[0], e_col[0], preferred_element_type=jnp.float32) +
                        jnp.dot(phase_acc[1], e_col[1], preferred_element_type=jnp.float32))
        # Row interleave: row 2*a + r takes phase-r row a.  -> (2*h1, 2*w1)
        full = (jnp.dot(p_row[0], rows[0], preferred_element_type=jnp.float32) +
                jnp.dot(p_row[1], rows[1], preferred_element_type=jnp.float32))
        o_ref[0, co] = jnp.maximum(full, 0.0)


@jax.jit
def model_forward(x1, wt1, wt2):
    """Returns v4 = relu(conv2(relu(conv1(x1)))), matching the PyTorch Model.forward."""
    n, cin, h, w = x1.shape
    assert (n, cin) == (1, CIN1), (n, cin)
    assert wt1.shape == (CIN1, COUT1, K, K), wt1.shape
    assert wt2.shape == (CIN2, COUT2, K, K), wt2.shape
    h1, w1 = h + K - 1, w + K - 1            # conv1 output spatial size
    h2, w2 = 2 * h1, 2 * w1                  # conv2 output spatial size (s=2, p=1, k=4)

    # TODO(synk): the reference forward also builds v5 = conv2(v4) / v6 = relu(v5), which
    # has an input-channel mismatch (4 vs 2) and does not affect the returned v4; omitted.
    return pl.pallas_call(
        _fused_kernel,
        out_shape=jax.ShapeDtypeStruct((1, COUT2, h2, w2), jnp.float32),
        in_specs=[
            pl.BlockSpec(memory_space=pltpu.MemorySpace.VMEM),
            pl.BlockSpec(memory_space=pltpu.MemorySpace.SMEM),
            pl.BlockSpec(memory_space=pltpu.MemorySpace.SMEM),
        ],
        out_specs=pl.BlockSpec(memory_space=pltpu.MemorySpace.VMEM),
    )(x1, wt1.reshape(-1), wt2.reshape(-1))


def _ref_convtranspose_relu(x, wt, stride, padding):
    k = wt.shape[2]
    w_eff = jnp.transpose(wt[:, :, ::-1, ::-1], (1, 0, 2, 3))
    y = lax.conv_general_dilated(
        x, w_eff, window_strides=(1, 1),
        padding=[(k - 1 - padding, k - 1 - padding)] * 2,
        lhs_dilation=(stride, stride),
        dimension_numbers=("NCHW", "OIHW", "NCHW"))
    return jnp.maximum(y, 0.0)


if __name__ == "__main__":
    key = jax.random.PRNGKey(0)
    k1, k2, k3 = jax.random.split(key, 3)

    H = W = 16  # small spatial size consistent with the module's (1, 1, H, W) input
    x1 = jax.random.normal(k1, (1, CIN1, H, W), jnp.float32)
    # PyTorch ConvTranspose2d weight layout: (in_channels, out_channels, kH, kW)
    wt1 = jax.random.normal(k2, (CIN1, COUT1, K, K), jnp.float32) * 0.1
    wt2 = jax.random.normal(k3, (CIN2, COUT2, K, K), jnp.float32) * 0.1

    out = jax.block_until_ready(model_forward(x1, wt1, wt2))

    ref = _ref_convtranspose_relu(
        _ref_convtranspose_relu(x1, wt1, 1, 0), wt2, 2, 1)
    assert out.shape == ref.shape == (1, COUT2, 2 * (H + K - 1), 2 * (W + K - 1)), \
        (out.shape, ref.shape)
    assert jnp.allclose(out, ref, atol=1e-4, rtol=1e-4), \
        float(jnp.max(jnp.abs(out - ref)))
    print("KERNEL_OK")
</pallas_src>

<mosaic_0001>
module attributes {stable_mosaic.version = 11 : i64} {
  func.func @_fused_kernel(%arg0: memref<1x1x16x16xf32, #tpu.memory_space<vmem>>, %arg1: memref<32xf32, #tpu.memory_space<smem>>, %arg2: memref<128xf32, #tpu.memory_space<smem>>, %arg3: memref<1x4x38x38xf32, #tpu.memory_space<vmem>>) attributes {dimension_semantics = [], scalar_prefetch = 0 : i64, scratch_operands = 0 : i64, tpu.core_type = #tpu.core_type<tc>} {
    %c0 = arith.constant 0 : index
    %c0_0 = arith.constant 0 : index
    %c0_1 = arith.constant 0 : index
    %c0_2 = arith.constant 0 : index
    %0 = vector.load %arg0[%c0, %c0_0, %c0_1, %c0_2] : memref<1x1x16x16xf32, #tpu.memory_space<vmem>>, vector<1x1x16x16xf32>
    %1 = vector.shape_cast %0 : vector<1x1x16x16xf32> to vector<16x16xf32>
    %cst = arith.constant 0.000000e+00 : f32
    %2 = vector.broadcast %cst : f32 to vector<16x3xf32>
    %3 = tpu.concatenate %2, %1, %2 in 1 : vector<16x3xf32>, vector<16x16xf32>, vector<16x3xf32> -> vector<16x22xf32>
    %cst_3 = arith.constant 0.000000e+00 : f32
    %4 = vector.broadcast %cst_3 : f32 to vector<3x22xf32>
    %5 = tpu.concatenate %4, %3, %4 in 0 : vector<3x22xf32>, vector<16x22xf32>, vector<3x22xf32> -> vector<22x22xf32>
    %cst_4 = arith.constant 0.000000e+00 : f32
    %6 = vector.broadcast %cst_4 : f32 to vector<19x19xf32>
    %cst_5 = arith.constant 0.000000e+00 : f32
    %7 = vector.broadcast %cst_5 : f32 to vector<19x19xf32>
    %8 = vector.extract_strided_slice %5 {offsets = [3, 3], sizes = [19, 19], strides = [1, 1]} : vector<22x22xf32> to vector<19x19xf32>
    %c0_6 = arith.constant 0 : index
    %9 = memref.load %arg1[%c0_6] : memref<32xf32, #tpu.memory_space<smem>>
    %10 = vector.broadcast %9 : f32 to vector<19x19xf32>
    %11 = arith.mulf %8, %10 : vector<19x19xf32>
    %12 = arith.addf %6, %11 : vector<19x19xf32>
    %c16 = arith.constant 16 : index
    %13 = memref.load %arg1[%c16] : memref<32xf32, #tpu.memory_space<smem>>
    %14 = vector.broadcast %13 : f32 to vector<19x19xf32>
    %15 = arith.mulf %8, %14 : vector<19x19xf32>
    %16 = arith.addf %7, %15 : vector<19x19xf32>
    %17 = vector.extract_strided_slice %5 {offsets = [3, 2], sizes = [19, 19], strides = [1, 1]} : vector<22x22xf32> to vector<19x19xf32>
    %c1 = arith.constant 1 : index
    %18 = memref.load %arg1[%c1] : memref<32xf32, #tpu.memory_space<smem>>
    %19 = vector.broadcast %18 : f32 to vector<19x19xf32>
    %20 = arith.mulf %17, %19 : vector<19x19xf32>
    %21 = arith.addf %12, %20 : vector<19x19xf32>
    %c17 = arith.constant 17 : index
    %22 = memref.load %arg1[%c17] : memref<32xf32, #tpu.memory_space<smem>>
    %23 = vector.broadcast %22 : f32 to vector<19x19xf32>
    %24 = arith.mulf %17, %23 : vector<19x19xf32>
    %25 = arith.addf %16, %24 : vector<19x19xf32>
    %26 = vector.extract_strided_slice %5 {offsets = [3, 1], sizes = [19, 19], strides = [1, 1]} : vector<22x22xf32> to vector<19x19xf32>
    %c2 = arith.constant 2 : index
    %27 = memref.load %arg1[%c2] : memref<32xf32, #tpu.memory_space<smem>>
    %28 = vector.broadcast %27 : f32 to vector<19x19xf32>
    %29 = arith.mulf %26, %28 : vector<19x19xf32>
    %30 = arith.addf %21, %29 : vector<19x19xf32>
    %c18 = arith.constant 18 : index
    %31 = memref.load %arg1[%c18] : memref<32xf32, #tpu.memory_space<smem>>
    %32 = vector.broadcast %31 : f32 to vector<19x19xf32>
    %33 = arith.mulf %26, %32 : vector<19x19xf32>
    %34 = arith.addf %25, %33 : vector<19x19xf32>
    %35 = vector.extract_strided_slice %5 {offsets = [3, 0], sizes = [19, 19], strides = [1, 1]} : vector<22x22xf32> to vector<19x19xf32>
    %c3 = arith.constant 3 : index
    %36 = memref.load %arg1[%c3] : memref<32xf32, #tpu.memory_space<smem>>
    %37 = vector.broadcast %36 : f32 to vector<19x19xf32>
    %38 = arith.mulf %35, %37 : vector<19x19xf32>
    %39 = arith.addf %30, %38 : vector<19x19xf32>
    %c19 = arith.constant 19 : index
    %40 = memref.load %arg1[%c19] : memref<32xf32, #tpu.memory_space<smem>>
    %41 = vector.broadcast %40 : f32 to vector<19x19xf32>
    %42 = arith.mulf %35, %41 : vector<19x19xf32>
    %43 = arith.addf %34, %42 : vector<19x19xf32>
    %44 = vector.extract_strided_slice %5 {offsets = [2, 3], sizes = [19, 19], strides = [1, 1]} : vector<22x22xf32> to vector<19x19xf32>
    %c4 = arith.constant 4 : index
    %45 = memref.load %arg1[%c4] : memref<32xf32, #tpu.memory_space<smem>>
    %46 = vector.broadcast %45 : f32 to vector<19x19xf32>
    %47 = arith.mulf %44, %46 : vector<19x19xf32>
    %48 = arith.addf %39, %47 : vector<19x19xf32>
    %c20 = arith.constant 20 : index
    %49 = memref.load %arg1[%c20] : memref<32xf32, #tpu.memory_space<smem>>
    %50 = vector.broadcast %49 : f32 to vector<19x19xf32>
    %51 = arith.mulf %44, %50 : vector<19x19xf32>
    %52 = arith.addf %43, %51 : vector<19x19xf32>
    %53 = vector.extract_strided_slice %5 {offsets = [2, 2], sizes = [19, 19], strides = [1, 1]} : vector<22x22xf32> to vector<19x19xf32>
    %c5 = arith.constant 5 : index
    %54 = memref.load %arg1[%c5] : memref<32xf32, #tpu.memory_space<smem>>
    %55 = vector.broadcast %54 : f32 to vector<19x19xf32>
    %56 = arith.mulf %53, %55 : vector<19x19xf32>
    %57 = arith.addf %48, %56 : vector<19x19xf32>
    %c21 = arith.constant 21 : index
    %58 = memref.load %arg1[%c21] : memref<32xf32, #tpu.memory_space<smem>>
    %59 = vector.broadcast %58 : f32 to vector<19x19xf32>
    %60 = arith.mulf %53, %59 : vector<19x19xf32>
    %61 = arith.addf %52, %60 : vector<19x19xf32>
    %62 = vector.extract_strided_slice %5 {offsets = [2, 1], sizes = [19, 19], strides = [1, 1]} : vector<22x22xf32> to vector<19x19xf32>
    %c6 = arith.constant 6 : index
    %63 = memref.load %arg1[%c6] : memref<32xf32, #tpu.memory_space<smem>>
    %64 = vector.broadcast %63 : f32 to vector<19x19xf32>
    %65 = arith.mulf %62, %64 : vector<19x19xf32>
    %66 = arith.addf %57, %65 : vector<19x19xf32>
    %c22 = arith.constant 22 : index
    %67 = memref.load %arg1[%c22] : memref<32xf32, #tpu.memory_space<smem>>
    %68 = vector.broadcast %67 : f32 to vector<19x19xf32>
    %69 = arith.mulf %62, %68 : vector<19x19xf32>
    %70 = arith.addf %61, %69 : vector<19x19xf32>
    %71 = vector.extract_strided_slice %5 {offsets = [2, 0], sizes = [19, 19], strides = [1, 1]} : vector<22x22xf32> to vector<19x19xf32>
    %c7 = arith.constant 7 : index
    %72 = memref.load %arg1[%c7] : memref<32xf32, #tpu.memory_space<smem>>
    %73 = vector.broadcast %72 : f32 to vector<19x19xf32>
    %74 = arith.mulf %71, %73 : vector<19x19xf32>
    %75 = arith.addf %66, %74 : vector<19x19xf32>
    %c23 = arith.constant 23 : index
    %76 = memref.load %arg1[%c23] : memref<32xf32, #tpu.memory_space<smem>>
    %77 = vector.broadcast %76 : f32 to vector<19x19xf32>
    %78 = arith.mulf %71, %77 : vector<19x19xf32>
    %79 = arith.addf %70, %78 : vector<19x19xf32>
    %80 = vector.extract_strided_slice %5 {offsets = [1, 3], sizes = [19, 19], strides = [1, 1]} : vector<22x22xf32> to vector<19x19xf32>
    %c8 = arith.constant 8 : index
    %81 = memref.load %arg1[%c8] : memref<32xf32, #tpu.memory_space<smem>>
    %82 = vector.broadcast %81 : f32 to vector<19x19xf32>
    %83 = arith.mulf %80, %82 : vector<19x19xf32>
    %84 = arith.addf %75, %83 : vector<19x19xf32>
    %c24 = arith.constant 24 : index
    %85 = memref.load %arg1[%c24] : memref<32xf32, #tpu.memory_space<smem>>
    %86 = vector.broadcast %85 : f32 to vector<19x19xf32>
    %87 = arith.mulf %80, %86 : vector<19x19xf32>
    %88 = arith.addf %79, %87 : vector<19x19xf32>
    %89 = vector.extract_strided_slice %5 {offsets = [1, 2], sizes = [19, 19], strides = [1, 1]} : vector<22x22xf32> to vector<19x19xf32>
    %c9 = arith.constant 9 : index
    %90 = memref.load %arg1[%c9] : memref<32xf32, #tpu.memory_space<smem>>
    %91 = vector.broadcast %90 : f32 to vector<19x19xf32>
    %92 = arith.mulf %89, %91 : vector<19x19xf32>
    %93 = arith.addf %84, %92 : vector<19x19xf32>
    %c25 = arith.constant 25 : index
    %94 = memref.load %arg1[%c25] : memref<32xf32, #tpu.memory_space<smem>>
    %95 = vector.broadcast %94 : f32 to vector<19x19xf32>
    %96 = arith.mulf %89, %95 : vector<19x19xf32>
    %97 = arith.addf %88, %96 : vector<19x19xf32>
    %98 = vector.extract_strided_slice %5 {offsets = [1, 1], sizes = [19, 19], strides = [1, 1]} : vector<22x22xf32> to vector<19x19xf32>
    %c10 = arith.constant 10 : index
    %99 = memref.load %arg1[%c10] : memref<32xf32, #tpu.memory_space<smem>>
    %100 = vector.broadcast %99 : f32 to vector<19x19xf32>
    %101 = arith.mulf %98, %100 : vector<19x19xf32>
    %102 = arith.addf %93, %101 : vector<19x19xf32>
    %c26 = arith.constant 26 : index
    %103 = memref.load %arg1[%c26] : memref<32xf32, #tpu.memory_space<smem>>
    %104 = vector.broadcast %103 : f32 to vector<19x19xf32>
    %105 = arith.mulf %98, %104 : vector<19x19xf32>
    %106 = arith.addf %97, %105 : vector<19x19xf32>
    %107 = vector.extract_strided_slice %5 {offsets = [1, 0], sizes = [19, 19], strides = [1, 1]} : vector<22x22xf32> to vector<19x19xf32>
    %c11 = arith.constant 11 : index
    %108 = memref.load %arg1[%c11] : memref<32xf32, #tpu.memory_space<smem>>
    %109 = vector.broadcast %108 : f32 to vector<19x19xf32>
    %110 = arith.mulf %107, %109 : vector<19x19xf32>
    %111 = arith.addf %102, %110 : vector<19x19xf32>
    %c27 = arith.constant 27 : index
    %112 = memref.load %arg1[%c27] : memref<32xf32, #tpu.memory_space<smem>>
    %113 = vector.broadcast %112 : f32 to vector<19x19xf32>
    %114 = arith.mulf %107, %113 : vector<19x19xf32>
    %115 = arith.addf %106, %114 : vector<19x19xf32>
    %116 = vector.extract_strided_slice %5 {offsets = [0, 3], sizes = [19, 19], strides = [1, 1]} : vector<22x22xf32> to vector<19x19xf32>
    %c12 = arith.constant 12 : index
    %117 = memref.load %arg1[%c12] : memref<32xf32, #tpu.memory_space<smem>>
    %118 = vector.broadcast %117 : f32 to vector<19x19xf32>
    %119 = arith.mulf %116, %118 : vector<19x19xf32>
    %120 = arith.addf %111, %119 : vector<19x19xf32>
    %c28 = arith.constant 28 : index
    %121 = memref.load %arg1[%c28] : memref<32xf32, #tpu.memory_space<smem>>
    %122 = vector.broadcast %121 : f32 to vector<19x19xf32>
    %123 = arith.mulf %116, %122 : vector<19x19xf32>
    %124 = arith.addf %115, %123 : vector<19x19xf32>
    %125 = vector.extract_strided_slice %5 {offsets = [0, 2], sizes = [19, 19], strides = [1, 1]} : vector<22x22xf32> to vector<19x19xf32>
    %c13 = arith.constant 13 : index
    %126 = memref.load %arg1[%c13] : memref<32xf32, #tpu.memory_space<smem>>
    %127 = vector.broadcast %126 : f32 to vector<19x19xf32>
    %128 = arith.mulf %125, %127 : vector<19x19xf32>
    %129 = arith.addf %120, %128 : vector<19x19xf32>
    %c29 = arith.constant 29 : index
    %130 = memref.load %arg1[%c29] : memref<32xf32, #tpu.memory_space<smem>>
    %131 = vector.broadcast %130 : f32 to vector<19x19xf32>
    %132 = arith.mulf %125, %131 : vector<19x19xf32>
    %133 = arith.addf %124, %132 : vector<19x19xf32>
    %134 = vector.extract_strided_slice %5 {offsets = [0, 1], sizes = [19, 19], strides = [1, 1]} : vector<22x22xf32> to vector<19x19xf32>
    %c14 = arith.constant 14 : index
    %135 = memref.load %arg1[%c14] : memref<32xf32, #tpu.memory_space<smem>>
    %136 = vector.broadcast %135 : f32 to vector<19x19xf32>
    %137 = arith.mulf %134, %136 : vector<19x19xf32>
    %138 = arith.addf %129, %137 : vector<19x19xf32>
    %c30 = arith.constant 30 : index
    %139 = memref.load %arg1[%c30] : memref<32xf32, #tpu.memory_space<smem>>
    %140 = vector.broadcast %139 : f32 to vector<19x19xf32>
    %141 = arith.mulf %134, %140 : vector<19x19xf32>
    %142 = arith.addf %133, %141 : vector<19x19xf32>
    %143 = vector.extract_strided_slice %5 {offsets = [0, 0], sizes = [19, 19], strides = [1, 1]} : vector<22x22xf32> to vector<19x19xf32>
    %c15 = arith.constant 15 : index
    %144 = memref.load %arg1[%c15] : memref<32xf32, #tpu.memory_space<smem>>
    %145 = vector.broadcast %144 : f32 to vector<19x19xf32>
    %146 = arith.mulf %143, %145 : vector<19x19xf32>
    %147 = arith.addf %138, %146 : vector<19x19xf32>
    %c31 = arith.constant 31 : index
    %148 = memref.load %arg1[%c31] : memref<32xf32, #tpu.memory_space<smem>>
    %149 = vector.broadcast %148 : f32 to vector<19x19xf32>
    %150 = arith.mulf %143, %149 : vector<19x19xf32>
    %151 = arith.addf %142, %150 : vector<19x19xf32>
    %cst_7 = arith.constant 0.000000e+00 : f32
    %152 = vector.broadcast %cst_7 : f32 to vector<19x19xf32>
    %153 = arith.maximumf %147, %152 : vector<19x19xf32>
    %cst_8 = arith.constant 0.000000e+00 : f32
    %154 = vector.broadcast %cst_8 : f32 to vector<19x1xf32>
    %155 = tpu.concatenate %154, %153, %154 in 1 : vector<19x1xf32>, vector<19x19xf32>, vector<19x1xf32> -> vector<19x21xf32>
    %cst_9 = arith.constant 0.000000e+00 : f32
    %156 = vector.broadcast %cst_9 : f32 to vector<1x21xf32>
    %157 = tpu.concatenate %156, %155, %156 in 0 : vector<1x21xf32>, vector<19x21xf32>, vector<1x21xf32> -> vector<21x21xf32>
    %cst_10 = arith.constant 0.000000e+00 : f32
    %158 = vector.broadcast %cst_10 : f32 to vector<19x19xf32>
    %159 = arith.maximumf %151, %158 : vector<19x19xf32>
    %cst_11 = arith.constant 0.000000e+00 : f32
    %160 = vector.broadcast %cst_11 : f32 to vector<19x1xf32>
    %161 = tpu.concatenate %160, %159, %160 in 1 : vector<19x1xf32>, vector<19x19xf32>, vector<19x1xf32> -> vector<19x21xf32>
    %cst_12 = arith.constant 0.000000e+00 : f32
    %162 = vector.broadcast %cst_12 : f32 to vector<1x21xf32>
    %163 = tpu.concatenate %162, %161, %162 in 0 : vector<1x21xf32>, vector<19x21xf32>, vector<1x21xf32> -> vector<21x21xf32>
    %164 = vector.extract_strided_slice %157 {offsets = [0, 0], sizes = [19, 19], strides = [1, 1]} : vector<21x21xf32> to vector<19x19xf32>
    %165 = vector.extract_strided_slice %157 {offsets = [0, 1], sizes = [19, 19], strides = [1, 1]} : vector<21x21xf32> to vector<19x19xf32>
    %166 = vector.extract_strided_slice %157 {offsets = [0, 2], sizes = [19, 19], strides = [1, 1]} : vector<21x21xf32> to vector<19x19xf32>
    %167 = vector.extract_strided_slice %157 {offsets = [1, 0], sizes = [19, 19], strides = [1, 1]} : vector<21x21xf32> to vector<19x19xf32>
    %168 = vector.extract_strided_slice %157 {offsets = [1, 1], sizes = [19, 19], strides = [1, 1]} : vector<21x21xf32> to vector<19x19xf32>
    %169 = vector.extract_strided_slice %157 {offsets = [1, 2], sizes = [19, 19], strides = [1, 1]} : vector<21x21xf32> to vector<19x19xf32>
    %170 = vector.extract_strided_slice %157 {offsets = [2, 0], sizes = [19, 19], strides = [1, 1]} : vector<21x21xf32> to vector<19x19xf32>
    %171 = vector.extract_strided_slice %157 {offsets = [2, 1], sizes = [19, 19], strides = [1, 1]} : vector<21x21xf32> to vector<19x19xf32>
    %172 = vector.extract_strided_slice %157 {offsets = [2, 2], sizes = [19, 19], strides = [1, 1]} : vector<21x21xf32> to vector<19x19xf32>
    %173 = vector.extract_strided_slice %163 {offsets = [0, 0], sizes = [19, 19], strides = [1, 1]} : vector<21x21xf32> to vector<19x19xf32>
    %174 = vector.extract_strided_slice %163 {offsets = [0, 1], sizes = [19, 19], strides = [1, 1]} : vector<21x21xf32> to vector<19x19xf32>
    %175 = vector.extract_strided_slice %163 {offsets = [0, 2], sizes = [19, 19], strides = [1, 1]} : vector<21x21xf32> to vector<19x19xf32>
    %176 = vector.extract_strided_slice %163 {offsets = [1, 0], sizes = [19, 19], strides = [1, 1]} : vector<21x21xf32> to vector<19x19xf32>
    %177 = vector.extract_strided_slice %163 {offsets = [1, 1], sizes = [19, 19], strides = [1, 1]} : vector<21x21xf32> to vector<19x19xf32>
    %178 = vector.extract_strided_slice %163 {offsets = [1, 2], sizes = [19, 19], strides = [1, 1]} : vector<21x21xf32> to vector<19x19xf32>
    %179 = vector.extract_strided_slice %163 {offsets = [2, 0], sizes = [19, 19], strides = [1, 1]} : vector<21x21xf32> to vector<19x19xf32>
    %180 = vector.extract_strided_slice %163 {offsets = [2, 1], sizes = [19, 19], strides = [1, 1]} : vector<21x21xf32> to vector<19x19xf32>
    %181 = vector.extract_strided_slice %163 {offsets = [2, 2], sizes = [19, 19], strides = [1, 1]} : vector<21x21xf32> to vector<19x19xf32>
    %182 = tpu.iota {dimensions = array<i32: 0>} : vector<19x38xi32>
    %183 = tpu.iota {dimensions = array<i32: 1>} : vector<19x38xi32>
    %c2_i32 = arith.constant 2 : i32
    %184 = vector.broadcast %c2_i32 : i32 to vector<19x38xi32>
    %185 = arith.muli %184, %182 : vector<19x38xi32>
    %c0_i32 = arith.constant 0 : i32
    %186 = vector.broadcast %c0_i32 : i32 to vector<19x38xi32>
    %187 = arith.addi %185, %186 : vector<19x38xi32>
    %188 = arith.cmpi eq, %183, %187 : vector<19x38xi32>
    %189 = arith.extui %188 : vector<19x38xi1> to vector<19x38xi32>
    %190 = arith.sitofp %189 : vector<19x38xi32> to vector<19x38xf32>
    %c2_i32_13 = arith.constant 2 : i32
    %191 = vector.broadcast %c2_i32_13 : i32 to vector<19x38xi32>
    %192 = arith.muli %191, %182 : vector<19x38xi32>
    %c1_i32 = arith.constant 1 : i32
    %193 = vector.broadcast %c1_i32 : i32 to vector<19x38xi32>
    %194 = arith.addi %192, %193 : vector<19x38xi32>
    %195 = arith.cmpi eq, %183, %194 : vector<19x38xi32>
    %196 = arith.extui %195 : vector<19x38xi1> to vector<19x38xi32>
    %197 = arith.sitofp %196 : vector<19x38xi32> to vector<19x38xf32>
    %198 = tpu.iota {dimensions = array<i32: 0>} : vector<38x19xi32>
    %199 = tpu.iota {dimensions = array<i32: 1>} : vector<38x19xi32>
    %c2_i32_14 = arith.constant 2 : i32
    %200 = vector.broadcast %c2_i32_14 : i32 to vector<38x19xi32>
    %201 = arith.muli %200, %199 : vector<38x19xi32>
    %c0_i32_15 = arith.constant 0 : i32
    %202 = vector.broadcast %c0_i32_15 : i32 to vector<38x19xi32>
    %203 = arith.addi %201, %202 : vector<38x19xi32>
    %204 = arith.cmpi eq, %198, %203 : vector<38x19xi32>
    %205 = arith.extui %204 : vector<38x19xi1> to vector<38x19xi32>
    %206 = arith.sitofp %205 : vector<38x19xi32> to vector<38x19xf32>
    %c2_i32_16 = arith.constant 2 : i32
    %207 = vector.broadcast %c2_i32_16 : i32 to vector<38x19xi32>
    %208 = arith.muli %207, %199 : vector<38x19xi32>
    %c1_i32_17 = arith.constant 1 : i32
    %209 = vector.broadcast %c1_i32_17 : i32 to vector<38x19xi32>
    %210 = arith.addi %208, %209 : vector<38x19xi32>
    %211 = arith.cmpi eq, %198, %210 : vector<38x19xi32>
    %212 = arith.extui %211 : vector<38x19xi1> to vector<38x19xi32>
    %213 = arith.sitofp %212 : vector<38x19xi32> to vector<38x19xf32>
    %cst_18 = arith.constant 0.000000e+00 : f32
    %214 = vector.broadcast %cst_18 : f32 to vector<19x19xf32>
    %c5_19 = arith.constant 5 : index
    %215 = memref.load %arg2[%c5_19] : memref<128xf32, #tpu.memory_space<smem>>
    %216 = vector.broadcast %215 : f32 to vector<19x19xf32>
    %217 = arith.mulf %168, %216 : vector<19x19xf32>
    %218 = arith.addf %214, %217 : vector<19x19xf32>
    %c7_20 = arith.constant 7 : index
    %219 = memref.load %arg2[%c7_20] : memref<128xf32, #tpu.memory_space<smem>>
    %220 = vector.broadcast %219 : f32 to vector<19x19xf32>
    %221 = arith.mulf %167, %220 : vector<19x19xf32>
    %222 = arith.addf %218, %221 : vector<19x19xf32>
    %c13_21 = arith.constant 13 : index
    %223 = memref.load %arg2[%c13_21] : memref<128xf32, #tpu.memory_space<smem>>
    %224 = vector.broadcast %223 : f32 to vector<19x19xf32>
    %225 = arith.mulf %165, %224 : vector<19x19xf32>
    %226 = arith.addf %222, %225 : vector<19x19xf32>
    %c15_22 = arith.constant 15 : index
    %227 = memref.load %arg2[%c15_22] : memref<128xf32, #tpu.memory_space<smem>>
    %228 = vector.broadcast %227 : f32 to vector<19x19xf32>
    %229 = arith.mulf %164, %228 : vector<19x19xf32>
    %230 = arith.addf %226, %229 : vector<19x19xf32>
    %c69 = arith.constant 69 : index
    %231 = memref.load %arg2[%c69] : memref<128xf32, #tpu.memory_space<smem>>
    %232 = vector.broadcast %231 : f32 to vector<19x19xf32>
    %233 = arith.mulf %177, %232 : vector<19x19xf32>
    %234 = arith.addf %230, %233 : vector<19x19xf32>
    %c71 = arith.constant 71 : index
    %235 = memref.load %arg2[%c71] : memref<128xf32, #tpu.memory_space<smem>>
    %236 = vector.broadcast %235 : f32 to vector<19x19xf32>
    %237 = arith.mulf %176, %236 : vector<19x19xf32>
    %238 = arith.addf %234, %237 : vector<19x19xf32>
    %c77 = arith.constant 77 : index
    %239 = memref.load %arg2[%c77] : memref<128xf32, #tpu.memory_space<smem>>
    %240 = vector.broadcast %239 : f32 to vector<19x19xf32>
    %241 = arith.mulf %174, %240 : vector<19x19xf32>
    %242 = arith.addf %238, %241 : vector<19x19xf32>
    %c79 = arith.constant 79 : index
    %243 = memref.load %arg2[%c79] : memref<128xf32, #tpu.memory_space<smem>>
    %244 = vector.broadcast %243 : f32 to vector<19x19xf32>
    %245 = arith.mulf %173, %244 : vector<19x19xf32>
    %246 = arith.addf %242, %245 : vector<19x19xf32>
    %cst_23 = arith.constant 0.000000e+00 : f32
    %247 = vector.broadcast %cst_23 : f32 to vector<19x19xf32>
    %c4_24 = arith.constant 4 : index
    %248 = memref.load %arg2[%c4_24] : memref<128xf32, #tpu.memory_space<smem>>
    %249 = vector.broadcast %248 : f32 to vector<19x19xf32>
    %250 = arith.mulf %169, %249 : vector<19x19xf32>
    %251 = arith.addf %247, %250 : vector<19x19xf32>
    %c6_25 = arith.constant 6 : index
    %252 = memref.load %arg2[%c6_25] : memref<128xf32, #tpu.memory_space<smem>>
    %253 = vector.broadcast %252 : f32 to vector<19x19xf32>
    %254 = arith.mulf %168, %253 : vector<19x19xf32>
    %255 = arith.addf %251, %254 : vector<19x19xf32>
    %c12_26 = arith.constant 12 : index
    %256 = memref.load %arg2[%c12_26] : memref<128xf32, #tpu.memory_space<smem>>
    %257 = vector.broadcast %256 : f32 to vector<19x19xf32>
    %258 = arith.mulf %166, %257 : vector<19x19xf32>
    %259 = arith.addf %255, %258 : vector<19x19xf32>
    %c14_27 = arith.constant 14 : index
    %260 = memref.load %arg2[%c14_27] : memref<128xf32, #tpu.memory_space<smem>>
    %261 = vector.broadcast %260 : f32 to vector<19x19xf32>
    %262 = arith.mulf %165, %261 : vector<19x19xf32>
    %263 = arith.addf %259, %262 : vector<19x19xf32>
    %c68 = arith.constant 68 : index
    %264 = memref.load %arg2[%c68] : memref<128xf32, #tpu.memory_space<smem>>
    %265 = vector.broadcast %264 : f32 to vector<19x19xf32>
    %266 = arith.mulf %178, %265 : vector<19x19xf32>
    %267 = arith.addf %263, %266 : vector<19x19xf32>
    %c70 = arith.constant 70 : index
    %268 = memref.load %arg2[%c70] : memref<128xf32, #tpu.memory_space<smem>>
    %269 = vector.broadcast %268 : f32 to vector<19x19xf32>
    %270 = arith.mulf %177, %269 : vector<19x19xf32>
    %271 = arith.addf %267, %270 : vector<19x19xf32>
    %c76 = arith.constant 76 : index
    %272 = memref.load %arg2[%c76] : memref<128xf32, #tpu.memory_space<smem>>
    %273 = vector.broadcast %272 : f32 to vector<19x19xf32>
    %274 = arith.mulf %175, %273 : vector<19x19xf32>
    %275 = arith.addf %271, %274 : vector<19x19xf32>
    %c78 = arith.constant 78 : index
    %276 = memref.load %arg2[%c78] : memref<128xf32, #tpu.memory_space<smem>>
    %277 = vector.broadcast %276 : f32 to vector<19x19xf32>
    %278 = arith.mulf %174, %277 : vector<19x19xf32>
    %279 = arith.addf %275, %278 : vector<19x19xf32>
    %cst_28 = arith.constant dense<0.000000e+00> : vector<19x38xf32>
    %280 = tpu.matmul %246, %190, %cst_28 {dimension_numbers = #tpu.dot_dimension_numbers<[1], [0], [0], [1], [0, 0, 1, 1], [], []>} : vector<19x19xf32>, vector<19x38xf32>, vector<19x38xf32> -> vector<19x38xf32>
    %cst_29 = arith.constant dense<0.000000e+00> : vector<19x38xf32>
    %281 = tpu.matmul %279, %197, %cst_29 {dimension_numbers = #tpu.dot_dimension_numbers<[1], [0], [0], [1], [0, 0, 1, 1], [], []>} : vector<19x19xf32>, vector<19x38xf32>, vector<19x38xf32> -> vector<19x38xf32>
    %282 = arith.addf %280, %281 : vector<19x38xf32>
    %cst_30 = arith.constant 0.000000e+00 : f32
    %283 = vector.broadcast %cst_30 : f32 to vector<19x19xf32>
    %c1_31 = arith.constant 1 : index
    %284 = memref.load %arg2[%c1_31] : memref<128xf32, #tpu.memory_space<smem>>
    %285 = vector.broadcast %284 : f32 to vector<19x19xf32>
    %286 = arith.mulf %171, %285 : vector<19x19xf32>
    %287 = arith.addf %283, %286 : vector<19x19xf32>
    %c3_32 = arith.constant 3 : index
    %288 = memref.load %arg2[%c3_32] : memref<128xf32, #tpu.memory_space<smem>>
    %289 = vector.broadcast %288 : f32 to vector<19x19xf32>
    %290 = arith.mulf %170, %289 : vector<19x19xf32>
    %291 = arith.addf %287, %290 : vector<19x19xf32>
    %c9_33 = arith.constant 9 : index
    %292 = memref.load %arg2[%c9_33] : memref<128xf32, #tpu.memory_space<smem>>
    %293 = vector.broadcast %292 : f32 to vector<19x19xf32>
    %294 = arith.mulf %168, %293 : vector<19x19xf32>
    %295 = arith.addf %291, %294 : vector<19x19xf32>
    %c11_34 = arith.constant 11 : index
    %296 = memref.load %arg2[%c11_34] : memref<128xf32, #tpu.memory_space<smem>>
    %297 = vector.broadcast %296 : f32 to vector<19x19xf32>
    %298 = arith.mulf %167, %297 : vector<19x19xf32>
    %299 = arith.addf %295, %298 : vector<19x19xf32>
    %c65 = arith.constant 65 : index
    %300 = memref.load %arg2[%c65] : memref<128xf32, #tpu.memory_space<smem>>
    %301 = vector.broadcast %300 : f32 to vector<19x19xf32>
    %302 = arith.mulf %180, %301 : vector<19x19xf32>
    %303 = arith.addf %299, %302 : vector<19x19xf32>
    %c67 = arith.constant 67 : index
    %304 = memref.load %arg2[%c67] : memref<128xf32, #tpu.memory_space<smem>>
    %305 = vector.broadcast %304 : f32 to vector<19x19xf32>
    %306 = arith.mulf %179, %305 : vector<19x19xf32>
    %307 = arith.addf %303, %306 : vector<19x19xf32>
    %c73 = arith.constant 73 : index
    %308 = memref.load %arg2[%c73] : memref<128xf32, #tpu.memory_space<smem>>
    %309 = vector.broadcast %308 : f32 to vector<19x19xf32>
    %310 = arith.mulf %177, %309 : vector<19x19xf32>
    %311 = arith.addf %307, %310 : vector<19x19xf32>
    %c75 = arith.constant 75 : index
    %312 = memref.load %arg2[%c75] : memref<128xf32, #tpu.memory_space<smem>>
    %313 = vector.broadcast %312 : f32 to vector<19x19xf32>
    %314 = arith.mulf %176, %313 : vector<19x19xf32>
    %315 = arith.addf %311, %314 : vector<19x19xf32>
    %cst_35 = arith.constant 0.000000e+00 : f32
    %316 = vector.broadcast %cst_35 : f32 to vector<19x19xf32>
    %c0_36 = arith.constant 0 : index
    %317 = memref.load %arg2[%c0_36] : memref<128xf32, #tpu.memory_space<smem>>
    %318 = vector.broadcast %317 : f32 to vector<19x19xf32>
    %319 = arith.mulf %172, %318 : vector<19x19xf32>
    %320 = arith.addf %316, %319 : vector<19x19xf32>
    %c2_37 = arith.constant 2 : index
    %321 = memref.load %arg2[%c2_37] : memref<128xf32, #tpu.memory_space<smem>>
    %322 = vector.broadcast %321 : f32 to vector<19x19xf32>
    %323 = arith.mulf %171, %322 : vector<19x19xf32>
    %324 = arith.addf %320, %323 : vector<19x19xf32>
    %c8_38 = arith.constant 8 : index
    %325 = memref.load %arg2[%c8_38] : memref<128xf32, #tpu.memory_space<smem>>
    %326 = vector.broadcast %325 : f32 to vector<19x19xf32>
    %327 = arith.mulf %169, %326 : vector<19x19xf32>
    %328 = arith.addf %324, %327 : vector<19x19xf32>
    %c10_39 = arith.constant 10 : index
    %329 = memref.load %arg2[%c10_39] : memref<128xf32, #tpu.memory_space<smem>>
    %330 = vector.broadcast %329 : f32 to vector<19x19xf32>
    %331 = arith.mulf %168, %330 : vector<19x19xf32>
    %332 = arith.addf %328, %331 : vector<19x19xf32>
    %c64 = arith.constant 64 : index
    %333 = memref.load %arg2[%c64] : memref<128xf32, #tpu.memory_space<smem>>
    %334 = vector.broadcast %333 : f32 to vector<19x19xf32>
    %335 = arith.mulf %181, %334 : vector<19x19xf32>
    %336 = arith.addf %332, %335 : vector<19x19xf32>
    %c66 = arith.constant 66 : index
    %337 = memref.load %arg2[%c66] : memref<128xf32, #tpu.memory_space<smem>>
    %338 = vector.broadcast %337 : f32 to vector<19x19xf32>
    %339 = arith.mulf %180, %338 : vector<19x19xf32>
    %340 = arith.addf %336, %339 : vector<19x19xf32>
    %c72 = arith.constant 72 : index
    %341 = memref.load %arg2[%c72] : memref<128xf32, #tpu.memory_space<smem>>
    %342 = vector.broadcast %341 : f32 to vector<19x19xf32>
    %343 = arith.mulf %178, %342 : vector<19x19xf32>
    %344 = arith.addf %340, %343 : vector<19x19xf32>
    %c74 = arith.constant 74 : index
    %345 = memref.load %arg2[%c74] : memref<128xf32, #tpu.memory_space<smem>>
    %346 = vector.broadcast %345 : f32 to vector<19x19xf32>
    %347 = arith.mulf %177, %346 : vector<19x19xf32>
    %348 = arith.addf %344, %347 : vector<19x19xf32>
    %cst_40 = arith.constant dense<0.000000e+00> : vector<19x38xf32>
    %349 = tpu.matmul %315, %190, %cst_40 {dimension_numbers = #tpu.dot_dimension_numbers<[1], [0], [0], [1], [0, 0, 1, 1], [], []>} : vector<19x19xf32>, vector<19x38xf32>, vector<19x38xf32> -> vector<19x38xf32>
    %cst_41 = arith.constant dense<0.000000e+00> : vector<19x38xf32>
    %350 = tpu.matmul %348, %197, %cst_41 {dimension_numbers = #tpu.dot_dimension_numbers<[1], [0], [0], [1], [0, 0, 1, 1], [], []>} : vector<19x19xf32>, vector<19x38xf32>, vector<19x38xf32> -> vector<19x38xf32>
    %351 = arith.addf %349, %350 : vector<19x38xf32>
    %cst_42 = arith.constant dense<0.000000e+00> : vector<38x38xf32>
    %352 = tpu.matmul %206, %282, %cst_42 {dimension_numbers = #tpu.dot_dimension_numbers<[1], [0], [0], [1], [0, 0, 1, 1], [], []>} : vector<38x19xf32>, vector<19x38xf32>, vector<38x38xf32> -> vector<38x38xf32>
    %cst_43 = arith.constant dense<0.000000e+00> : vector<38x38xf32>
    %353 = tpu.matmul %213, %351, %cst_43 {dimension_numbers = #tpu.dot_dimension_numbers<[1], [0], [0], [1], [0, 0, 1, 1], [], []>} : vector<38x19xf32>, vector<19x38xf32>, vector<38x38xf32> -> vector<38x38xf32>
    %354 = arith.addf %352, %353 : vector<38x38xf32>
    %cst_44 = arith.constant 0.000000e+00 : f32
    %355 = vector.broadcast %cst_44 : f32 to vector<38x38xf32>
    %356 = arith.maximumf %354, %355 : vector<38x38xf32>
    %c0_45 = arith.constant 0 : index
    %c0_46 = arith.constant 0 : index
    %c0_47 = arith.constant 0 : index
    %c0_48 = arith.constant 0 : index
    %357 = vector.load %arg3[%c0_45, %c0_46, %c0_47, %c0_48] : memref<1x4x38x38xf32, #tpu.memory_space<vmem>>, vector<1x1x38x38xf32>
    %358 = vector.shape_cast %357 : vector<1x1x38x38xf32> to vector<38x38xf32>
    %359 = vector.shape_cast %356 : vector<38x38xf32> to vector<1x1x38x38xf32>
    tpu.vector_store %arg3[%c0_45, %c0_46, %c0_47, %c0_48], %359 {strides = array<i32>} : memref<1x4x38x38xf32, #tpu.memory_space<vmem>>, vector<1x1x38x38xf32>,
    %cst_49 = arith.constant 0.000000e+00 : f32
    %360 = vector.broadcast %cst_49 : f32 to vector<19x19xf32>
    %c21_50 = arith.constant 21 : index
    %361 = memref.load %arg2[%c21_50] : memref<128xf32, #tpu.memory_space<smem>>
    %362 = vector.broadcast %361 : f32 to vector<19x19xf32>
    %363 = arith.mulf %168, %362 : vector<19x19xf32>
    %364 = arith.addf %360, %363 : vector<19x19xf32>
    %c23_51 = arith.constant 23 : index
    %365 = memref.load %arg2[%c23_51] : memref<128xf32, #tpu.memory_space<smem>>
    %366 = vector.broadcast %365 : f32 to vector<19x19xf32>
    %367 = arith.mulf %167, %366 : vector<19x19xf32>
    %368 = arith.addf %364, %367 : vector<19x19xf32>
    %c29_52 = arith.constant 29 : index
    %369 = memref.load %arg2[%c29_52] : memref<128xf32, #tpu.memory_space<smem>>
    %370 = vector.broadcast %369 : f32 to vector<19x19xf32>
    %371 = arith.mulf %165, %370 : vector<19x19xf32>
    %372 = arith.addf %368, %371 : vector<19x19xf32>
    %c31_53 = arith.constant 31 : index
    %373 = memref.load %arg2[%c31_53] : memref<128xf32, #tpu.memory_space<smem>>
    %374 = vector.broadcast %373 : f32 to vector<19x19xf32>
    %375 = arith.mulf %164, %374 : vector<19x19xf32>
    %376 = arith.addf %372, %375 : vector<19x19xf32>
    %c85 = arith.constant 85 : index
    %377 = memref.load %arg2[%c85] : memref<128xf32, #tpu.memory_space<smem>>
    %378 = vector.broadcast %377 : f32 to vector<19x19xf32>
    %379 = arith.mulf %177, %378 : vector<19x19xf32>
    %380 = arith.addf %376, %379 : vector<19x19xf32>
    %c87 = arith.constant 87 : index
    %381 = memref.load %arg2[%c87] : memref<128xf32, #tpu.memory_space<smem>>
    %382 = vector.broadcast %381 : f32 to vector<19x19xf32>
    %383 = arith.mulf %176, %382 : vector<19x19xf32>
    %384 = arith.addf %380, %383 : vector<19x19xf32>
    %c93 = arith.constant 93 : index
    %385 = memref.load %arg2[%c93] : memref<128xf32, #tpu.memory_space<smem>>
    %386 = vector.broadcast %385 : f32 to vector<19x19xf32>
    %387 = arith.mulf %174, %386 : vector<19x19xf32>
    %388 = arith.addf %384, %387 : vector<19x19xf32>
    %c95 = arith.constant 95 : index
    %389 = memref.load %arg2[%c95] : memref<128xf32, #tpu.memory_space<smem>>
    %390 = vector.broadcast %389 : f32 to vector<19x19xf32>
    %391 = arith.mulf %173, %390 : vector<19x19xf32>
    %392 = arith.addf %388, %391 : vector<19x19xf32>
    %cst_54 = arith.constant 0.000000e+00 : f32
    %393 = vector.broadcast %cst_54 : f32 to vector<19x19xf32>
    %c20_55 = arith.constant 20 : index
    %394 = memref.load %arg2[%c20_55] : memref<128xf32, #tpu.memory_space<smem>>
    %395 = vector.broadcast %394 : f32 to vector<19x19xf32>
    %396 = arith.mulf %169, %395 : vector<19x19xf32>
    %397 = arith.addf %393, %396 : vector<19x19xf32>
    %c22_56 = arith.constant 22 : index
    %398 = memref.load %arg2[%c22_56] : memref<128xf32, #tpu.memory_space<smem>>
    %399 = vector.broadcast %398 : f32 to vector<19x19xf32>
    %400 = arith.mulf %168, %399 : vector<19x19xf32>
    %401 = arith.addf %397, %400 : vector<19x19xf32>
    %c28_57 = arith.constant 28 : index
    %402 = memref.load %arg2[%c28_57] : memref<128xf32, #tpu.memory_space<smem>>
    %403 = vector.broadcast %402 : f32 to vector<19x19xf32>
    %404 = arith.mulf %166, %403 : vector<19x19xf32>
    %405 = arith.addf %401, %404 : vector<19x19xf32>
    %c30_58 = arith.constant 30 : index
    %406 = memref.load %arg2[%c30_58] : memref<128xf32, #tpu.memory_space<smem>>
    %407 = vector.broadcast %406 : f32 to vector<19x19xf32>
    %408 = arith.mulf %165, %407 : vector<19x19xf32>
    %409 = arith.addf %405, %408 : vector<19x19xf32>
    %c84 = arith.constant 84 : index
    %410 = memref.load %arg2[%c84] : memref<128xf32, #tpu.memory_space<smem>>
    %411 = vector.broadcast %410 : f32 to vector<19x19xf32>
    %412 = arith.mulf %178, %411 : vector<19x19xf32>
    %413 = arith.addf %409, %412 : vector<19x19xf32>
    %c86 = arith.constant 86 : index
    %414 = memref.load %arg2[%c86] : memref<128xf32, #tpu.memory_space<smem>>
    %415 = vector.broadcast %414 : f32 to vector<19x19xf32>
    %416 = arith.mulf %177, %415 : vector<19x19xf32>
    %417 = arith.addf %413, %416 : vector<19x19xf32>
    %c92 = arith.constant 92 : index
    %418 = memref.load %arg2[%c92] : memref<128xf32, #tpu.memory_space<smem>>
    %419 = vector.broadcast %418 : f32 to vector<19x19xf32>
    %420 = arith.mulf %175, %419 : vector<19x19xf32>
    %421 = arith.addf %417, %420 : vector<19x19xf32>
    %c94 = arith.constant 94 : index
    %422 = memref.load %arg2[%c94] : memref<128xf32, #tpu.memory_space<smem>>
    %423 = vector.broadcast %422 : f32 to vector<19x19xf32>
    %424 = arith.mulf %174, %423 : vector<19x19xf32>
    %425 = arith.addf %421, %424 : vector<19x19xf32>
    %cst_59 = arith.constant dense<0.000000e+00> : vector<19x38xf32>
    %426 = tpu.matmul %392, %190, %cst_59 {dimension_numbers = #tpu.dot_dimension_numbers<[1], [0], [0], [1], [0, 0, 1, 1], [], []>} : vector<19x19xf32>, vector<19x38xf32>, vector<19x38xf32> -> vector<19x38xf32>
    %cst_60 = arith.constant dense<0.000000e+00> : vector<19x38xf32>
    %427 = tpu.matmul %425, %197, %cst_60 {dimension_numbers = #tpu.dot_dimension_numbers<[1], [0], [0], [1], [0, 0, 1, 1], [], []>} : vector<19x19xf32>, vector<19x38xf32>, vector<19x38xf32> -> vector<19x38xf32>
    %428 = arith.addf %426, %427 : vector<19x38xf32>
    %cst_61 = arith.constant 0.000000e+00 : f32
    %429 = vector.broadcast %cst_61 : f32 to vector<19x19xf32>
    %c17_62 = arith.constant 17 : index
    %430 = memref.load %arg2[%c17_62] : memref<128xf32, #tpu.memory_space<smem>>
    %431 = vector.broadcast %430 : f32 to vector<19x19xf32>
    %432 = arith.mulf %171, %431 : vector<19x19xf32>
    %433 = arith.addf %429, %432 : vector<19x19xf32>
    %c19_63 = arith.constant 19 : index
    %434 = memref.load %arg2[%c19_63] : memref<128xf32, #tpu.memory_space<smem>>
    %435 = vector.broadcast %434 : f32 to vector<19x19xf32>
    %436 = arith.mulf %170, %435 : vector<19x19xf32>
    %437 = arith.addf %433, %436 : vector<19x19xf32>
    %c25_64 = arith.constant 25 : index
    %438 = memref.load %arg2[%c25_64] : memref<128xf32, #tpu.memory_space<smem>>
    %439 = vector.broadcast %438 : f32 to vector<19x19xf32>
    %440 = arith.mulf %168, %439 : vector<19x19xf32>
    %441 = arith.addf %437, %440 : vector<19x19xf32>
    %c27_65 = arith.constant 27 : index
    %442 = memref.load %arg2[%c27_65] : memref<128xf32, #tpu.memory_space<smem>>
    %443 = vector.broadcast %442 : f32 to vector<19x19xf32>
    %444 = arith.mulf %167, %443 : vector<19x19xf32>
    %445 = arith.addf %441, %444 : vector<19x19xf32>
    %c81 = arith.constant 81 : index
    %446 = memref.load %arg2[%c81] : memref<128xf32, #tpu.memory_space<smem>>
    %447 = vector.broadcast %446 : f32 to vector<19x19xf32>
    %448 = arith.mulf %180, %447 : vector<19x19xf32>
    %449 = arith.addf %445, %448 : vector<19x19xf32>
    %c83 = arith.constant 83 : index
    %450 = memref.load %arg2[%c83] : memref<128xf32, #tpu.memory_space<smem>>
    %451 = vector.broadcast %450 : f32 to vector<19x19xf32>
    %452 = arith.mulf %179, %451 : vector<19x19xf32>
    %453 = arith.addf %449, %452 : vector<19x19xf32>
    %c89 = arith.constant 89 : index
    %454 = memref.load %arg2[%c89] : memref<128xf32, #tpu.memory_space<smem>>
    %455 = vector.broadcast %454 : f32 to vector<19x19xf32>
    %456 = arith.mulf %177, %455 : vector<19x19xf32>
    %457 = arith.addf %453, %456 : vector<19x19xf32>
    %c91 = arith.constant 91 : index
    %458 = memref.load %arg2[%c91] : memref<128xf32, #tpu.memory_space<smem>>
    %459 = vector.broadcast %458 : f32 to vector<19x19xf32>
    %460 = arith.mulf %176, %459 : vector<19x19xf32>
    %461 = arith.addf %457, %460 : vector<19x19xf32>
    %cst_66 = arith.constant 0.000000e+00 : f32
    %462 = vector.broadcast %cst_66 : f32 to vector<19x19xf32>
    %c16_67 = arith.constant 16 : index
    %463 = memref.load %arg2[%c16_67] : memref<128xf32, #tpu.memory_space<smem>>
    %464 = vector.broadcast %463 : f32 to vector<19x19xf32>
    %465 = arith.mulf %172, %464 : vector<19x19xf32>
    %466 = arith.addf %462, %465 : vector<19x19xf32>
    %c18_68 = arith.constant 18 : index
    %467 = memref.load %arg2[%c18_68] : memref<128xf32, #tpu.memory_space<smem>>
    %468 = vector.broadcast %467 : f32 to vector<19x19xf32>
    %469 = arith.mulf %171, %468 : vector<19x19xf32>
    %470 = arith.addf %466, %469 : vector<19x19xf32>
    %c24_69 = arith.constant 24 : index
    %471 = memref.load %arg2[%c24_69] : memref<128xf32, #tpu.memory_space<smem>>
    %472 = vector.broadcast %471 : f32 to vector<19x19xf32>
    %473 = arith.mulf %169, %472 : vector<19x19xf32>
    %474 = arith.addf %470, %473 : vector<19x19xf32>
    %c26_70 = arith.constant 26 : index
    %475 = memref.load %arg2[%c26_70] : memref<128xf32, #tpu.memory_space<smem>>
    %476 = vector.broadcast %475 : f32 to vector<19x19xf32>
    %477 = arith.mulf %168, %476 : vector<19x19xf32>
    %478 = arith.addf %474, %477 : vector<19x19xf32>
    %c80 = arith.constant 80 : index
    %479 = memref.load %arg2[%c80] : memref<128xf32, #tpu.memory_space<smem>>
    %480 = vector.broadcast %479 : f32 to vector<19x19xf32>
    %481 = arith.mulf %181, %480 : vector<19x19xf32>
    %482 = arith.addf %478, %481 : vector<19x19xf32>
    %c82 = arith.constant 82 : index
    %483 = memref.load %arg2[%c82] : memref<128xf32, #tpu.memory_space<smem>>
    %484 = vector.broadcast %483 : f32 to vector<19x19xf32>
    %485 = arith.mulf %180, %484 : vector<19x19xf32>
    %486 = arith.addf %482, %485 : vector<19x19xf32>
    %c88 = arith.constant 88 : index
    %487 = memref.load %arg2[%c88] : memref<128xf32, #tpu.memory_space<smem>>
    %488 = vector.broadcast %487 : f32 to vector<19x19xf32>
    %489 = arith.mulf %178, %488 : vector<19x19xf32>
    %490 = arith.addf %486, %489 : vector<19x19xf32>
    %c90 = arith.constant 90 : index
    %491 = memref.load %arg2[%c90] : memref<128xf32, #tpu.memory_space<smem>>
    %492 = vector.broadcast %491 : f32 to vector<19x19xf32>
    %493 = arith.mulf %177, %492 : vector<19x19xf32>
    %494 = arith.addf %490, %493 : vector<19x19xf32>
    %cst_71 = arith.constant dense<0.000000e+00> : vector<19x38xf32>
    %495 = tpu.matmul %461, %190, %cst_71 {dimension_numbers = #tpu.dot_dimension_numbers<[1], [0], [0], [1], [0, 0, 1, 1], [], []>} : vector<19x19xf32>, vector<19x38xf32>, vector<19x38xf32> -> vector<19x38xf32>
    %cst_72 = arith.constant dense<0.000000e+00> : vector<19x38xf32>
    %496 = tpu.matmul %494, %197, %cst_72 {dimension_numbers = #tpu.dot_dimension_numbers<[1], [0], [0], [1], [0, 0, 1, 1], [], []>} : vector<19x19xf32>, vector<19x38xf32>, vector<19x38xf32> -> vector<19x38xf32>
    %497 = arith.addf %495, %496 : vector<19x38xf32>
    %cst_73 = arith.constant dense<0.000000e+00> : vector<38x38xf32>
    %498 = tpu.matmul %206, %428, %cst_73 {dimension_numbers = #tpu.dot_dimension_numbers<[1], [0], [0], [1], [0, 0, 1, 1], [], []>} : vector<38x19xf32>, vector<19x38xf32>, vector<38x38xf32> -> vector<38x38xf32>
    %cst_74 = arith.constant dense<0.000000e+00> : vector<38x38xf32>
    %499 = tpu.matmul %213, %497, %cst_74 {dimension_numbers = #tpu.dot_dimension_numbers<[1], [0], [0], [1], [0, 0, 1, 1], [], []>} : vector<38x19xf32>, vector<19x38xf32>, vector<38x38xf32> -> vector<38x38xf32>
    %500 = arith.addf %498, %499 : vector<38x38xf32>
    %cst_75 = arith.constant 0.000000e+00 : f32
    %501 = vector.broadcast %cst_75 : f32 to vector<38x38xf32>
    %502 = arith.maximumf %500, %501 : vector<38x38xf32>
    %c0_76 = arith.constant 0 : index
    %c1_77 = arith.constant 1 : index
    %c0_78 = arith.constant 0 : index
    %c0_79 = arith.constant 0 : index
    %503 = vector.load %arg3[%c0_76, %c1_77, %c0_78, %c0_79] : memref<1x4x38x38xf32, #tpu.memory_space<vmem>>, vector<1x1x38x38xf32>
    %504 = vector.shape_cast %503 : vector<1x1x38x38xf32> to vector<38x38xf32>
    %505 = vector.shape_cast %502 : vector<38x38xf32> to vector<1x1x38x38xf32>
    tpu.vector_store %arg3[%c0_76, %c1_77, %c0_78, %c0_79], %505 {strides = array<i32>} : memref<1x4x38x38xf32, #tpu.memory_space<vmem>>, vector<1x1x38x38xf32>,
    %cst_80 = arith.constant 0.000000e+00 : f32
    %506 = vector.broadcast %cst_80 : f32 to vector<19x19xf32>
    %c37 = arith.constant 37 : index
    %507 = memref.load %arg2[%c37] : memref<128xf32, #tpu.memory_space<smem>>
    %508 = vector.broadcast %507 : f32 to vector<19x19xf32>
    %509 = arith.mulf %168, %508 : vector<19x19xf32>
    %510 = arith.addf %506, %509 : vector<19x19xf32>
    %c39 = arith.constant 39 : index
    %511 = memref.load %arg2[%c39] : memref<128xf32, #tpu.memory_space<smem>>
    %512 = vector.broadcast %511 : f32 to vector<19x19xf32>
    %513 = arith.mulf %167, %512 : vector<19x19xf32>
    %514 = arith.addf %510, %513 : vector<19x19xf32>
    %c45 = arith.constant 45 : index
    %515 = memref.load %arg2[%c45] : memref<128xf32, #tpu.memory_space<smem>>
    %516 = vector.broadcast %515 : f32 to vector<19x19xf32>
    %517 = arith.mulf %165, %516 : vector<19x19xf32>
    %518 = arith.addf %514, %517 : vector<19x19xf32>
    %c47 = arith.constant 47 : index
    %519 = memref.load %arg2[%c47] : memref<128xf32, #tpu.memory_space<smem>>
    %520 = vector.broadcast %519 : f32 to vector<19x19xf32>
    %521 = arith.mulf %164, %520 : vector<19x19xf32>
    %522 = arith.addf %518, %521 : vector<19x19xf32>
    %c101 = arith.constant 101 : index
    %523 = memref.load %arg2[%c101] : memref<128xf32, #tpu.memory_space<smem>>
    %524 = vector.broadcast %523 : f32 to vector<19x19xf32>
    %525 = arith.mulf %177, %524 : vector<19x19xf32>
    %526 = arith.addf %522, %525 : vector<19x19xf32>
    %c103 = arith.constant 103 : index
    %527 = memref.load %arg2[%c103] : memref<128xf32, #tpu.memory_space<smem>>
    %528 = vector.broadcast %527 : f32 to vector<19x19xf32>
    %529 = arith.mulf %176, %528 : vector<19x19xf32>
    %530 = arith.addf %526, %529 : vector<19x19xf32>
    %c109 = arith.constant 109 : index
    %531 = memref.load %arg2[%c109] : memref<128xf32, #tpu.memory_space<smem>>
    %532 = vector.broadcast %531 : f32 to vector<19x19xf32>
    %533 = arith.mulf %174, %532 : vector<19x19xf32>
    %534 = arith.addf %530, %533 : vector<19x19xf32>
    %c111 = arith.constant 111 : index
    %535 = memref.load %arg2[%c111] : memref<128xf32, #tpu.memory_space<smem>>
    %536 = vector.broadcast %535 : f32 to vector<19x19xf32>
    %537 = arith.mulf %173, %536 : vector<19x19xf32>
    %538 = arith.addf %534, %537 : vector<19x19xf32>
    %cst_81 = arith.constant 0.000000e+00 : f32
    %539 = vector.broadcast %cst_81 : f32 to vector<19x19xf32>
    %c36 = arith.constant 36 : index
    %540 = memref.load %arg2[%c36] : memref<128xf32, #tpu.memory_space<smem>>
    %541 = vector.broadcast %540 : f32 to vector<19x19xf32>
    %542 = arith.mulf %169, %541 : vector<19x19xf32>
    %543 = arith.addf %539, %542 : vector<19x19xf32>
    %c38 = arith.constant 38 : index
    %544 = memref.load %arg2[%c38] : memref<128xf32, #tpu.memory_space<smem>>
    %545 = vector.broadcast %544 : f32 to vector<19x19xf32>
    %546 = arith.mulf %168, %545 : vector<19x19xf32>
    %547 = arith.addf %543, %546 : vector<19x19xf32>
    %c44 = arith.constant 44 : index
    %548 = memref.load %arg2[%c44] : memref<128xf32, #tpu.memory_space<smem>>
    %549 = vector.broadcast %548 : f32 to vector<19x19xf32>
    %550 = arith.mulf %166, %549 : vector<19x19xf32>
    %551 = arith.addf %547, %550 : vector<19x19xf32>
    %c46 = arith.constant 46 : index
    %552 = memref.load %arg2[%c46] : memref<128xf32, #tpu.memory_space<smem>>
    %553 = vector.broadcast %552 : f32 to vector<19x19xf32>
    %554 = arith.mulf %165, %553 : vector<19x19xf32>
    %555 = arith.addf %551, %554 : vector<19x19xf32>
    %c100 = arith.constant 100 : index
    %556 = memref.load %arg2[%c100] : memref<128xf32, #tpu.memory_space<smem>>
    %557 = vector.broadcast %556 : f32 to vector<19x19xf32>
    %558 = arith.mulf %178, %557 : vector<19x19xf32>
    %559 = arith.addf %555, %558 : vector<19x19xf32>
    %c102 = arith.constant 102 : index
    %560 = memref.load %arg2[%c102] : memref<128xf32, #tpu.memory_space<smem>>
    %561 = vector.broadcast %560 : f32 to vector<19x19xf32>
    %562 = arith.mulf %177, %561 : vector<19x19xf32>
    %563 = arith.addf %559, %562 : vector<19x19xf32>
    %c108 = arith.constant 108 : index
    %564 = memref.load %arg2[%c108] : memref<128xf32, #tpu.memory_space<smem>>
    %565 = vector.broadcast %564 : f32 to vector<19x19xf32>
    %566 = arith.mulf %175, %565 : vector<19x19xf32>
    %567 = arith.addf %563, %566 : vector<19x19xf32>
    %c110 = arith.constant 110 : index
    %568 = memref.load %arg2[%c110] : memref<128xf32, #tpu.memory_space<smem>>
    %569 = vector.broadcast %568 : f32 to vector<19x19xf32>
    %570 = arith.mulf %174, %569 : vector<19x19xf32>
    %571 = arith.addf %567, %570 : vector<19x19xf32>
    %cst_82 = arith.constant dense<0.000000e+00> : vector<19x38xf32>
    %572 = tpu.matmul %538, %190, %cst_82 {dimension_numbers = #tpu.dot_dimension_numbers<[1], [0], [0], [1], [0, 0, 1, 1], [], []>} : vector<19x19xf32>, vector<19x38xf32>, vector<19x38xf32> -> vector<19x38xf32>
    %cst_83 = arith.constant dense<0.000000e+00> : vector<19x38xf32>
    %573 = tpu.matmul %571, %197, %cst_83 {dimension_numbers = #tpu.dot_dimension_numbers<[1], [0], [0], [1], [0, 0, 1, 1], [], []>} : vector<19x19xf32>, vector<19x38xf32>, vector<19x38xf32> -> vector<19x38xf32>
    %574 = arith.addf %572, %573 : vector<19x38xf32>
    %cst_84 = arith.constant 0.000000e+00 : f32
    %575 = vector.broadcast %cst_84 : f32 to vector<19x19xf32>
    %c33 = arith.constant 33 : index
    %576 = memref.load %arg2[%c33] : memref<128xf32, #tpu.memory_space<smem>>
    %577 = vector.broadcast %576 : f32 to vector<19x19xf32>
    %578 = arith.mulf %171, %577 : vector<19x19xf32>
    %579 = arith.addf %575, %578 : vector<19x19xf32>
    %c35 = arith.constant 35 : index
    %580 = memref.load %arg2[%c35] : memref<128xf32, #tpu.memory_space<smem>>
    %581 = vector.broadcast %580 : f32 to vector<19x19xf32>
    %582 = arith.mulf %170, %581 : vector<19x19xf32>
    %583 = arith.addf %579, %582 : vector<19x19xf32>
    %c41 = arith.constant 41 : index
    %584 = memref.load %arg2[%c41] : memref<128xf32, #tpu.memory_space<smem>>
    %585 = vector.broadcast %584 : f32 to vector<19x19xf32>
    %586 = arith.mulf %168, %585 : vector<19x19xf32>
    %587 = arith.addf %583, %586 : vector<19x19xf32>
    %c43 = arith.constant 43 : index
    %588 = memref.load %arg2[%c43] : memref<128xf32, #tpu.memory_space<smem>>
    %589 = vector.broadcast %588 : f32 to vector<19x19xf32>
    %590 = arith.mulf %167, %589 : vector<19x19xf32>
    %591 = arith.addf %587, %590 : vector<19x19xf32>
    %c97 = arith.constant 97 : index
    %592 = memref.load %arg2[%c97] : memref<128xf32, #tpu.memory_space<smem>>
    %593 = vector.broadcast %592 : f32 to vector<19x19xf32>
    %594 = arith.mulf %180, %593 : vector<19x19xf32>
    %595 = arith.addf %591, %594 : vector<19x19xf32>
    %c99 = arith.constant 99 : index
    %596 = memref.load %arg2[%c99] : memref<128xf32, #tpu.memory_space<smem>>
    %597 = vector.broadcast %596 : f32 to vector<19x19xf32>
    %598 = arith.mulf %179, %597 : vector<19x19xf32>
    %599 = arith.addf %595, %598 : vector<19x19xf32>
    %c105 = arith.constant 105 : index
    %600 = memref.load %arg2[%c105] : memref<128xf32, #tpu.memory_space<smem>>
    %601 = vector.broadcast %600 : f32 to vector<19x19xf32>
    %602 = arith.mulf %177, %601 : vector<19x19xf32>
    %603 = arith.addf %599, %602 : vector<19x19xf32>
    %c107 = arith.constant 107 : index
    %604 = memref.load %arg2[%c107] : memref<128xf32, #tpu.memory_space<smem>>
    %605 = vector.broadcast %604 : f32 to vector<19x19xf32>
    %606 = arith.mulf %176, %605 : vector<19x19xf32>
    %607 = arith.addf %603, %606 : vector<19x19xf32>
    %cst_85 = arith.constant 0.000000e+00 : f32
    %608 = vector.broadcast %cst_85 : f32 to vector<19x19xf32>
    %c32 = arith.constant 32 : index
    %609 = memref.load %arg2[%c32] : memref<128xf32, #tpu.memory_space<smem>>
    %610 = vector.broadcast %609 : f32 to vector<19x19xf32>
    %611 = arith.mulf %172, %610 : vector<19x19xf32>
    %612 = arith.addf %608, %611 : vector<19x19xf32>
    %c34 = arith.constant 34 : index
    %613 = memref.load %arg2[%c34] : memref<128xf32, #tpu.memory_space<smem>>
    %614 = vector.broadcast %613 : f32 to vector<19x19xf32>
    %615 = arith.mulf %171, %614 : vector<19x19xf32>
    %616 = arith.addf %612, %615 : vector<19x19xf32>
    %c40 = arith.constant 40 : index
    %617 = memref.load %arg2[%c40] : memref<128xf32, #tpu.memory_space<smem>>
    %618 = vector.broadcast %617 : f32 to vector<19x19xf32>
    %619 = arith.mulf %169, %618 : vector<19x19xf32>
    %620 = arith.addf %616, %619 : vector<19x19xf32>
    %c42 = arith.constant 42 : index
    %621 = memref.load %arg2[%c42] : memref<128xf32, #tpu.memory_space<smem>>
    %622 = vector.broadcast %621 : f32 to vector<19x19xf32>
    %623 = arith.mulf %168, %622 : vector<19x19xf32>
    %624 = arith.addf %620, %623 : vector<19x19xf32>
    %c96 = arith.constant 96 : index
    %625 = memref.load %arg2[%c96] : memref<128xf32, #tpu.memory_space<smem>>
    %626 = vector.broadcast %625 : f32 to vector<19x19xf32>
    %627 = arith.mulf %181, %626 : vector<19x19xf32>
    %628 = arith.addf %624, %627 : vector<19x19xf32>
    %c98 = arith.constant 98 : index
    %629 = memref.load %arg2[%c98] : memref<128xf32, #tpu.memory_space<smem>>
    %630 = vector.broadcast %629 : f32 to vector<19x19xf32>
    %631 = arith.mulf %180, %630 : vector<19x19xf32>
    %632 = arith.addf %628, %631 : vector<19x19xf32>
    %c104 = arith.constant 104 : index
    %633 = memref.load %arg2[%c104] : memref<128xf32, #tpu.memory_space<smem>>
    %634 = vector.broadcast %633 : f32 to vector<19x19xf32>
    %635 = arith.mulf %178, %634 : vector<19x19xf32>
    %636 = arith.addf %632, %635 : vector<19x19xf32>
    %c106 = arith.constant 106 : index
    %637 = memref.load %arg2[%c106] : memref<128xf32, #tpu.memory_space<smem>>
    %638 = vector.broadcast %637 : f32 to vector<19x19xf32>
    %639 = arith.mulf %177, %638 : vector<19x19xf32>
    %640 = arith.addf %636, %639 : vector<19x19xf32>
    %cst_86 = arith.constant dense<0.000000e+00> : vector<19x38xf32>
    %641 = tpu.matmul %607, %190, %cst_86 {dimension_numbers = #tpu.dot_dimension_numbers<[1], [0], [0], [1], [0, 0, 1, 1], [], []>} : vector<19x19xf32>, vector<19x38xf32>, vector<19x38xf32> -> vector<19x38xf32>
    %cst_87 = arith.constant dense<0.000000e+00> : vector<19x38xf32>
    %642 = tpu.matmul %640, %197, %cst_87 {dimension_numbers = #tpu.dot_dimension_numbers<[1], [0], [0], [1], [0, 0, 1, 1], [], []>} : vector<19x19xf32>, vector<19x38xf32>, vector<19x38xf32> -> vector<19x38xf32>
    %643 = arith.addf %641, %642 : vector<19x38xf32>
    %cst_88 = arith.constant dense<0.000000e+00> : vector<38x38xf32>
    %644 = tpu.matmul %206, %574, %cst_88 {dimension_numbers = #tpu.dot_dimension_numbers<[1], [0], [0], [1], [0, 0, 1, 1], [], []>} : vector<38x19xf32>, vector<19x38xf32>, vector<38x38xf32> -> vector<38x38xf32>
    %cst_89 = arith.constant dense<0.000000e+00> : vector<38x38xf32>
    %645 = tpu.matmul %213, %643, %cst_89 {dimension_numbers = #tpu.dot_dimension_numbers<[1], [0], [0], [1], [0, 0, 1, 1], [], []>} : vector<38x19xf32>, vector<19x38xf32>, vector<38x38xf32> -> vector<38x38xf32>
    %646 = arith.addf %644, %645 : vector<38x38xf32>
    %cst_90 = arith.constant 0.000000e+00 : f32
    %647 = vector.broadcast %cst_90 : f32 to vector<38x38xf32>
    %648 = arith.maximumf %646, %647 : vector<38x38xf32>
    %c0_91 = arith.constant 0 : index
    %c2_92 = arith.constant 2 : index
    %c0_93 = arith.constant 0 : index
    %c0_94 = arith.constant 0 : index
    %649 = vector.load %arg3[%c0_91, %c2_92, %c0_93, %c0_94] : memref<1x4x38x38xf32, #tpu.memory_space<vmem>>, vector<1x1x38x38xf32>
    %650 = vector.shape_cast %649 : vector<1x1x38x38xf32> to vector<38x38xf32>
    %651 = vector.shape_cast %648 : vector<38x38xf32> to vector<1x1x38x38xf32>
    tpu.vector_store %arg3[%c0_91, %c2_92, %c0_93, %c0_94], %651 {strides = array<i32>} : memref<1x4x38x38xf32, #tpu.memory_space<vmem>>, vector<1x1x38x38xf32>,
    %cst_95 = arith.constant 0.000000e+00 : f32
    %652 = vector.broadcast %cst_95 : f32 to vector<19x19xf32>
    %c53 = arith.constant 53 : index
    %653 = memref.load %arg2[%c53] : memref<128xf32, #tpu.memory_space<smem>>
    %654 = vector.broadcast %653 : f32 to vector<19x19xf32>
    %655 = arith.mulf %168, %654 : vector<19x19xf32>
    %656 = arith.addf %652, %655 : vector<19x19xf32>
    %c55 = arith.constant 55 : index
    %657 = memref.load %arg2[%c55] : memref<128xf32, #tpu.memory_space<smem>>
    %658 = vector.broadcast %657 : f32 to vector<19x19xf32>
    %659 = arith.mulf %167, %658 : vector<19x19xf32>
    %660 = arith.addf %656, %659 : vector<19x19xf32>
    %c61 = arith.constant 61 : index
    %661 = memref.load %arg2[%c61] : memref<128xf32, #tpu.memory_space<smem>>
    %662 = vector.broadcast %661 : f32 to vector<19x19xf32>
    %663 = arith.mulf %165, %662 : vector<19x19xf32>
    %664 = arith.addf %660, %663 : vector<19x19xf32>
    %c63 = arith.constant 63 : index
    %665 = memref.load %arg2[%c63] : memref<128xf32, #tpu.memory_space<smem>>
    %666 = vector.broadcast %665 : f32 to vector<19x19xf32>
    %667 = arith.mulf %164, %666 : vector<19x19xf32>
    %668 = arith.addf %664, %667 : vector<19x19xf32>
    %c117 = arith.constant 117 : index
    %669 = memref.load %arg2[%c117] : memref<128xf32, #tpu.memory_space<smem>>
    %670 = vector.broadcast %669 : f32 to vector<19x19xf32>
    %671 = arith.mulf %177, %670 : vector<19x19xf32>
    %672 = arith.addf %668, %671 : vector<19x19xf32>
    %c119 = arith.constant 119 : index
    %673 = memref.load %arg2[%c119] : memref<128xf32, #tpu.memory_space<smem>>
    %674 = vector.broadcast %673 : f32 to vector<19x19xf32>
    %675 = arith.mulf %176, %674 : vector<19x19xf32>
    %676 = arith.addf %672, %675 : vector<19x19xf32>
    %c125 = arith.constant 125 : index
    %677 = memref.load %arg2[%c125] : memref<128xf32, #tpu.memory_space<smem>>
    %678 = vector.broadcast %677 : f32 to vector<19x19xf32>
    %679 = arith.mulf %174, %678 : vector<19x19xf32>
    %680 = arith.addf %676, %679 : vector<19x19xf32>
    %c127 = arith.constant 127 : index
    %681 = memref.load %arg2[%c127] : memref<128xf32, #tpu.memory_space<smem>>
    %682 = vector.broadcast %681 : f32 to vector<19x19xf32>
    %683 = arith.mulf %173, %682 : vector<19x19xf32>
    %684 = arith.addf %680, %683 : vector<19x19xf32>
    %cst_96 = arith.constant 0.000000e+00 : f32
    %685 = vector.broadcast %cst_96 : f32 to vector<19x19xf32>
    %c52 = arith.constant 52 : index
    %686 = memref.load %arg2[%c52] : memref<128xf32, #tpu.memory_space<smem>>
    %687 = vector.broadcast %686 : f32 to vector<19x19xf32>
    %688 = arith.mulf %169, %687 : vector<19x19xf32>
    %689 = arith.addf %685, %688 : vector<19x19xf32>
    %c54 = arith.constant 54 : index
    %690 = memref.load %arg2[%c54] : memref<128xf32, #tpu.memory_space<smem>>
    %691 = vector.broadcast %690 : f32 to vector<19x19xf32>
    %692 = arith.mulf %168, %691 : vector<19x19xf32>
    %693 = arith.addf %689, %692 : vector<19x19xf32>
    %c60 = arith.constant 60 : index
    %694 = memref.load %arg2[%c60] : memref<128xf32, #tpu.memory_space<smem>>
    %695 = vector.broadcast %694 : f32 to vector<19x19xf32>
    %696 = arith.mulf %166, %695 : vector<19x19xf32>
    %697 = arith.addf %693, %696 : vector<19x19xf32>
    %c62 = arith.constant 62 : index
    %698 = memref.load %arg2[%c62] : memref<128xf32, #tpu.memory_space<smem>>
    %699 = vector.broadcast %698 : f32 to vector<19x19xf32>
    %700 = arith.mulf %165, %699 : vector<19x19xf32>
    %701 = arith.addf %697, %700 : vector<19x19xf32>
    %c116 = arith.constant 116 : index
    %702 = memref.load %arg2[%c116] : memref<128xf32, #tpu.memory_space<smem>>
    %703 = vector.broadcast %702 : f32 to vector<19x19xf32>
    %704 = arith.mulf %178, %703 : vector<19x19xf32>
    %705 = arith.addf %701, %704 : vector<19x19xf32>
    %c118 = arith.constant 118 : index
    %706 = memref.load %arg2[%c118] : memref<128xf32, #tpu.memory_space<smem>>
    %707 = vector.broadcast %706 : f32 to vector<19x19xf32>
    %708 = arith.mulf %177, %707 : vector<19x19xf32>
    %709 = arith.addf %705, %708 : vector<19x19xf32>
    %c124 = arith.constant 124 : index
    %710 = memref.load %arg2[%c124] : memref<128xf32, #tpu.memory_space<smem>>
    %711 = vector.broadcast %710 : f32 to vector<19x19xf32>
    %712 = arith.mulf %175, %711 : vector<19x19xf32>
    %713 = arith.addf %709, %712 : vector<19x19xf32>
    %c126 = arith.constant 126 : index
    %714 = memref.load %arg2[%c126] : memref<128xf32, #tpu.memory_space<smem>>
    %715 = vector.broadcast %714 : f32 to vector<19x19xf32>
    %716 = arith.mulf %174, %715 : vector<19x19xf32>
    %717 = arith.addf %713, %716 : vector<19x19xf32>
    %cst_97 = arith.constant dense<0.000000e+00> : vector<19x38xf32>
    %718 = tpu.matmul %684, %190, %cst_97 {dimension_numbers = #tpu.dot_dimension_numbers<[1], [0], [0], [1], [0, 0, 1, 1], [], []>} : vector<19x19xf32>, vector<19x38xf32>, vector<19x38xf32> -> vector<19x38xf32>
    %cst_98 = arith.constant dense<0.000000e+00> : vector<19x38xf32>
    %719 = tpu.matmul %717, %197, %cst_98 {dimension_numbers = #tpu.dot_dimension_numbers<[1], [0], [0], [1], [0, 0, 1, 1], [], []>} : vector<19x19xf32>, vector<19x38xf32>, vector<19x38xf32> -> vector<19x38xf32>
    %720 = arith.addf %718, %719 : vector<19x38xf32>
    %cst_99 = arith.constant 0.000000e+00 : f32
    %721 = vector.broadcast %cst_99 : f32 to vector<19x19xf32>
    %c49 = arith.constant 49 : index
    %722 = memref.load %arg2[%c49] : memref<128xf32, #tpu.memory_space<smem>>
    %723 = vector.broadcast %722 : f32 to vector<19x19xf32>
    %724 = arith.mulf %171, %723 : vector<19x19xf32>
    %725 = arith.addf %721, %724 : vector<19x19xf32>
    %c51 = arith.constant 51 : index
    %726 = memref.load %arg2[%c51] : memref<128xf32, #tpu.memory_space<smem>>
    %727 = vector.broadcast %726 : f32 to vector<19x19xf32>
    %728 = arith.mulf %170, %727 : vector<19x19xf32>
    %729 = arith.addf %725, %728 : vector<19x19xf32>
    %c57 = arith.constant 57 : index
    %730 = memref.load %arg2[%c57] : memref<128xf32, #tpu.memory_space<smem>>
    %731 = vector.broadcast %730 : f32 to vector<19x19xf32>
    %732 = arith.mulf %168, %731 : vector<19x19xf32>
    %733 = arith.addf %729, %732 : vector<19x19xf32>
    %c59 = arith.constant 59 : index
    %734 = memref.load %arg2[%c59] : memref<128xf32, #tpu.memory_space<smem>>
    %735 = vector.broadcast %734 : f32 to vector<19x19xf32>
    %736 = arith.mulf %167, %735 : vector<19x19xf32>
    %737 = arith.addf %733, %736 : vector<19x19xf32>
    %c113 = arith.constant 113 : index
    %738 = memref.load %arg2[%c113] : memref<128xf32, #tpu.memory_space<smem>>
    %739 = vector.broadcast %738 : f32 to vector<19x19xf32>
    %740 = arith.mulf %180, %739 : vector<19x19xf32>
    %741 = arith.addf %737, %740 : vector<19x19xf32>
    %c115 = arith.constant 115 : index
    %742 = memref.load %arg2[%c115] : memref<128xf32, #tpu.memory_space<smem>>
    %743 = vector.broadcast %742 : f32 to vector<19x19xf32>
    %744 = arith.mulf %179, %743 : vector<19x19xf32>
    %745 = arith.addf %741, %744 : vector<19x19xf32>
    %c121 = arith.constant 121 : index
    %746 = memref.load %arg2[%c121] : memref<128xf32, #tpu.memory_space<smem>>
    %747 = vector.broadcast %746 : f32 to vector<19x19xf32>
    %748 = arith.mulf %177, %747 : vector<19x19xf32>
    %749 = arith.addf %745, %748 : vector<19x19xf32>
    %c123 = arith.constant 123 : index
    %750 = memref.load %arg2[%c123] : memref<128xf32, #tpu.memory_space<smem>>
    %751 = vector.broadcast %750 : f32 to vector<19x19xf32>
    %752 = arith.mulf %176, %751 : vector<19x19xf32>
    %753 = arith.addf %749, %752 : vector<19x19xf32>
    %cst_100 = arith.constant 0.000000e+00 : f32
    %754 = vector.broadcast %cst_100 : f32 to vector<19x19xf32>
    %c48 = arith.constant 48 : index
    %755 = memref.load %arg2[%c48] : memref<128xf32, #tpu.memory_space<smem>>
    %756 = vector.broadcast %755 : f32 to vector<19x19xf32>
    %757 = arith.mulf %172, %756 : vector<19x19xf32>
    %758 = arith.addf %754, %757 : vector<19x19xf32>
    %c50 = arith.constant 50 : index
    %759 = memref.load %arg2[%c50] : memref<128xf32, #tpu.memory_space<smem>>
    %760 = vector.broadcast %759 : f32 to vector<19x19xf32>
    %761 = arith.mulf %171, %760 : vector<19x19xf32>
    %762 = arith.addf %758, %761 : vector<19x19xf32>
    %c56 = arith.constant 56 : index
    %763 = memref.load %arg2[%c56] : memref<128xf32, #tpu.memory_space<smem>>
    %764 = vector.broadcast %763 : f32 to vector<19x19xf32>
    %765 = arith.mulf %169, %764 : vector<19x19xf32>
    %766 = arith.addf %762, %765 : vector<19x19xf32>
    %c58 = arith.constant 58 : index
    %767 = memref.load %arg2[%c58] : memref<128xf32, #tpu.memory_space<smem>>
    %768 = vector.broadcast %767 : f32 to vector<19x19xf32>
    %769 = arith.mulf %168, %768 : vector<19x19xf32>
    %770 = arith.addf %766, %769 : vector<19x19xf32>
    %c112 = arith.constant 112 : index
    %771 = memref.load %arg2[%c112] : memref<128xf32, #tpu.memory_space<smem>>
    %772 = vector.broadcast %771 : f32 to vector<19x19xf32>
    %773 = arith.mulf %181, %772 : vector<19x19xf32>
    %774 = arith.addf %770, %773 : vector<19x19xf32>
    %c114 = arith.constant 114 : index
    %775 = memref.load %arg2[%c114] : memref<128xf32, #tpu.memory_space<smem>>
    %776 = vector.broadcast %775 : f32 to vector<19x19xf32>
    %777 = arith.mulf %180, %776 : vector<19x19xf32>
    %778 = arith.addf %774, %777 : vector<19x19xf32>
    %c120 = arith.constant 120 : index
    %779 = memref.load %arg2[%c120] : memref<128xf32, #tpu.memory_space<smem>>
    %780 = vector.broadcast %779 : f32 to vector<19x19xf32>
    %781 = arith.mulf %178, %780 : vector<19x19xf32>
    %782 = arith.addf %778, %781 : vector<19x19xf32>
    %c122 = arith.constant 122 : index
    %783 = memref.load %arg2[%c122] : memref<128xf32, #tpu.memory_space<smem>>
    %784 = vector.broadcast %783 : f32 to vector<19x19xf32>
    %785 = arith.mulf %177, %784 : vector<19x19xf32>
    %786 = arith.addf %782, %785 : vector<19x19xf32>
    %cst_101 = arith.constant dense<0.000000e+00> : vector<19x38xf32>
    %787 = tpu.matmul %753, %190, %cst_101 {dimension_numbers = #tpu.dot_dimension_numbers<[1], [0], [0], [1], [0, 0, 1, 1], [], []>} : vector<19x19xf32>, vector<19x38xf32>, vector<19x38xf32> -> vector<19x38xf32>
    %cst_102 = arith.constant dense<0.000000e+00> : vector<19x38xf32>
    %788 = tpu.matmul %786, %197, %cst_102 {dimension_numbers = #tpu.dot_dimension_numbers<[1], [0], [0], [1], [0, 0, 1, 1], [], []>} : vector<19x19xf32>, vector<19x38xf32>, vector<19x38xf32> -> vector<19x38xf32>
    %789 = arith.addf %787, %788 : vector<19x38xf32>
    %cst_103 = arith.constant dense<0.000000e+00> : vector<38x38xf32>
    %790 = tpu.matmul %206, %720, %cst_103 {dimension_numbers = #tpu.dot_dimension_numbers<[1], [0], [0], [1], [0, 0, 1, 1], [], []>} : vector<38x19xf32>, vector<19x38xf32>, vector<38x38xf32> -> vector<38x38xf32>
    %cst_104 = arith.constant dense<0.000000e+00> : vector<38x38xf32>
    %791 = tpu.matmul %213, %789, %cst_104 {dimension_numbers = #tpu.dot_dimension_numbers<[1], [0], [0], [1], [0, 0, 1, 1], [], []>} : vector<38x19xf32>, vector<19x38xf32>, vector<38x38xf32> -> vector<38x38xf32>
    %792 = arith.addf %790, %791 : vector<38x38xf32>
    %cst_105 = arith.constant 0.000000e+00 : f32
    %793 = vector.broadcast %cst_105 : f32 to vector<38x38xf32>
    %794 = arith.maximumf %792, %793 : vector<38x38xf32>
    %c0_106 = arith.constant 0 : index
    %c3_107 = arith.constant 3 : index
    %c0_108 = arith.constant 0 : index
    %c0_109 = arith.constant 0 : index
    %795 = vector.load %arg3[%c0_106, %c3_107, %c0_108, %c0_109] : memref<1x4x38x38xf32, #tpu.memory_space<vmem>>, vector<1x1x38x38xf32>
    %796 = vector.shape_cast %795 : vector<1x1x38x38xf32> to vector<38x38xf32>
    %797 = vector.shape_cast %794 : vector<38x38xf32> to vector<1x1x38x38xf32>
    tpu.vector_store %arg3[%c0_106, %c3_107, %c0_108, %c0_109], %797 {strides = array<i32>} : memref<1x4x38x38xf32, #tpu.memory_space<vmem>>, vector<1x1x38x38xf32>,
    return
  }
}

</mosaic_0001>

<llo_original>
// kernel: model_forward.1
$region0: #{model_forward.1}
  #allocation0 [shape = 'u32[]', space=smem, size = 0x4, offset = 0x4, fixed_abs, tag = 'smem constant byte address 0x4 - core index']
  #allocation1 [shape = 'u32[144,128]{1,0:T(1,128)}', space=vmem, size = 0x12000, scoped, tag = 'internal scratch']
  %s0 = inlined_call_operand.vmem [shape: f32[1,1,16,16], index: 0, kind: input, shape index: {}]
  %s1 = inlined_call_operand.vmem [shape: f32[32], index: 1, kind: input, shape index: {}]
  %s2 = inlined_call_operand.vmem [shape: f32[128], index: 2, kind: input, shape index: {}]
  %s3 = inlined_call_operand.vmem [shape: f32[1,4,38,38], index: 3, kind: output, shape index: {}]
  %s4 = sld [smem:[#allocation0]]
  $region30: #{model_forward.1} parent=0
    _
  %s6 = ssub.s32 1, %s4
  %s7 = scalar_select 0, %s6, %s4
  $region1: #{model_forward.1} parent=0
    #allocation2 [shape = 'u8[512]{0}', space=smem, size = 0x200, scoped, tag = 'input window, operand 1, single buffered']
    #allocation3 [shape = 's32[1]{0}', space=sflag, size = 0x4, scoped, tag = 'scoped memory for model_forward.1']
    #allocation4 [shape = 'u8[512]{0}', space=smem, size = 0x200, scoped, tag = 'input window, operand 2, single buffered']
    #allocation5 [shape = 's32[1]{0}', space=sflag, size = 0x4, scoped, tag = 'scoped memory for model_forward.1']
    %8 = vsyncpa [#allocation3], 0
    %9 = vsyncpa [#allocation5], 0
    // Predicated region
    $region2: #{model_forward.1} parent=1 // pred_check
      _
    $region3: #{model_forward.1} parent=1 // pred_check_branch
      %11 = sbr.rel (0) target = $region5
    $region4: #{model_forward.1} parent=1 // pred_region
      _
    $region5: #{model_forward.1} parent=1 // pred_fallthru
      _
    // Predicated region
    $region6: #{model_forward.1} parent=1 // pred_check
      _
    $region7: #{model_forward.1} parent=1 // pred_check_branch
      %13 = sbr.rel (0) target = $region9
    $region8: #{model_forward.1} parent=1 // pred_region
      %s15 = ssub.s32 16, 16
      %16 = vsyncadd [#allocation3], %s15
      %s18 = sshll.u32 %s1, 4
      %s19 = int_to_ptr.vmem [resolvable:$true] %s18
      %21 = dma.vmem_to_smem %s19, 16, [#allocation2], [#allocation3]
    $region9: #{model_forward.1} parent=1 // pred_fallthru
      _
    // Predicated region
    $region10: #{model_forward.1} parent=1 // pred_check
      _
    $region11: #{model_forward.1} parent=1 // pred_check_branch
      %23 = sbr.rel (0) target = $region13
    $region12: #{model_forward.1} parent=1 // pred_region
      %s25 = ssub.s32 16, 16
      %26 = vsyncadd [#allocation5], %s25
      %s28 = sshll.u32 %s2, 4
      %s29 = int_to_ptr.vmem [resolvable:$true] %s28
      %31 = dma.vmem_to_smem %s29, 16, [#allocation4], [#allocation5]
    $region13: #{model_forward.1} parent=1 // pred_fallthru
      _
    // Predicated region
    $region14: #{model_forward.1} parent=1 // pred_check
      _
    $region15: #{model_forward.1} parent=1 // pred_check_branch
      %33 = sbr.rel (0) target = $region17
    $region16: #{model_forward.1} parent=1 // pred_region
      %34 = dma.done [#allocation3], 16
    $region17: #{model_forward.1} parent=1 // pred_fallthru
      _
    // Predicated region
    $region18: #{model_forward.1} parent=1 // pred_check
      _
    $region19: #{model_forward.1} parent=1 // pred_check_branch
      %36 = sbr.rel (0) target = $region21
    $region20: #{model_forward.1} parent=1 // pred_region
      %37 = dma.done [#allocation5], 16
    $region21: #{model_forward.1} parent=1 // pred_fallthru
      _
    %38 = sfence
    %v39 = vld [vmem:[%s0] sm:$0xff]
    %v40 = vld [vmem:[%s0 + $0x8] sm:$0xff]
    %43 = vrot.lane.b32.xlu0 %v39, 3
    %v44 = vpop.permute.xlu0 %43
    %45 = vrot.lane.b32.xlu0 %v40, 3
    %v46 = vpop.permute.xlu0 %45
    %vm49 = vcmask 23552
    %v50 = vsel %vm49, 0.0, %v44
    %v51 = vsel %vm49, 0.0, %v46
    %vm52 = vcmask 154624
    %v53 = vsel %vm52, %v50, 0.0
    %v54 = vsel %vm52, %v51, 0.0
    %vm57 = vcmask 1042432
    %v58 = vrot.slane %v53, 5
    %v59 = vrot.slane %v54, 5
    %v60 = vsel %vm57, %v58, %v59
    %v64 = vsel %vm57, 0.0, %v58
    %v65 = vsel %vm57, %v59, 0.0
    %s66 = sld [smem:[#allocation2]]
    %v67 = vstv %s66
    %v68 = vmul.f32 %v64, %v67
    %v69 = vmul.f32 %v60, %v67
    %v70 = vmul.f32 %v65, %v67
    %v71 = vadd.f32 %v68, 0.0
    %v72 = vadd.f32 %v69, 0.0
    %v73 = vadd.f32 %v70, 0.0
    %s74 = sld [smem:[#allocation2 + $0x10]]
    %v75 = vstv %s74
    %v76 = vmul.f32 %v64, %v75
    %v77 = vmul.f32 %v60, %v75
    %v78 = vmul.f32 %v65, %v75
    %v79 = vadd.f32 %v76, 0.0
    %v80 = vadd.f32 %v77, 0.0
    %v81 = vadd.f32 %v78, 0.0
    %s82 = sld [smem:[#allocation2 + $0x1]]
    %v83 = vstv %s82
    %v84 = vmul.f32 %v64, %v83
    %v85 = vmul.f32 %v60, %v83
    %v86 = vmul.f32 %v65, %v83
    %90 = vrot.lane.b32.xlu0 %v84, 1
    %v91 = vpop.permute.xlu0 %90
    %92 = vrot.lane.b32.xlu0 %v85, 1
    %v93 = vpop.permute.xlu0 %92
    %94 = vrot.lane.b32.xlu0 %v86, 1
    %v95 = vpop.permute.xlu0 %94
    %v99 = vadd.f32 %v71, %v91
    %v100 = vadd.f32 %v72, %v93
    %v101 = vadd.f32 %v73, %v95
    %s102 = sld [smem:[#allocation2 + $0x11]]
    %v103 = vstv %s102
    %v104 = vmul.f32 %v64, %v103
    %v105 = vmul.f32 %v60, %v103
    %v106 = vmul.f32 %v65, %v103
    %110 = vrot.lane.b32.xlu0 %v104, 1
    %v111 = vpop.permute.xlu0 %110
    %112 = vrot.lane.b32.xlu0 %v105, 1
    %v113 = vpop.permute.xlu0 %112
    %114 = vrot.lane.b32.xlu0 %v106, 1
    %v115 = vpop.permute.xlu0 %114
    %v119 = vadd.f32 %v79, %v111
    %v120 = vadd.f32 %v80, %v113
    %v121 = vadd.f32 %v81, %v115
    %s122 = sld [smem:[#allocation2 + $0x2]]
    %v123 = vstv %s122
    %v124 = vmul.f32 %v64, %v123
    %v125 = vmul.f32 %v60, %v123
    %v126 = vmul.f32 %v65, %v123
    %130 = vrot.lane.b32.xlu0 %v124, 2
    %v131 = vpop.permute.xlu0 %130
    %132 = vrot.lane.b32.xlu0 %v125, 2
    %v133 = vpop.permute.xlu0 %132
    %134 = vrot.lane.b32.xlu0 %v126, 2
    %v135 = vpop.permute.xlu0 %134
    %v139 = vadd.f32 %v99, %v131
    %v140 = vadd.f32 %v100, %v133
    %v141 = vadd.f32 %v101, %v135
    %s142 = sld [smem:[#allocation2 + $0x12]]
    %v143 = vstv %s142
    %v144 = vmul.f32 %v64, %v143
    %v145 = vmul.f32 %v60, %v143
    %v146 = vmul.f32 %v65, %v143
    %150 = vrot.lane.b32.xlu0 %v144, 2
    %v151 = vpop.permute.xlu0 %150
    %152 = vrot.lane.b32.xlu0 %v145, 2
    %v153 = vpop.permute.xlu0 %152
    %154 = vrot.lane.b32.xlu0 %v146, 2
    %v155 = vpop.permute.xlu0 %154
    %v159 = vadd.f32 %v119, %v151
    %v160 = vadd.f32 %v120, %v153
    %v161 = vadd.f32 %v121, %v155
    %s162 = sld [smem:[#allocation2 + $0x3]]
    %v163 = vstv %s162
    %v164 = vmul.f32 %v64, %v163
    %v165 = vmul.f32 %v60, %v163
    %v166 = vmul.f32 %v65, %v163
    %170 = vrot.lane.b32.xlu0 %v164, 3
    %v171 = vpop.permute.xlu0 %170
    %172 = vrot.lane.b32.xlu0 %v165, 3
    %v173 = vpop.permute.xlu0 %172
    %174 = vrot.lane.b32.xlu0 %v166, 3
    %v175 = vpop.permute.xlu0 %174
    %v179 = vadd.f32 %v139, %v171
    %v180 = vadd.f32 %v140, %v173
    %v181 = vadd.f32 %v141, %v175
    %s182 = sld [smem:[#allocation2 + $0x13]]
    %v183 = vstv %s182
    %v184 = vmul.f32 %v64, %v183
    %v185 = vmul.f32 %v60, %v183
    %v186 = vmul.f32 %v65, %v183
    %190 = vrot.lane.b32.xlu0 %v184, 3
    %v191 = vpop.permute.xlu0 %190
    %192 = vrot.lane.b32.xlu0 %v185, 3
    %v193 = vpop.permute.xlu0 %192
    %194 = vrot.lane.b32.xlu0 %v186, 3
    %v195 = vpop.permute.xlu0 %194
    %v199 = vadd.f32 %v159, %v191
    %v200 = vadd.f32 %v160, %v193
    %v201 = vadd.f32 %v161, %v195
    %s202 = sld [smem:[#allocation2 + $0x4]]
    %v203 = vstv %s202
    %v204 = vmul.f32 %v64, %v203
    %v205 = vmul.f32 %v60, %v203
    %v206 = vmul.f32 %v65, %v203
    %vm210 = vcmask 1040384
    %v211 = vrot.slane %v204, 7
    %v212 = vrot.slane %v205, 7
    %v213 = vsel %vm210, %v211, %v212
    %v214 = vrot.slane %v206, 7
    %v215 = vsel %vm210, %v212, %v214
    %v219 = vadd.f32 %v179, %v211
    %v220 = vadd.f32 %v180, %v213
    %v221 = vadd.f32 %v181, %v215
    %s222 = sld [smem:[#allocation2 + $0x14]]
    %v223 = vstv %s222
    %v224 = vmul.f32 %v64, %v223
    %v225 = vmul.f32 %v60, %v223
    %v226 = vmul.f32 %v65, %v223
    %v230 = vrot.slane %v224, 7
    %v231 = vrot.slane %v225, 7
    %v232 = vsel %vm210, %v230, %v231
    %v233 = vrot.slane %v226, 7
    %v234 = vsel %vm210, %v231, %v233
    %v238 = vadd.f32 %v199, %v230
    %v239 = vadd.f32 %v200, %v232
    %v240 = vadd.f32 %v201, %v234
    %s241 = sld [smem:[#allocation2 + $0x5]]
    %v242 = vstv %s241
    %v243 = vmul.f32 %v64, %v242
    %v244 = vmul.f32 %v60, %v242
    %v245 = vmul.f32 %v65, %v242
    %v249 = vrot.slane %v243, 7
    %v250 = vrot.slane %v244, 7
    %v251 = vsel %vm210, %v249, %v250
    %v252 = vrot.slane %v245, 7
    %v253 = vsel %vm210, %v250, %v252
    %254 = vrot.lane.b32.xlu0 %v249, 1
    %v255 = vpop.permute.xlu0 %254
    %256 = vrot.lane.b32.xlu0 %v251, 1
    %v257 = vpop.permute.xlu0 %256
    %258 = vrot.lane.b32.xlu0 %v253, 1
    %v259 = vpop.permute.xlu0 %258
    %v263 = vadd.f32 %v219, %v255
    %v264 = vadd.f32 %v220, %v257
    %v265 = vadd.f32 %v221, %v259
    %s266 = sld [smem:[#allocation2 + $0x15]]
    %v267 = vstv %s266
    %v268 = vmul.f32 %v64, %v267
    %v269 = vmul.f32 %v60, %v267
    %v270 = vmul.f32 %v65, %v267
    %v274 = vrot.slane %v268, 7
    %v275 = vrot.slane %v269, 7
    %v276 = vsel %vm210, %v274, %v275
    %v277 = vrot.slane %v270, 7
    %v278 = vsel %vm210, %v275, %v277
    %279 = vrot.lane.b32.xlu0 %v274, 1
    %v280 = vpop.permute.xlu0 %279
    %281 = vrot.lane.b32.xlu0 %v276, 1
    %v282 = vpop.permute.xlu0 %281
    %283 = vrot.lane.b32.xlu0 %v278, 1
    %v284 = vpop.permute.xlu0 %283
    %v288 = vadd.f32 %v238, %v280
    %v289 = vadd.f32 %v239, %v282
    %v290 = vadd.f32 %v240, %v284
    %s291 = sld [smem:[#allocation2 + $0x6]]
    %v292 = vstv %s291
    %v293 = vmul.f32 %v64, %v292
    %v294 = vmul.f32 %v60, %v292
    %v295 = vmul.f32 %v65, %v292
    %v299 = vrot.slane %v293, 7
    %v300 = vrot.slane %v294, 7
    %v301 = vsel %vm210, %v299, %v300
    %v302 = vrot.slane %v295, 7
    %v303 = vsel %vm210, %v300, %v302
    %304 = vrot.lane.b32.xlu0 %v299, 2
    %v305 = vpop.permute.xlu0 %304
    %306 = vrot.lane.b32.xlu0 %v301, 2
    %v307 = vpop.permute.xlu0 %306
    %308 = vrot.lane.b32.xlu0 %v303, 2
    %v309 = vpop.permute.xlu0 %308
    %v313 = vadd.f32 %v263, %v305
    %v314 = vadd.f32 %v264, %v307
    %v315 = vadd.f32 %v265, %v309
    %s316 = sld [smem:[#allocation2 + $0x16]]
    %v317 = vstv %s316
    %v318 = vmul.f32 %v64, %v317
    %v319 = vmul.f32 %v60, %v317
    %v320 = vmul.f32 %v65, %v317
    %v324 = vrot.slane %v318, 7
    %v325 = vrot.slane %v319, 7
    %v326 = vsel %vm210, %v324, %v325
    %v327 = vrot.slane %v320, 7
    %v328 = vsel %vm210, %v325, %v327
    %329 = vrot.lane.b32.xlu0 %v324, 2
    %v330 = vpop.permute.xlu0 %329
    %331 = vrot.lane.b32.xlu0 %v326, 2
    %v332 = vpop.permute.xlu0 %331
    %333 = vrot.lane.b32.xlu0 %v328, 2
    %v334 = vpop.permute.xlu0 %333
    %v338 = vadd.f32 %v288, %v330
    %v339 = vadd.f32 %v289, %v332
    %v340 = vadd.f32 %v290, %v334
    %s341 = sld [smem:[#allocation2 + $0x7]]
    %v342 = vstv %s341
    %v343 = vmul.f32 %v64, %v342
    %v344 = vmul.f32 %v60, %v342
    %v345 = vmul.f32 %v65, %v342
    %v349 = vrot.slane %v343, 7
    %v350 = vrot.slane %v344, 7
    %v351 = vsel %vm210, %v349, %v350
    %v352 = vrot.slane %v345, 7
    %v353 = vsel %vm210, %v350, %v352
    %354 = vrot.lane.b32.xlu0 %v349, 3
    %v355 = vpop.permute.xlu0 %354
    %356 = vrot.lane.b32.xlu0 %v351, 3
    %v357 = vpop.permute.xlu0 %356
    %358 = vrot.lane.b32.xlu0 %v353, 3
    %v359 = vpop.permute.xlu0 %358
    %v363 = vadd.f32 %v313, %v355
    %v364 = vadd.f32 %v314, %v357
    %v365 = vadd.f32 %v315, %v359
    %s366 = sld [smem:[#allocation2 + $0x17]]
    %v367 = vstv %s366
    %v368 = vmul.f32 %v64, %v367
    %v369 = vmul.f32 %v60, %v367
    %v370 = vmul.f32 %v65, %v367
    %v374 = vrot.slane %v368, 7
    %v375 = vrot.slane %v369, 7
    %v376 = vsel %vm210, %v374, %v375
    %v377 = vrot.slane %v370, 7
    %v378 = vsel %vm210, %v375, %v377
    %379 = vrot.lane.b32.xlu0 %v374, 3
    %v380 = vpop.permute.xlu0 %379
    %381 = vrot.lane.b32.xlu0 %v376, 3
    %v382 = vpop.permute.xlu0 %381
    %383 = vrot.lane.b32.xlu0 %v378, 3
    %v384 = vpop.permute.xlu0 %383
    %v388 = vadd.f32 %v338, %v380
    %v389 = vadd.f32 %v339, %v382
    %v390 = vadd.f32 %v340, %v384
    %s391 = sld [smem:[#allocation2 + $0x8]]
    %v392 = vstv %s391
    %v393 = vmul.f32 %v64, %v392
    %v394 = vmul.f32 %v60, %v392
    %v395 = vmul.f32 %v65, %v392
    %vm399 = vcmask 1041408
    %v400 = vrot.slane %v393, 6
    %v401 = vrot.slane %v394, 6
    %v402 = vsel %vm399, %v400, %v401
    %v403 = vrot.slane %v395, 6
    %v404 = vsel %vm399, %v401, %v403
    %v408 = vadd.f32 %v363, %v400
    %v409 = vadd.f32 %v364, %v402
    %v410 = vadd.f32 %v365, %v404
    %s411 = sld [smem:[#allocation2 + $0x18]]
    %v412 = vstv %s411
    %v413 = vmul.f32 %v64, %v412
    %v414 = vmul.f32 %v60, %v412
    %v415 = vmul.f32 %v65, %v412
    %v419 = vrot.slane %v413, 6
    %v420 = vrot.slane %v414, 6
    %v421 = vsel %vm399, %v419, %v420
    %v422 = vrot.slane %v415, 6
    %v423 = vsel %vm399, %v420, %v422
    %v427 = vadd.f32 %v388, %v419
    %v428 = vadd.f32 %v389, %v421
    %v429 = vadd.f32 %v390, %v423
    %s430 = sld [smem:[#allocation2 + $0x9]]
    %v431 = vstv %s430
    %v432 = vmul.f32 %v64, %v431
    %v433 = vmul.f32 %v60, %v431
    %v434 = vmul.f32 %v65, %v431
    %v438 = vrot.slane %v432, 6
    %v439 = vrot.slane %v433, 6
    %v440 = vsel %vm399, %v438, %v439
    %v441 = vrot.slane %v434, 6
    %v442 = vsel %vm399, %v439, %v441
    %443 = vrot.lane.b32.xlu0 %v438, 1
    %v444 = vpop.permute.xlu0 %443
    %445 = vrot.lane.b32.xlu0 %v440, 1
    %v446 = vpop.permute.xlu0 %445
    %447 = vrot.lane.b32.xlu0 %v442, 1
    %v448 = vpop.permute.xlu0 %447
    %v452 = vadd.f32 %v408, %v444
    %v453 = vadd.f32 %v409, %v446
    %v454 = vadd.f32 %v410, %v448
    %s455 = sld [smem:[#allocation2 + $0x19]]
    %v456 = vstv %s455
    %v457 = vmul.f32 %v64, %v456
    %v458 = vmul.f32 %v60, %v456
    %v459 = vmul.f32 %v65, %v456
    %v463 = vrot.slane %v457, 6
    %v464 = vrot.slane %v458, 6
    %v465 = vsel %vm399, %v463, %v464
    %v466 = vrot.slane %v459, 6
    %v467 = vsel %vm399, %v464, %v466
    %468 = vrot.lane.b32.xlu0 %v463, 1
    %v469 = vpop.permute.xlu0 %468
    %470 = vrot.lane.b32.xlu0 %v465, 1
    %v471 = vpop.permute.xlu0 %470
    %472 = vrot.lane.b32.xlu0 %v467, 1
    %v473 = vpop.permute.xlu0 %472
    %v477 = vadd.f32 %v427, %v469
    %v478 = vadd.f32 %v428, %v471
    %v479 = vadd.f32 %v429, %v473
    %s480 = sld [smem:[#allocation2 + $0xa]]
    %v481 = vstv %s480
    %v482 = vmul.f32 %v64, %v481
    %v483 = vmul.f32 %v60, %v481
    %v484 = vmul.f32 %v65, %v481
    %v488 = vrot.slane %v482, 6
    %v489 = vrot.slane %v483, 6
    %v490 = vsel %vm399, %v488, %v489
    %v491 = vrot.slane %v484, 6
    %v492 = vsel %vm399, %v489, %v491
    %493 = vrot.lane.b32.xlu0 %v488, 2
    %v494 = vpop.permute.xlu0 %493
    %495 = vrot.lane.b32.xlu0 %v490, 2
    %v496 = vpop.permute.xlu0 %495
    %497 = vrot.lane.b32.xlu0 %v492, 2
    %v498 = vpop.permute.xlu0 %497
    %v502 = vadd.f32 %v452, %v494
    %v503 = vadd.f32 %v453, %v496
    %v504 = vadd.f32 %v454, %v498
    %s505 = sld [smem:[#allocation2 + $0x1a]]
    %v506 = vstv %s505
    %v507 = vmul.f32 %v64, %v506
    %v508 = vmul.f32 %v60, %v506
    %v509 = vmul.f32 %v65, %v506
    %v513 = vrot.slane %v507, 6
    %v514 = vrot.slane %v508, 6
    %v515 = vsel %vm399, %v513, %v514
    %v516 = vrot.slane %v509, 6
    %v517 = vsel %vm399, %v514, %v516
    %518 = vrot.lane.b32.xlu0 %v513, 2
    %v519 = vpop.permute.xlu0 %518
    %520 = vrot.lane.b32.xlu0 %v515, 2
    %v521 = vpop.permute.xlu0 %520
    %522 = vrot.lane.b32.xlu0 %v517, 2
    %v523 = vpop.permute.xlu0 %522
    %v527 = vadd.f32 %v477, %v519
    %v528 = vadd.f32 %v478, %v521
    %v529 = vadd.f32 %v479, %v523
    %s530 = sld [smem:[#allocation2 + $0xb]]
    %v531 = vstv %s530
    %v532 = vmul.f32 %v64, %v531
    %v533 = vmul.f32 %v60, %v531
    %v534 = vmul.f32 %v65, %v531
    %v538 = vrot.slane %v532, 6
    %v539 = vrot.slane %v533, 6
    %v540 = vsel %vm399, %v538, %v539
    %v541 = vrot.slane %v534, 6
    %v542 = vsel %vm399, %v539, %v541
    %543 = vrot.lane.b32.xlu0 %v538, 3
    %v544 = vpop.permute.xlu0 %543
    %545 = vrot.lane.b32.xlu0 %v540, 3
    %v546 = vpop.permute.xlu0 %545
    %547 = vrot.lane.b32.xlu0 %v542, 3
    %v548 = vpop.permute.xlu0 %547
    %v552 = vadd.f32 %v502, %v544
    %v553 = vadd.f32 %v503, %v546
    %v554 = vadd.f32 %v504, %v548
    %s555 = sld [smem:[#allocation2 + $0x1b]]
    %v556 = vstv %s555
    %v557 = vmul.f32 %v64, %v556
    %v558 = vmul.f32 %v60, %v556
    %v559 = vmul.f32 %v65, %v556
    %v563 = vrot.slane %v557, 6
    %v564 = vrot.slane %v558, 6
    %v565 = vsel %vm399, %v563, %v564
    %v566 = vrot.slane %v559, 6
    %v567 = vsel %vm399, %v564, %v566
    %568 = vrot.lane.b32.xlu0 %v563, 3
    %v569 = vpop.permute.xlu0 %568
    %570 = vrot.lane.b32.xlu0 %v565, 3
    %v571 = vpop.permute.xlu0 %570
    %572 = vrot.lane.b32.xlu0 %v567, 3
    %v573 = vpop.permute.xlu0 %572
    %v577 = vadd.f32 %v527, %v569
    %v578 = vadd.f32 %v528, %v571
    %v579 = vadd.f32 %v529, %v573
    %s580 = sld [smem:[#allocation2 + $0xc]]
    %v581 = vstv %s580
    %v582 = vmul.f32 %v64, %v581
    %v583 = vmul.f32 %v60, %v581
    %v584 = vmul.f32 %v65, %v581
    %v588 = vrot.slane %v582, 5
    %v589 = vrot.slane %v583, 5
    %v590 = vsel %vm57, %v588, %v589
    %v591 = vrot.slane %v584, 5
    %v592 = vsel %vm57, %v589, %v591
    %v596 = vadd.f32 %v552, %v588
    %v597 = vadd.f32 %v553, %v590
    %v598 = vadd.f32 %v554, %v592
    %s599 = sld [smem:[#allocation2 + $0x1c]]
    %v600 = vstv %s599
    %v601 = vmul.f32 %v64, %v600
    %v602 = vmul.f32 %v60, %v600
    %v603 = vmul.f32 %v65, %v600
    %v607 = vrot.slane %v601, 5
    %v608 = vrot.slane %v602, 5
    %v609 = vsel %vm57, %v607, %v608
    %v610 = vrot.slane %v603, 5
    %v611 = vsel %vm57, %v608, %v610
    %v615 = vadd.f32 %v577, %v607
    %v616 = vadd.f32 %v578, %v609
    %v617 = vadd.f32 %v579, %v611
    %s618 = sld [smem:[#allocation2 + $0xd]]
    %v619 = vstv %s618
    %v620 = vmul.f32 %v64, %v619
    %v621 = vmul.f32 %v60, %v619
    %v622 = vmul.f32 %v65, %v619
    %v626 = vrot.slane %v620, 5
    %v627 = vrot.slane %v621, 5
    %v628 = vsel %vm57, %v626, %v627
    %v629 = vrot.slane %v622, 5
    %v630 = vsel %vm57, %v627, %v629
    %631 = vrot.lane.b32.xlu0 %v626, 1
    %v632 = vpop.permute.xlu0 %631
    %633 = vrot.lane.b32.xlu0 %v628, 1
    %v634 = vpop.permute.xlu0 %633
    %635 = vrot.lane.b32.xlu0 %v630, 1
    %v636 = vpop.permute.xlu0 %635
    %v640 = vadd.f32 %v596, %v632
    %v641 = vadd.f32 %v597, %v634
    %v642 = vadd.f32 %v598, %v636
    %s643 = sld [smem:[#allocation2 + $0x1d]]
    %v644 = vstv %s643
    %v645 = vmul.f32 %v64, %v644
    %v646 = vmul.f32 %v60, %v644
    %v647 = vmul.f32 %v65, %v644
    %v651 = vrot.slane %v645, 5
    %v652 = vrot.slane %v646, 5
    %v653 = vsel %vm57, %v651, %v652
    %v654 = vrot.slane %v647, 5
    %v655 = vsel %vm57, %v652, %v654
    %656 = vrot.lane.b32.xlu0 %v651, 1
    %v657 = vpop.permute.xlu0 %656
    %658 = vrot.lane.b32.xlu0 %v653, 1
    %v659 = vpop.permute.xlu0 %658
    %660 = vrot.lane.b32.xlu0 %v655, 1
    %v661 = vpop.permute.xlu0 %660
    %v665 = vadd.f32 %v615, %v657
    %v666 = vadd.f32 %v616, %v659
    %v667 = vadd.f32 %v617, %v661
    %s668 = sld [smem:[#allocation2 + $0xe]]
    %v669 = vstv %s668
    %v670 = vmul.f32 %v64, %v669
    %v671 = vmul.f32 %v60, %v669
    %v672 = vmul.f32 %v65, %v669
    %v676 = vrot.slane %v670, 5
    %v677 = vrot.slane %v671, 5
    %v678 = vsel %vm57, %v676, %v677
    %v679 = vrot.slane %v672, 5
    %v680 = vsel %vm57, %v677, %v679
    %681 = vrot.lane.b32.xlu0 %v676, 2
    %v682 = vpop.permute.xlu0 %681
    %683 = vrot.lane.b32.xlu0 %v678, 2
    %v684 = vpop.permute.xlu0 %683
    %685 = vrot.lane.b32.xlu0 %v680, 2
    %v686 = vpop.permute.xlu0 %685
    %v690 = vadd.f32 %v640, %v682
    %v691 = vadd.f32 %v641, %v684
    %v692 = vadd.f32 %v642, %v686
    %s693 = sld [smem:[#allocation2 + $0x1e]]
    %v694 = vstv %s693
    %v695 = vmul.f32 %v64, %v694
    %v696 = vmul.f32 %v60, %v694
    %v697 = vmul.f32 %v65, %v694
    %v701 = vrot.slane %v695, 5
    %v702 = vrot.slane %v696, 5
    %v703 = vsel %vm57, %v701, %v702
    %v704 = vrot.slane %v697, 5
    %v705 = vsel %vm57, %v702, %v704
    %706 = vrot.lane.b32.xlu0 %v701, 2
    %v707 = vpop.permute.xlu0 %706
    %708 = vrot.lane.b32.xlu0 %v703, 2
    %v709 = vpop.permute.xlu0 %708
    %710 = vrot.lane.b32.xlu0 %v705, 2
    %v711 = vpop.permute.xlu0 %710
    %v715 = vadd.f32 %v665, %v707
    %v716 = vadd.f32 %v666, %v709
    %v717 = vadd.f32 %v667, %v711
    %s718 = sld [smem:[#allocation2 + $0xf]]
    %v719 = vstv %s718
    %v720 = vmul.f32 %v64, %v719
    %v721 = vmul.f32 %v60, %v719
    %v722 = vmul.f32 %v65, %v719
    %v726 = vrot.slane %v720, 5
    %v727 = vrot.slane %v721, 5
    %v728 = vsel %vm57, %v726, %v727
    %v729 = vrot.slane %v722, 5
    %v730 = vsel %vm57, %v727, %v729
    %731 = vrot.lane.b32.xlu0 %v726, 3
    %v732 = vpop.permute.xlu0 %731
    %733 = vrot.lane.b32.xlu0 %v728, 3
    %v734 = vpop.permute.xlu0 %733
    %735 = vrot.lane.b32.xlu0 %v730, 3
    %v736 = vpop.permute.xlu0 %735
    %v740 = vadd.f32 %v690, %v732
    %v741 = vadd.f32 %v691, %v734
    %v742 = vadd.f32 %v692, %v736
    %s743 = sld [smem:[#allocation2 + $0x1f]]
    %v744 = vstv %s743
    %v745 = vmul.f32 %v64, %v744
    %v746 = vmul.f32 %v60, %v744
    %v747 = vmul.f32 %v65, %v744
    %v751 = vrot.slane %v745, 5
    %v752 = vrot.slane %v746, 5
    %v753 = vsel %vm57, %v751, %v752
    %v754 = vrot.slane %v747, 5
    %v755 = vsel %vm57, %v752, %v754
    %756 = vrot.lane.b32.xlu0 %v751, 3
    %v757 = vpop.permute.xlu0 %756
    %758 = vrot.lane.b32.xlu0 %v753, 3
    %v759 = vpop.permute.xlu0 %758
    %760 = vrot.lane.b32.xlu0 %v755, 3
    %v761 = vpop.permute.xlu0 %760
    %v765 = vadd.f32 %v715, %v757
    %v766 = vadd.f32 %v716, %v759
    %v767 = vadd.f32 %v717, %v761
    %v768 = vmax.f32 %v740, 0.0
    %v769 = vmax.f32 %v741, 0.0
    %v770 = vmax.f32 %v742, 0.0
    %vm774 = vcmask 1044480
    %v775 = vrot.slane %v768, 3
    %v776 = vrot.slane %v769, 3
    %v777 = vsel %vm774, %v775, %v776
    %v778 = vrot.slane %v770, 3
    %v779 = vsel %vm774, %v776, %v778
    %780 = vrot.lane.b32.xlu0 %v777, 126
    %v781 = vpop.permute.xlu0 %780
    %782 = vrot.lane.b32.xlu0 %v779, 126
    %v783 = vpop.permute.xlu0 %782
    %784 = vrot.lane.b32.xlu0 %v778, 126
    %v785 = vpop.permute.xlu0 %784
    %vm789 = vcmask 7168
    %v790 = vsel %vm789, 0.0, %v781
    %v791 = vsel %vm789, 0.0, %v783
    %v792 = vsel %vm789, 0.0, %v785
    %vm793 = vcmask 162816
    %v794 = vsel %vm793, %v790, 0.0
    %v795 = vsel %vm793, %v791, 0.0
    %v796 = vsel %vm793, %v792, 0.0
    %v800 = vrot.slane %v794, 7
    %v801 = vrot.slane %v795, 7
    %v802 = vsel %vm210, %v800, %v801
    %v803 = vrot.slane %v796, 7
    %v804 = vsel %vm210, %v801, %v803
    %v808 = vsel %vm210, 0.0, %v800
    %vm809 = vcmask 1043456
    %v810 = vsel %vm809, %v804, 0.0
    %v811 = vmax.f32 %v765, 0.0
    %v812 = vmax.f32 %v766, 0.0
    %v813 = vmax.f32 %v767, 0.0
    %v817 = vrot.slane %v811, 3
    %v818 = vrot.slane %v812, 3
    %v819 = vsel %vm774, %v817, %v818
    %v820 = vrot.slane %v813, 3
    %v821 = vsel %vm774, %v818, %v820
    %822 = vrot.lane.b32.xlu0 %v819, 126
    %v823 = vpop.permute.xlu0 %822
    %824 = vrot.lane.b32.xlu0 %v821, 126
    %v825 = vpop.permute.xlu0 %824
    %826 = vrot.lane.b32.xlu0 %v820, 126
    %v827 = vpop.permute.xlu0 %826
    %v831 = vsel %vm789, 0.0, %v823
    %v832 = vsel %vm789, 0.0, %v825
    %v833 = vsel %vm789, 0.0, %v827
    %v834 = vsel %vm793, %v831, 0.0
    %v835 = vsel %vm793, %v832, 0.0
    %v836 = vsel %vm793, %v833, 0.0
    %v840 = vrot.slane %v834, 7
    %v841 = vrot.slane %v835, 7
    %v842 = vsel %vm210, %v840, %v841
    %v843 = vrot.slane %v836, 7
    %v844 = vsel %vm210, %v841, %v843
    %v848 = vsel %vm210, 0.0, %v840
    %v849 = vsel %vm809, %v844, 0.0
    %v850 = vlaneseq
    %v851 = vshrl.u32 %v850, 7
    %v852 = vadd.s32 %v851, 8
    %v853 = vadd.s32 %v851, 16
    %v854 = vlaneseq
    %v855 = vand.u32 %v854, 127
    %v856 = vmul.u32 %v851, 2
    %v857 = vmul.u32 %v852, 2
    %v858 = vmul.u32 %v853, 2
    %vm859 = vcmp.eq.s32.totalorder %v855, %v856
    %vm860 = vcmp.eq.s32.totalorder %v855, %v857
    %vm861 = vcmp.eq.s32.totalorder %v855, %v858
    %v862 = vsel %vm859, 1, 0
    %v863 = vsel %vm860, 1, 0
    %v864 = vsel %vm861, 1, 0
    %v865 = vcvt.s32.f32 %v862
    %v866 = vcvt.s32.f32 %v863
    %v867 = vcvt.s32.f32 %v864
    %v868 = vadd.s32 %v856, 1
    %v869 = vadd.s32 %v857, 1
    %v870 = vadd.s32 %v858, 1
    %vm871 = vcmp.eq.s32.totalorder %v855, %v868
    %vm872 = vcmp.eq.s32.totalorder %v855, %v869
    %vm873 = vcmp.eq.s32.totalorder %v855, %v870
    %v874 = vsel %vm871, 1, 0
    %v875 = vsel %vm872, 1, 0
    %v876 = vsel %vm873, 1, 0
    %v877 = vcvt.s32.f32 %v874
    %v878 = vcvt.s32.f32 %v875
    %v879 = vcvt.s32.f32 %v876
    %v880 = vadd.s32 %v851, 24
    %v881 = vadd.s32 %v851, 32
    %v882 = vmul.u32 %v855, 2
    %vm883 = vcmp.eq.s32.totalorder %v851, %v882
    %vm884 = vcmp.eq.s32.totalorder %v852, %v882
    %vm885 = vcmp.eq.s32.totalorder %v853, %v882
    %vm886 = vcmp.eq.s32.totalorder %v880, %v882
    %vm887 = vcmp.eq.s32.totalorder %v881, %v882
    %v888 = vsel %vm883, 1, 0
    %v889 = vsel %vm884, 1, 0
    %v890 = vsel %vm885, 1, 0
    %v891 = vsel %vm886, 1, 0
    %v892 = vsel %vm887, 1, 0
    %v893 = vcvt.s32.f32 %v888
    %v894 = vcvt.s32.f32 %v889
    %v895 = vcvt.s32.f32 %v890
    %v896 = vcvt.s32.f32 %v891
    %v897 = vcvt.s32.f32 %v892
    %v898 = vadd.s32 %v882, 1
    %vm899 = vcmp.eq.s32.totalorder %v851, %v898
    %vm900 = vcmp.eq.s32.totalorder %v852, %v898
    %vm901 = vcmp.eq.s32.totalorder %v853, %v898
    %vm902 = vcmp.eq.s32.totalorder %v880, %v898
    %vm903 = vcmp.eq.s32.totalorder %v881, %v898
    %v904 = vsel %vm899, 1, 0
    %v905 = vsel %vm900, 1, 0
    %v906 = vsel %vm901, 1, 0
    %v907 = vsel %vm902, 1, 0
    %v908 = vsel %vm903, 1, 0
    %v909 = vcvt.s32.f32 %v904
    %v910 = vcvt.s32.f32 %v905
    %v911 = vcvt.s32.f32 %v906
    %v912 = vcvt.s32.f32 %v907
    %v913 = vcvt.s32.f32 %v908
    %s914 = sld [smem:[#allocation4 + $0x5]]
    %v915 = vstv %s914
    %v916 = vmul.f32 %v808, %v915
    %v917 = vmul.f32 %v802, %v915
    %v918 = vmul.f32 %v810, %v915
    %v919 = vadd.f32 %v916, 0.0
    %v920 = vadd.f32 %v917, 0.0
    %v921 = vadd.f32 %v918, 0.0
    %s922 = sld [smem:[#allocation4 + $0x7]]
    %v923 = vstv %s922
    %v924 = vmul.f32 %v808, %v923
    %v925 = vmul.f32 %v802, %v923
    %v926 = vmul.f32 %v810, %v923
    %930 = vrot.lane.b32.xlu0 %v924, 1
    %v931 = vpop.permute.xlu0 %930
    %932 = vrot.lane.b32.xlu0 %v925, 1
    %v933 = vpop.permute.xlu0 %932
    %934 = vrot.lane.b32.xlu0 %v926, 1
    %v935 = vpop.permute.xlu0 %934
    %v939 = vadd.f32 %v919, %v931
    %v940 = vadd.f32 %v920, %v933
    %v941 = vadd.f32 %v921, %v935
    %s942 = sld [smem:[#allocation4 + $0xd]]
    %v943 = vstv %s942
    %v944 = vmul.f32 %v808, %v943
    %v945 = vmul.f32 %v802, %v943
    %v946 = vmul.f32 %v810, %v943
    %v950 = vrot.slane %v944, 7
    %v951 = vrot.slane %v945, 7
    %v952 = vsel %vm210, %v950, %v951
    %v953 = vrot.slane %v946, 7
    %v954 = vsel %vm210, %v951, %v953
    %v958 = vadd.f32 %v939, %v950
    %v959 = vadd.f32 %v940, %v952
    %v960 = vadd.f32 %v941, %v954
    %s961 = sld [smem:[#allocation4 + $0xf]]
    %v962 = vstv %s961
    %v963 = vmul.f32 %v808, %v962
    %v964 = vmul.f32 %v802, %v962
    %v965 = vmul.f32 %v810, %v962
    %v969 = vrot.slane %v963, 7
    %v970 = vrot.slane %v964, 7
    %v971 = vsel %vm210, %v969, %v970
    %v972 = vrot.slane %v965, 7
    %v973 = vsel %vm210, %v970, %v972
    %974 = vrot.lane.b32.xlu0 %v969, 1
    %v975 = vpop.permute.xlu0 %974
    %976 = vrot.lane.b32.xlu0 %v971, 1
    %v977 = vpop.permute.xlu0 %976
    %978 = vrot.lane.b32.xlu0 %v973, 1
    %v979 = vpop.permute.xlu0 %978
    %v983 = vadd.f32 %v958, %v975
    %v984 = vadd.f32 %v959, %v977
    %v985 = vadd.f32 %v960, %v979
    %s986 = sld [smem:[#allocation4 + $0x45]]
    %v987 = vstv %s986
    %v988 = vmul.f32 %v848, %v987
    %v989 = vmul.f32 %v842, %v987
    %v990 = vmul.f32 %v849, %v987
    %v991 = vadd.f32 %v983, %v988
    %v992 = vadd.f32 %v984, %v989
    %v993 = vadd.f32 %v985, %v990
    %s994 = sld [smem:[#allocation4 + $0x47]]
    %v995 = vstv %s994
    %v996 = vmul.f32 %v848, %v995
    %v997 = vmul.f32 %v842, %v995
    %v998 = vmul.f32 %v849, %v995
    %1002 = vrot.lane.b32.xlu0 %v996, 1
    %v1003 = vpop.permute.xlu0 %1002
    %1004 = vrot.lane.b32.xlu0 %v997, 1
    %v1005 = vpop.permute.xlu0 %1004
    %1006 = vrot.lane.b32.xlu0 %v998, 1
    %v1007 = vpop.permute.xlu0 %1006
    %v1011 = vadd.f32 %v991, %v1003
    %v1012 = vadd.f32 %v992, %v1005
    %v1013 = vadd.f32 %v993, %v1007
    %s1014 = sld [smem:[#allocation4 + $0x4d]]
    %v1015 = vstv %s1014
    %v1016 = vmul.f32 %v848, %v1015
    %v1017 = vmul.f32 %v842, %v1015
    %v1018 = vmul.f32 %v849, %v1015
    %v1022 = vrot.slane %v1016, 7
    %v1023 = vrot.slane %v1017, 7
    %v1024 = vsel %vm210, %v1022, %v1023
    %v1025 = vrot.slane %v1018, 7
    %v1026 = vsel %vm210, %v1023, %v1025
    %v1030 = vadd.f32 %v1011, %v1022
    %v1031 = vadd.f32 %v1012, %v1024
    %v1032 = vadd.f32 %v1013, %v1026
    %s1033 = sld [smem:[#allocation4 + $0x4f]]
    %v1034 = vstv %s1033
    %v1035 = vmul.f32 %v848, %v1034
    %v1036 = vmul.f32 %v842, %v1034
    %v1037 = vmul.f32 %v849, %v1034
    %v1041 = vrot.slane %v1035, 7
    %v1042 = vrot.slane %v1036, 7
    %v1043 = vsel %vm210, %v1041, %v1042
    %v1044 = vrot.slane %v1037, 7
    %v1045 = vsel %vm210, %v1042, %v1044
    %1046 = vrot.lane.b32.xlu0 %v1041, 1
    %v1047 = vpop.permute.xlu0 %1046
    %1048 = vrot.lane.b32.xlu0 %v1043, 1
    %v1049 = vpop.permute.xlu0 %1048
    %1050 = vrot.lane.b32.xlu0 %v1045, 1
    %v1051 = vpop.permute.xlu0 %1050
    %v1055 = vadd.f32 %v1030, %v1047
    %v1056 = vadd.f32 %v1031, %v1049
    %v1057 = vadd.f32 %v1032, %v1051
    %s1058 = sld [smem:[#allocation4 + $0x4]]
    %v1059 = vstv %s1058
    %v1060 = vmul.f32 %v808, %v1059
    %v1061 = vmul.f32 %v802, %v1059
    %v1062 = vmul.f32 %v810, %v1059
    %v1063 = vadd.f32 %v1060, 0.0
    %v1064 = vadd.f32 %v1061, 0.0
    %v1065 = vadd.f32 %v1062, 0.0
    %s1066 = sld [smem:[#allocation4 + $0x6]]
    %v1067 = vstv %s1066
    %v1068 = vmul.f32 %v808, %v1067
    %v1069 = vmul.f32 %v802, %v1067
    %v1070 = vmul.f32 %v810, %v1067
    %1074 = vrot.lane.b32.xlu0 %v1068, 1
    %v1075 = vpop.permute.xlu0 %1074
    %1076 = vrot.lane.b32.xlu0 %v1069, 1
    %v1077 = vpop.permute.xlu0 %1076
    %1078 = vrot.lane.b32.xlu0 %v1070, 1
    %v1079 = vpop.permute.xlu0 %1078
    %v1083 = vadd.f32 %v1063, %v1075
    %v1084 = vadd.f32 %v1064, %v1077
    %v1085 = vadd.f32 %v1065, %v1079
    %s1086 = sld [smem:[#allocation4 + $0xc]]
    %v1087 = vstv %s1086
    %v1088 = vmul.f32 %v808, %v1087
    %v1089 = vmul.f32 %v802, %v1087
    %v1090 = vmul.f32 %v810, %v1087
    %v1094 = vrot.slane %v1088, 7
    %v1095 = vrot.slane %v1089, 7
    %v1096 = vsel %vm210, %v1094, %v1095
    %v1097 = vrot.slane %v1090, 7
    %v1098 = vsel %vm210, %v1095, %v1097
    %v1102 = vadd.f32 %v1083, %v1094
    %v1103 = vadd.f32 %v1084, %v1096
    %v1104 = vadd.f32 %v1085, %v1098
    %s1105 = sld [smem:[#allocation4 + $0xe]]
    %v1106 = vstv %s1105
    %v1107 = vmul.f32 %v808, %v1106
    %v1108 = vmul.f32 %v802, %v1106
    %v1109 = vmul.f32 %v810, %v1106
    %v1113 = vrot.slane %v1107, 7
    %v1114 = vrot.slane %v1108, 7
    %v1115 = vsel %vm210, %v1113, %v1114
    %v1116 = vrot.slane %v1109, 7
    %v1117 = vsel %vm210, %v1114, %v1116
    %1118 = vrot.lane.b32.xlu0 %v1113, 1
    %v1119 = vpop.permute.xlu0 %1118
    %1120 = vrot.lane.b32.xlu0 %v1115, 1
    %v1121 = vpop.permute.xlu0 %1120
    %1122 = vrot.lane.b32.xlu0 %v1117, 1
    %v1123 = vpop.permute.xlu0 %1122
    %v1127 = vadd.f32 %v1102, %v1119
    %v1128 = vadd.f32 %v1103, %v1121
    %v1129 = vadd.f32 %v1104, %v1123
    %s1130 = sld [smem:[#allocation4 + $0x44]]
    %v1131 = vstv %s1130
    %v1132 = vmul.f32 %v848, %v1131
    %v1133 = vmul.f32 %v842, %v1131
    %v1134 = vmul.f32 %v849, %v1131
    %v1135 = vadd.f32 %v1127, %v1132
    %v1136 = vadd.f32 %v1128, %v1133
    %v1137 = vadd.f32 %v1129, %v1134
    %s1138 = sld [smem:[#allocation4 + $0x46]]
    %v1139 = vstv %s1138
    %v1140 = vmul.f32 %v848, %v1139
    %v1141 = vmul.f32 %v842, %v1139
    %v1142 = vmul.f32 %v849, %v1139
    %1146 = vrot.lane.b32.xlu0 %v1140, 1
    %v1147 = vpop.permute.xlu0 %1146
    %1148 = vrot.lane.b32.xlu0 %v1141, 1
    %v1149 = vpop.permute.xlu0 %1148
    %1150 = vrot.lane.b32.xlu0 %v1142, 1
    %v1151 = vpop.permute.xlu0 %1150
    %v1155 = vadd.f32 %v1135, %v1147
    %v1156 = vadd.f32 %v1136, %v1149
    %v1157 = vadd.f32 %v1137, %v1151
    %s1158 = sld [smem:[#allocation4 + $0x4c]]
    %v1159 = vstv %s1158
    %v1160 = vmul.f32 %v848, %v1159
    %v1161 = vmul.f32 %v842, %v1159
    %v1162 = vmul.f32 %v849, %v1159
    %v1166 = vrot.slane %v1160, 7
    %v1167 = vrot.slane %v1161, 7
    %v1168 = vsel %vm210, %v1166, %v1167
    %v1169 = vrot.slane %v1162, 7
    %v1170 = vsel %vm210, %v1167, %v1169
    %v1174 = vadd.f32 %v1155, %v1166
    %v1175 = vadd.f32 %v1156, %v1168
    %v1176 = vadd.f32 %v1157, %v1170
    %s1177 = sld [smem:[#allocation4 + $0x4e]]
    %v1178 = vstv %s1177
    %v1179 = vmul.f32 %v848, %v1178
    %v1180 = vmul.f32 %v842, %v1178
    %v1181 = vmul.f32 %v849, %v1178
    %v1185 = vrot.slane %v1179, 7
    %v1186 = vrot.slane %v1180, 7
    %v1187 = vsel %vm210, %v1185, %v1186
    %v1188 = vrot.slane %v1181, 7
    %v1189 = vsel %vm210, %v1186, %v1188
    %1190 = vrot.lane.b32.xlu0 %v1185, 1
    %v1191 = vpop.permute.xlu0 %1190
    %1192 = vrot.lane.b32.xlu0 %v1187, 1
    %v1193 = vpop.permute.xlu0 %1192
    %1194 = vrot.lane.b32.xlu0 %v1189, 1
    %v1195 = vpop.permute.xlu0 %1194
    %v1199 = vadd.f32 %v1174, %v1191
    %v1200 = vadd.f32 %v1175, %v1193
    %v1201 = vadd.f32 %v1176, %v1195
    %vm1205 = vcmask 1046528
    %v1206 = vrot.slane %v1199, 1
    %v1207 = vrot.slane %v1200, 1
    %v1208 = vsel %vm1205, %v1206, %v1207
    %v1209 = vrot.slane %v1201, 1
    %v1210 = vsel %vm1205, %v1207, %v1209
    %1211 = vrot.lane.b32.xlu0 %v1208, 126
    %v1212 = vpop.permute.xlu0 %1211
    %1213 = vrot.lane.b32.xlu0 %v1210, 126
    %v1214 = vpop.permute.xlu0 %1213
    %1215 = vrot.lane.b32.xlu0 %v1209, 126
    %v1216 = vpop.permute.xlu0 %1215
    %v1217 = vsel %vm52, %v1212, 0
    %v1219 = vsel %vm52, %v1214, 0
    %v1221 = vsel %vm52, %v1216, 0
    %v1224 = vsel %vm57, %v879, 0
    %1226 = vmatprep.subr.mxu0 0.0
    %1227 = vmatpush1.msra.mxu0 %v877
    %1228 = vmatprep.subr.mxu0 0.0
    %1229 = vmatpush1.msra.mxu0 %v878
    %1230 = vmatprep.subr.mxu0 0.0
    %1231 = vmatpush1.msra.mxu0 %v1224
    %1232 = vmatprep.subr.mxu0 0.0
    %1233 = vmatpush1.msra.mxu0 0.0
    %1234 = vmatprep.subr.mxu0 0.0
    %1235 = vmatpush1.msra.mxu0 0.0
    %1236 = vmatprep.subr.mxu0 0.0
    %1237 = vmatpush1.msra.mxu0 0.0
    %1238 = vmatprep.subr.mxu0 0.0
    %1239 = vmatpush1.msra.mxu0 0.0
    %1240 = vmatprep.subr.mxu0 0.0
    %1241 = vmatpush1.msra.mxu0 0.0
    %1242 = vmatprep.subr.mxu0 0.0
    %1243 = vmatpush1.msra.mxu0 0.0
    %1244 = vmatprep.subr.mxu0 0.0
    %1245 = vmatpush1.msra.mxu0 0.0
    %1246 = vmatprep.subr.mxu0 0.0
    %1247 = vmatpush1.msra.mxu0 0.0
    %1248 = vmatprep.subr.mxu0 0.0
    %1249 = vmatpush1.msra.mxu0 0.0
    %1250 = vmatprep.subr.mxu0 0.0
    %1251 = vmatpush1.msra.mxu0 0.0
    %1252 = vmatprep.subr.mxu0 0.0
    %1253 = vmatpush1.msra.mxu0 0.0
    %1254 = vmatprep.subr.mxu0 0.0
    %1255 = vmatpush1.msra.mxu0 0.0
    %1256 = vmatprep.subr.mxu0 0.0
    %1257 = vmatpush1.msra.mxu0 0.0
    %1258 = vmatprep.subr.mxu0 0.0
    %1259 = vmatpush1.msra.mxu0 0.0
    %1260 = vmatprep.subr.mxu0 0.0
    %1261 = vmatpush1.msra.mxu0 0.0
    %1262 = vmatprep.subr.mxu0 0.0
    %1263 = vmatpush1.msra.mxu0 0.0
    %1264 = vmatprep.subr.mxu0 0.0
    %1265 = vmatpush1.msra.mxu0 0.0
    %1266 = vmatprep.subr.mxu0 0.0
    %1267 = vmatpush1.msra.mxu0 0.0
    %1268 = vmatprep.subr.mxu0 0.0
    %1269 = vmatpush1.msra.mxu0 0.0
    %1270 = vmatprep.subr.mxu0 0.0
    %1271 = vmatpush1.msra.mxu0 0.0
    %1272 = vmatprep.subr.mxu0 0.0
    %1273 = vmatpush1.msra.mxu0 0.0
    %1274 = vmatprep.subr.mxu0 0.0
    %1275 = vmatpush1.msra.mxu0 0.0
    %1276 = vmatprep.subr.mxu0 0.0
    %1277 = vmatpush1.msra.mxu0 0.0
    %1278 = vmatprep.subr.mxu0 0.0
    %1279 = vmatpush1.msra.mxu0 0.0
    %1280 = vmatprep.subr.mxu0 0.0
    %1281 = vmatpush1.msra.mxu0 0.0
    %1282 = vmatprep.subr.mxu0 0.0
    %1283 = vmatpush1.msra.mxu0 0.0
    %1284 = vmatprep.subr.mxu0 0.0
    %1285 = vmatpush1.msra.mxu0 0.0
    %1286 = vmatprep.subr.mxu0 0.0
    %1287 = vmatpush1.msra.mxu0 0.0
    %1288 = vmatprep.subr.mxu0 0.0
    %1289 = vmatpush1.msra.mxu0 0.0
    %1290 = vmatprep.mubr.f32.mxu0 0.0
    %1291 = vmatmul.mubr.f32.gmra.mrb[0].mxu0 %v1217
    %v1292 = vpop.f32.mrb[0].mxu0
    %v1293 = vadd.f32 0.0, %v1292
    %v1294 = vpop.f32.mrb[0].mxu0
    %1295 = vmatprep.mubr.f32.mxu0 0.0
    %1296 = vmatmul.mubr.f32.gmra.mrb[0].mxu0 %v1219
    %v1297 = vpop.f32.mrb[0].mxu0
    %v1298 = vadd.f32 0.0, %v1297
    %v1299 = vpop.f32.mrb[0].mxu0
    %1300 = vmatprep.mubr.f32.mxu0 0.0
    %1301 = vmatmul.mubr.f32.gmra.mrb[0].mxu0 %v1221
    %v1302 = vpop.f32.mrb[0].mxu0
    %v1303 = vadd.f32 0.0, %v1302
    %v1304 = vpop.f32.mrb[0].mxu0
    %1305 = vdwg.mxu0
    %v1309 = vrot.slane %v1055, 1
    %v1310 = vrot.slane %v1056, 1
    %v1311 = vsel %vm1205, %v1309, %v1310
    %v1312 = vrot.slane %v1057, 1
    %v1313 = vsel %vm1205, %v1310, %v1312
    %1314 = vrot.lane.b32.xlu0 %v1311, 127
    %v1315 = vpop.permute.xlu0 %1314
    %1316 = vrot.lane.b32.xlu0 %v1313, 127
    %v1317 = vpop.permute.xlu0 %1316
    %1318 = vrot.lane.b32.xlu0 %v1312, 127
    %v1319 = vpop.permute.xlu0 %1318
    %v1320 = vsel %vm52, %v1315, 0
    %v1322 = vsel %vm52, %v1317, 0
    %v1324 = vsel %vm52, %v1319, 0
    %v1327 = vsel %vm57, %v867, 0
    %1329 = vmatprep.subr.mxu0 0.0
    %1330 = vmatpush1.msra.mxu0 %v865
    %1331 = vmatprep.subr.mxu0 0.0
    %1332 = vmatpush1.msra.mxu0 %v866
    %1333 = vmatprep.subr.mxu0 0.0
    %1334 = vmatpush1.msra.mxu0 %v1327
    %1335 = vmatprep.subr.mxu0 0.0
    %1336 = vmatpush1.msra.mxu0 0.0
    %1337 = vmatprep.subr.mxu0 0.0
    %1338 = vmatpush1.msra.mxu0 0.0
    %1339 = vmatprep.subr.mxu0 0.0
    %1340 = vmatpush1.msra.mxu0 0.0
    %1341 = vmatprep.subr.mxu0 0.0
    %1342 = vmatpush1.msra.mxu0 0.0
    %1343 = vmatprep.subr.mxu0 0.0
    %1344 = vmatpush1.msra.mxu0 0.0
    %1345 = vmatprep.subr.mxu0 0.0
    %1346 = vmatpush1.msra.mxu0 0.0
    %1347 = vmatprep.subr.mxu0 0.0
    %1348 = vmatpush1.msra.mxu0 0.0
    %1349 = vmatprep.subr.mxu0 0.0
    %1350 = vmatpush1.msra.mxu0 0.0
    %1351 = vmatprep.subr.mxu0 0.0
    %1352 = vmatpush1.msra.mxu0 0.0
    %1353 = vmatprep.subr.mxu0 0.0
    %1354 = vmatpush1.msra.mxu0 0.0
    %1355 = vmatprep.subr.mxu0 0.0
    %1356 = vmatpush1.msra.mxu0 0.0
    %1357 = vmatprep.subr.mxu0 0.0
    %1358 = vmatpush1.msra.mxu0 0.0
    %1359 = vmatprep.subr.mxu0 0.0
    %1360 = vmatpush1.msra.mxu0 0.0
    %1361 = vmatprep.subr.mxu0 0.0
    %1362 = vmatpush1.msra.mxu0 0.0
    %1363 = vmatprep.subr.mxu0 0.0
    %1364 = vmatpush1.msra.mxu0 0.0
    %1365 = vmatprep.subr.mxu0 0.0
    %1366 = vmatpush1.msra.mxu0 0.0
    %1367 = vmatprep.subr.mxu0 0.0
    %1368 = vmatpush1.msra.mxu0 0.0
    %1369 = vmatprep.subr.mxu0 0.0
    %1370 = vmatpush1.msra.mxu0 0.0
    %1371 = vmatprep.subr.mxu0 0.0
    %1372 = vmatpush1.msra.mxu0 0.0
    %1373 = vmatprep.subr.mxu0 0.0
    %1374 = vmatpush1.msra.mxu0 0.0
    %1375 = vmatprep.subr.mxu0 0.0
    %1376 = vmatpush1.msra.mxu0 0.0
    %1377 = vmatprep.subr.mxu0 0.0
    %1378 = vmatpush1.msra.mxu0 0.0
    %1379 = vmatprep.subr.mxu0 0.0
    %1380 = vmatpush1.msra.mxu0 0.0
    %1381 = vmatprep.subr.mxu0 0.0
    %1382 = vmatpush1.msra.mxu0 0.0
    %1383 = vmatprep.subr.mxu0 0.0
    %1384 = vmatpush1.msra.mxu0 0.0
    %1385 = vmatprep.subr.mxu0 0.0
    %1386 = vmatpush1.msra.mxu0 0.0
    %1387 = vmatprep.subr.mxu0 0.0
    %1388 = vmatpush1.msra.mxu0 0.0
    %1389 = vmatprep.subr.mxu0 0.0
    %1390 = vmatpush1.msra.mxu0 0.0
    %1391 = vmatprep.subr.mxu0 0.0
    %1392 = vmatpush1.msra.mxu0 0.0
    %1393 = vmatprep.mubr.f32.mxu0 0.0
    %1394 = vmatmul.mubr.f32.gmra.mrb[0].mxu0 %v1320
    %v1395 = vpop.f32.mrb[0].mxu0
    %v1396 = vadd.f32 %v1293, %v1395
    %v1397 = vpop.f32.mrb[0].mxu0
    %1398 = vmatprep.mubr.f32.mxu0 0.0
    %1399 = vmatmul.mubr.f32.gmra.mrb[0].mxu0 %v1322
    %v1400 = vpop.f32.mrb[0].mxu0
    %v1401 = vadd.f32 %v1298, %v1400
    %v1402 = vpop.f32.mrb[0].mxu0
    %1403 = vmatprep.mubr.f32.mxu0 0.0
    %1404 = vmatmul.mubr.f32.gmra.mrb[0].mxu0 %v1324
    %v1405 = vpop.f32.mrb[0].mxu0
    %v1406 = vadd.f32 %v1303, %v1405
    %v1407 = vpop.f32.mrb[0].mxu0
    %1408 = vdwg.mxu0
    %s1409 = sld [smem:[#allocation4 + $0x1]]
    %v1410 = vstv %s1409
    %v1411 = vmul.f32 %v808, %v1410
    %v1412 = vmul.f32 %v802, %v1410
    %v1413 = vmul.f32 %v810, %v1410
    %v1414 = vadd.f32 %v1411, 0.0
    %v1415 = vadd.f32 %v1412, 0.0
    %v1416 = vadd.f32 %v1413, 0.0
    %s1417 = sld [smem:[#allocation4 + $0x3]]
    %v1418 = vstv %s1417
    %v1419 = vmul.f32 %v808, %v1418
    %v1420 = vmul.f32 %v802, %v1418
    %v1421 = vmul.f32 %v810, %v1418
    %1425 = vrot.lane.b32.xlu0 %v1419, 1
    %v1426 = vpop.permute.xlu0 %1425
    %1427 = vrot.lane.b32.xlu0 %v1420, 1
    %v1428 = vpop.permute.xlu0 %1427
    %1429 = vrot.lane.b32.xlu0 %v1421, 1
    %v1430 = vpop.permute.xlu0 %1429
    %v1434 = vadd.f32 %v1414, %v1426
    %v1435 = vadd.f32 %v1415, %v1428
    %v1436 = vadd.f32 %v1416, %v1430
    %s1437 = sld [smem:[#allocation4 + $0x9]]
    %v1438 = vstv %s1437
    %v1439 = vmul.f32 %v808, %v1438
    %v1440 = vmul.f32 %v802, %v1438
    %v1441 = vmul.f32 %v810, %v1438
    %v1445 = vrot.slane %v1439, 7
    %v1446 = vrot.slane %v1440, 7
    %v1447 = vsel %vm210, %v1445, %v1446
    %v1448 = vrot.slane %v1441, 7
    %v1449 = vsel %vm210, %v1446, %v1448
    %v1453 = vadd.f32 %v1434, %v1445
    %v1454 = vadd.f32 %v1435, %v1447
    %v1455 = vadd.f32 %v1436, %v1449
    %s1456 = sld [smem:[#allocation4 + $0xb]]
    %v1457 = vstv %s1456
    %v1458 = vmul.f32 %v808, %v1457
    %v1459 = vmul.f32 %v802, %v1457
    %v1460 = vmul.f32 %v810, %v1457
    %v1464 = vrot.slane %v1458, 7
    %v1465 = vrot.slane %v1459, 7
    %v1466 = vsel %vm210, %v1464, %v1465
    %v1467 = vrot.slane %v1460, 7
    %v1468 = vsel %vm210, %v1465, %v1467
    %1469 = vrot.lane.b32.xlu0 %v1464, 1
    %v1470 = vpop.permute.xlu0 %1469
    %1471 = vrot.lane.b32.xlu0 %v1466, 1
    %v1472 = vpop.permute.xlu0 %1471
    %1473 = vrot.lane.b32.xlu0 %v1468, 1
    %v1474 = vpop.permute.xlu0 %1473
    %v1478 = vadd.f32 %v1453, %v1470
    %v1479 = vadd.f32 %v1454, %v1472
    %v1480 = vadd.f32 %v1455, %v1474
    %s1481 = sld [smem:[#allocation4 + $0x41]]
    %v1482 = vstv %s1481
    %v1483 = vmul.f32 %v848, %v1482
    %v1484 = vmul.f32 %v842, %v1482
    %v1485 = vmul.f32 %v849, %v1482
    %v1486 = vadd.f32 %v1478, %v1483
    %v1487 = vadd.f32 %v1479, %v1484
    %v1488 = vadd.f32 %v1480, %v1485
    %s1489 = sld [smem:[#allocation4 + $0x43]]
    %v1490 = vstv %s1489
    %v1491 = vmul.f32 %v848, %v1490
    %v1492 = vmul.f32 %v842, %v1490
    %v1493 = vmul.f32 %v849, %v1490
    %1497 = vrot.lane.b32.xlu0 %v1491, 1
    %v1498 = vpop.permute.xlu0 %1497
    %1499 = vrot.lane.b32.xlu0 %v1492, 1
    %v1500 = vpop.permute.xlu0 %1499
    %1501 = vrot.lane.b32.xlu0 %v1493, 1
    %v1502 = vpop.permute.xlu0 %1501
    %v1506 = vadd.f32 %v1486, %v1498
    %v1507 = vadd.f32 %v1487, %v1500
    %v1508 = vadd.f32 %v1488, %v1502
    %s1509 = sld [smem:[#allocation4 + $0x49]]
    %v1510 = vstv %s1509
    %v1511 = vmul.f32 %v848, %v1510
    %v1512 = vmul.f32 %v842, %v1510
    %v1513 = vmul.f32 %v849, %v1510
    %v1517 = vrot.slane %v1511, 7
    %v1518 = vrot.slane %v1512, 7
    %v1519 = vsel %vm210, %v1517, %v1518
    %v1520 = vrot.slane %v1513, 7
    %v1521 = vsel %vm210, %v1518, %v1520
    %v1525 = vadd.f32 %v1506, %v1517
    %v1526 = vadd.f32 %v1507, %v1519
    %v1527 = vadd.f32 %v1508, %v1521
    %s1528 = sld [smem:[#allocation4 + $0x4b]]
    %v1529 = vstv %s1528
    %v1530 = vmul.f32 %v848, %v1529
    %v1531 = vmul.f32 %v842, %v1529
    %v1532 = vmul.f32 %v849, %v1529
    %v1536 = vrot.slane %v1530, 7
    %v1537 = vrot.slane %v1531, 7
    %v1538 = vsel %vm210, %v1536, %v1537
    %v1539 = vrot.slane %v1532, 7
    %v1540 = vsel %vm210, %v1537, %v1539
    %1541 = vrot.lane.b32.xlu0 %v1536, 1
    %v1542 = vpop.permute.xlu0 %1541
    %1543 = vrot.lane.b32.xlu0 %v1538, 1
    %v1544 = vpop.permute.xlu0 %1543
    %1545 = vrot.lane.b32.xlu0 %v1540, 1
    %v1546 = vpop.permute.xlu0 %1545
    %v1550 = vadd.f32 %v1525, %v1542
    %v1551 = vadd.f32 %v1526, %v1544
    %v1552 = vadd.f32 %v1527, %v1546
    %s1553 = sld [smem:[#allocation4]]
    %v1554 = vstv %s1553
    %v1555 = vmul.f32 %v808, %v1554
    %v1556 = vmul.f32 %v802, %v1554
    %v1557 = vmul.f32 %v810, %v1554
    %v1558 = vadd.f32 %v1555, 0.0
    %v1559 = vadd.f32 %v1556, 0.0
    %v1560 = vadd.f32 %v1557, 0.0
    %s1561 = sld [smem:[#allocation4 + $0x2]]
    %v1562 = vstv %s1561
    %v1563 = vmul.f32 %v808, %v1562
    %v1564 = vmul.f32 %v802, %v1562
    %v1565 = vmul.f32 %v810, %v1562
    %1569 = vrot.lane.b32.xlu0 %v1563, 1
    %v1570 = vpop.permute.xlu0 %1569
    %1571 = vrot.lane.b32.xlu0 %v1564, 1
    %v1572 = vpop.permute.xlu0 %1571
    %1573 = vrot.lane.b32.xlu0 %v1565, 1
    %v1574 = vpop.permute.xlu0 %1573
    %v1578 = vadd.f32 %v1558, %v1570
    %v1579 = vadd.f32 %v1559, %v1572
    %v1580 = vadd.f32 %v1560, %v1574
    %s1581 = sld [smem:[#allocation4 + $0x8]]
    %v1582 = vstv %s1581
    %v1583 = vmul.f32 %v808, %v1582
    %v1584 = vmul.f32 %v802, %v1582
    %v1585 = vmul.f32 %v810, %v1582
    %v1589 = vrot.slane %v1583, 7
    %v1590 = vrot.slane %v1584, 7
    %v1591 = vsel %vm210, %v1589, %v1590
    %v1592 = vrot.slane %v1585, 7
    %v1593 = vsel %vm210, %v1590, %v1592
    %v1597 = vadd.f32 %v1578, %v1589
    %v1598 = vadd.f32 %v1579, %v1591
    %v1599 = vadd.f32 %v1580, %v1593
    %s1600 = sld [smem:[#allocation4 + $0xa]]
    %v1601 = vstv %s1600
    %v1602 = vmul.f32 %v808, %v1601
    %v1603 = vmul.f32 %v802, %v1601
    %v1604 = vmul.f32 %v810, %v1601
    %v1608 = vrot.slane %v1602, 7
    %v1609 = vrot.slane %v1603, 7
    %v1610 = vsel %vm210, %v1608, %v1609
    %v1611 = vrot.slane %v1604, 7
    %v1612 = vsel %vm210, %v1609, %v1611
    %1613 = vrot.lane.b32.xlu0 %v1608, 1
    %v1614 = vpop.permute.xlu0 %1613
    %1615 = vrot.lane.b32.xlu0 %v1610, 1
    %v1616 = vpop.permute.xlu0 %1615
    %1617 = vrot.lane.b32.xlu0 %v1612, 1
    %v1618 = vpop.permute.xlu0 %1617
    %v1622 = vadd.f32 %v1597, %v1614
    %v1623 = vadd.f32 %v1598, %v1616
    %v1624 = vadd.f32 %v1599, %v1618
    %s1625 = sld [smem:[#allocation4 + $0x40]]
    %v1626 = vstv %s1625
    %v1627 = vmul.f32 %v848, %v1626
    %v1628 = vmul.f32 %v842, %v1626
    %v1629 = vmul.f32 %v849, %v1626
    %v1630 = vadd.f32 %v1622, %v1627
    %v1631 = vadd.f32 %v1623, %v1628
    %v1632 = vadd.f32 %v1624, %v1629
    %s1633 = sld [smem:[#allocation4 + $0x42]]
    %v1634 = vstv %s1633
    %v1635 = vmul.f32 %v848, %v1634
    %v1636 = vmul.f32 %v842, %v1634
    %v1637 = vmul.f32 %v849, %v1634
    %1641 = vrot.lane.b32.xlu0 %v1635, 1
    %v1642 = vpop.permute.xlu0 %1641
    %1643 = vrot.lane.b32.xlu0 %v1636, 1
    %v1644 = vpop.permute.xlu0 %1643
    %1645 = vrot.lane.b32.xlu0 %v1637, 1
    %v1646 = vpop.permute.xlu0 %1645
    %v1650 = vadd.f32 %v1630, %v1642
    %v1651 = vadd.f32 %v1631, %v1644
    %v1652 = vadd.f32 %v1632, %v1646
    %s1653 = sld [smem:[#allocation4 + $0x48]]
    %v1654 = vstv %s1653
    %v1655 = vmul.f32 %v848, %v1654
    %v1656 = vmul.f32 %v842, %v1654
    %v1657 = vmul.f32 %v849, %v1654
    %v1661 = vrot.slane %v1655, 7
    %v1662 = vrot.slane %v1656, 7
    %v1663 = vsel %vm210, %v1661, %v1662
    %v1664 = vrot.slane %v1657, 7
    %v1665 = vsel %vm210, %v1662, %v1664
    %v1669 = vadd.f32 %v1650, %v1661
    %v1670 = vadd.f32 %v1651, %v1663
    %v1671 = vadd.f32 %v1652, %v1665
    %s1672 = sld [smem:[#allocation4 + $0x4a]]
    %v1673 = vstv %s1672
    %v1674 = vmul.f32 %v848, %v1673
    %v1675 = vmul.f32 %v842, %v1673
    %v1676 = vmul.f32 %v849, %v1673
    %v1680 = vrot.slane %v1674, 7
    %v1681 = vrot.slane %v1675, 7
    %v1682 = vsel %vm210, %v1680, %v1681
    %v1683 = vrot.slane %v1676, 7
    %v1684 = vsel %vm210, %v1681, %v1683
    %1685 = vrot.lane.b32.xlu0 %v1680, 1
    %v1686 = vpop.permute.xlu0 %1685
    %1687 = vrot.lane.b32.xlu0 %v1682, 1
    %v1688 = vpop.permute.xlu0 %1687
    %1689 = vrot.lane.b32.xlu0 %v1684, 1
    %v1690 = vpop.permute.xlu0 %1689
    %v1694 = vadd.f32 %v1669, %v1686
    %v1695 = vadd.f32 %v1670, %v1688
    %v1696 = vadd.f32 %v1671, %v1690
    %vm1700 = vcmask 1045504
    %v1701 = vrot.slane %v1694, 2
    %v1702 = vrot.slane %v1695, 2
    %v1703 = vsel %vm1700, %v1701, %v1702
    %v1704 = vrot.slane %v1696, 2
    %v1705 = vsel %vm1700, %v1702, %v1704
    %1706 = vrot.lane.b32.xlu0 %v1703, 126
    %v1707 = vpop.permute.xlu0 %1706
    %1708 = vrot.lane.b32.xlu0 %v1705, 126
    %v1709 = vpop.permute.xlu0 %1708
    %1710 = vrot.lane.b32.xlu0 %v1704, 126
    %v1711 = vpop.permute.xlu0 %1710
    %v1712 = vsel %vm52, %v1707, 0
    %v1714 = vsel %vm52, %v1709, 0
    %v1716 = vsel %vm52, %v1711, 0
    %1718 = vmatprep.subr.mxu0 0.0
    %1719 = vmatpush1.msra.mxu0 %v877
    %1720 = vmatprep.subr.mxu0 0.0
    %1721 = vmatpush1.msra.mxu0 %v878
    %1722 = vmatprep.subr.mxu0 0.0
    %1723 = vmatpush1.msra.mxu0 %v1224
    %1724 = vmatprep.subr.mxu0 0.0
    %1725 = vmatpush1.msra.mxu0 0.0
    %1726 = vmatprep.subr.mxu0 0.0
    %1727 = vmatpush1.msra.mxu0 0.0
    %1728 = vmatprep.subr.mxu0 0.0
    %1729 = vmatpush1.msra.mxu0 0.0
    %1730 = vmatprep.subr.mxu0 0.0
    %1731 = vmatpush1.msra.mxu0 0.0
    %1732 = vmatprep.subr.mxu0 0.0
    %1733 = vmatpush1.msra.mxu0 0.0
    %1734 = vmatprep.subr.mxu0 0.0
    %1735 = vmatpush1.msra.mxu0 0.0
    %1736 = vmatprep.subr.mxu0 0.0
    %1737 = vmatpush1.msra.mxu0 0.0
    %1738 = vmatprep.subr.mxu0 0.0
    %1739 = vmatpush1.msra.mxu0 0.0
    %1740 = vmatprep.subr.mxu0 0.0
    %1741 = vmatpush1.msra.mxu0 0.0
    %1742 = vmatprep.subr.mxu0 0.0
    %1743 = vmatpush1.msra.mxu0 0.0
    %1744 = vmatprep.subr.mxu0 0.0
    %1745 = vmatpush1.msra.mxu0 0.0
    %1746 = vmatprep.subr.mxu0 0.0
    %1747 = vmatpush1.msra.mxu0 0.0
    %1748 = vmatprep.subr.mxu0 0.0
    %1749 = vmatpush1.msra.mxu0 0.0
    %1750 = vmatprep.subr.mxu0 0.0
    %1751 = vmatpush1.msra.mxu0 0.0
    %1752 = vmatprep.subr.mxu0 0.0
    %1753 = vmatpush1.msra.mxu0 0.0
    %1754 = vmatprep.subr.mxu0 0.0
    %1755 = vmatpush1.msra.mxu0 0.0
    %1756 = vmatprep.subr.mxu0 0.0
    %1757 = vmatpush1.msra.mxu0 0.0
    %1758 = vmatprep.subr.mxu0 0.0
    %1759 = vmatpush1.msra.mxu0 0.0
    %1760 = vmatprep.subr.mxu0 0.0
    %1761 = vmatpush1.msra.mxu0 0.0
    %1762 = vmatprep.subr.mxu0 0.0
    %1763 = vmatpush1.msra.mxu0 0.0
    %1764 = vmatprep.subr.mxu0 0.0
    %1765 = vmatpush1.msra.mxu0 0.0
    %1766 = vmatprep.subr.mxu0 0.0
    %1767 = vmatpush1.msra.mxu0 0.0
    %1768 = vmatprep.subr.mxu0 0.0
    %1769 = vmatpush1.msra.mxu0 0.0
    %1770 = vmatprep.subr.mxu0 0.0
    %1771 = vmatpush1.msra.mxu0 0.0
    %1772 = vmatprep.subr.mxu0 0.0
    %1773 = vmatpush1.msra.mxu0 0.0
    %1774 = vmatprep.subr.mxu0 0.0
    %1775 = vmatpush1.msra.mxu0 0.0
    %1776 = vmatprep.subr.mxu0 0.0
    %1777 = vmatpush1.msra.mxu0 0.0
    %1778 = vmatprep.subr.mxu0 0.0
    %1779 = vmatpush1.msra.mxu0 0.0
    %1780 = vmatprep.subr.mxu0 0.0
    %1781 = vmatpush1.msra.mxu0 0.0
    %1782 = vmatprep.mubr.f32.mxu0 0.0
    %1783 = vmatmul.mubr.f32.gmra.mrb[0].mxu0 %v1712
    %v1784 = vpop.f32.mrb[0].mxu0
    %v1785 = vadd.f32 0.0, %v1784
    %v1786 = vpop.f32.mrb[0].mxu0
    %1787 = vmatprep.mubr.f32.mxu0 0.0
    %1788 = vmatmul.mubr.f32.gmra.mrb[0].mxu0 %v1714
    %v1789 = vpop.f32.mrb[0].mxu0
    %v1790 = vadd.f32 0.0, %v1789
    %v1791 = vpop.f32.mrb[0].mxu0
    %1792 = vmatprep.mubr.f32.mxu0 0.0
    %1793 = vmatmul.mubr.f32.gmra.mrb[0].mxu0 %v1716
    %v1794 = vpop.f32.mrb[0].mxu0
    %v1795 = vadd.f32 0.0, %v1794
    %v1796 = vpop.f32.mrb[0].mxu0
    %1797 = vdwg.mxu0
    %v1801 = vrot.slane %v1550, 2
    %v1802 = vrot.slane %v1551, 2
    %v1803 = vsel %vm1700, %v1801, %v1802
    %v1804 = vrot.slane %v1552, 2
    %v1805 = vsel %vm1700, %v1802, %v1804
    %1806 = vrot.lane.b32.xlu0 %v1803, 127
    %v1807 = vpop.permute.xlu0 %1806
    %1808 = vrot.lane.b32.xlu0 %v1805, 127
    %v1809 = vpop.permute.xlu0 %1808
    %1810 = vrot.lane.b32.xlu0 %v1804, 127
    %v1811 = vpop.permute.xlu0 %1810
    %v1812 = vsel %vm52, %v1807, 0
    %v1814 = vsel %vm52, %v1809, 0
    %v1816 = vsel %vm52, %v1811, 0
    %1818 = vmatprep.subr.mxu0 0.0
    %1819 = vmatpush1.msra.mxu0 %v865
    %1820 = vmatprep.subr.mxu0 0.0
    %1821 = vmatpush1.msra.mxu0 %v866
    %1822 = vmatprep.subr.mxu0 0.0
    %1823 = vmatpush1.msra.mxu0 %v1327
    %1824 = vmatprep.subr.mxu0 0.0
    %1825 = vmatpush1.msra.mxu0 0.0
    %1826 = vmatprep.subr.mxu0 0.0
    %1827 = vmatpush1.msra.mxu0 0.0
    %1828 = vmatprep.subr.mxu0 0.0
    %1829 = vmatpush1.msra.mxu0 0.0
    %1830 = vmatprep.subr.mxu0 0.0
    %1831 = vmatpush1.msra.mxu0 0.0
    %1832 = vmatprep.subr.mxu0 0.0
    %1833 = vmatpush1.msra.mxu0 0.0
    %1834 = vmatprep.subr.mxu0 0.0
    %1835 = vmatpush1.msra.mxu0 0.0
    %1836 = vmatprep.subr.mxu0 0.0
    %1837 = vmatpush1.msra.mxu0 0.0
    %1838 = vmatprep.subr.mxu0 0.0
    %1839 = vmatpush1.msra.mxu0 0.0
    %1840 = vmatprep.subr.mxu0 0.0
    %1841 = vmatpush1.msra.mxu0 0.0
    %1842 = vmatprep.subr.mxu0 0.0
    %1843 = vmatpush1.msra.mxu0 0.0
    %1844 = vmatprep.subr.mxu0 0.0
    %1845 = vmatpush1.msra.mxu0 0.0
    %1846 = vmatprep.subr.mxu0 0.0
    %1847 = vmatpush1.msra.mxu0 0.0
    %1848 = vmatprep.subr.mxu0 0.0
    %1849 = vmatpush1.msra.mxu0 0.0
    %1850 = vmatprep.subr.mxu0 0.0
    %1851 = vmatpush1.msra.mxu0 0.0
    %1852 = vmatprep.subr.mxu0 0.0
    %1853 = vmatpush1.msra.mxu0 0.0
    %1854 = vmatprep.subr.mxu0 0.0
    %1855 = vmatpush1.msra.mxu0 0.0
    %1856 = vmatprep.subr.mxu0 0.0
    %1857 = vmatpush1.msra.mxu0 0.0
    %1858 = vmatprep.subr.mxu0 0.0
    %1859 = vmatpush1.msra.mxu0 0.0
    %1860 = vmatprep.subr.mxu0 0.0
    %1861 = vmatpush1.msra.mxu0 0.0
    %1862 = vmatprep.subr.mxu0 0.0
    %1863 = vmatpush1.msra.mxu0 0.0
    %1864 = vmatprep.subr.mxu0 0.0
    %1865 = vmatpush1.msra.mxu0 0.0
    %1866 = vmatprep.subr.mxu0 0.0
    %1867 = vmatpush1.msra.mxu0 0.0
    %1868 = vmatprep.subr.mxu0 0.0
    %1869 = vmatpush1.msra.mxu0 0.0
    %1870 = vmatprep.subr.mxu0 0.0
    %1871 = vmatpush1.msra.mxu0 0.0
    %1872 = vmatprep.subr.mxu0 0.0
    %1873 = vmatpush1.msra.mxu0 0.0
    %1874 = vmatprep.subr.mxu0 0.0
    %1875 = vmatpush1.msra.mxu0 0.0
    %1876 = vmatprep.subr.mxu0 0.0
    %1877 = vmatpush1.msra.mxu0 0.0
    %1878 = vmatprep.subr.mxu0 0.0
    %1879 = vmatpush1.msra.mxu0 0.0
    %1880 = vmatprep.subr.mxu0 0.0
    %1881 = vmatpush1.msra.mxu0 0.0
    %1882 = vmatprep.mubr.f32.mxu0 0.0
    %1883 = vmatmul.mubr.f32.gmra.mrb[0].mxu0 %v1812
    %v1884 = vpop.f32.mrb[0].mxu0
    %v1885 = vadd.f32 %v1785, %v1884
    %v1886 = vpop.f32.mrb[0].mxu0
    %1887 = vmatprep.mubr.f32.mxu0 0.0
    %1888 = vmatmul.mubr.f32.gmra.mrb[0].mxu0 %v1814
    %v1889 = vpop.f32.mrb[0].mxu0
    %v1890 = vadd.f32 %v1790, %v1889
    %v1891 = vpop.f32.mrb[0].mxu0
    %1892 = vmatprep.mubr.f32.mxu0 0.0
    %1893 = vmatmul.mubr.f32.gmra.mrb[0].mxu0 %v1816
    %v1894 = vpop.f32.mrb[0].mxu0
    %v1895 = vadd.f32 %v1795, %v1894
    %v1896 = vpop.f32.mrb[0].mxu0
    %1897 = vdwg.mxu0
    %v1899 = vsel %vm52, %v909, 0
    %v1902 = vsel %vm52, %v910, 0
    %v1905 = vsel %vm52, %v911, 0
    %v1908 = vsel %vm52, %v912, 0
    %v1911 = vsel %vm52, %v913, 0
    %v1914 = vsel %vm57, %v1895, 0
    %1916 = vmatprep.subr.mxu0 0.0
    %1917 = vmatpush1.msra.mxu0 %v1885
    %1918 = vmatprep.subr.mxu0 0.0
    %1919 = vmatpush1.msra.mxu0 %v1890
    %1920 = vmatprep.subr.mxu0 0.0
    %1921 = vmatpush1.msra.mxu0 %v1914
    %1922 = vmatprep.subr.mxu0 0.0
    %1923 = vmatpush1.msra.mxu0 0.0
    %1924 = vmatprep.subr.mxu0 0.0
    %1925 = vmatpush1.msra.mxu0 0.0
    %1926 = vmatprep.subr.mxu0 0.0
    %1927 = vmatpush1.msra.mxu0 0.0
    %1928 = vmatprep.subr.mxu0 0.0
    %1929 = vmatpush1.msra.mxu0 0.0
    %1930 = vmatprep.subr.mxu0 0.0
    %1931 = vmatpush1.msra.mxu0 0.0
    %1932 = vmatprep.subr.mxu0 0.0
    %1933 = vmatpush1.msra.mxu0 0.0
    %1934 = vmatprep.subr.mxu0 0.0
    %1935 = vmatpush1.msra.mxu0 0.0
    %1936 = vmatprep.subr.mxu0 0.0
    %1937 = vmatpush1.msra.mxu0 0.0
    %1938 = vmatprep.subr.mxu0 0.0
    %1939 = vmatpush1.msra.mxu0 0.0
    %1940 = vmatprep.subr.mxu0 0.0
    %1941 = vmatpush1.msra.mxu0 0.0
    %1942 = vmatprep.subr.mxu0 0.0
    %1943 = vmatpush1.msra.mxu0 0.0
    %1944 = vmatprep.subr.mxu0 0.0
    %1945 = vmatpush1.msra.mxu0 0.0
    %1946 = vmatprep.subr.mxu0 0.0
    %1947 = vmatpush1.msra.mxu0 0.0
    %1948 = vmatprep.subr.mxu0 0.0
    %1949 = vmatpush1.msra.mxu0 0.0
    %1950 = vmatprep.subr.mxu0 0.0
    %1951 = vmatpush1.msra.mxu0 0.0
    %1952 = vmatprep.subr.mxu0 0.0
    %1953 = vmatpush1.msra.mxu0 0.0
    %1954 = vmatprep.subr.mxu0 0.0
    %1955 = vmatpush1.msra.mxu0 0.0
    %1956 = vmatprep.subr.mxu0 0.0
    %1957 = vmatpush1.msra.mxu0 0.0
    %1958 = vmatprep.subr.mxu0 0.0
    %1959 = vmatpush1.msra.mxu0 0.0
    %1960 = vmatprep.subr.mxu0 0.0
    %1961 = vmatpush1.msra.mxu0 0.0
    %1962 = vmatprep.subr.mxu0 0.0
    %1963 = vmatpush1.msra.mxu0 0.0
    %1964 = vmatprep.subr.mxu0 0.0
    %1965 = vmatpush1.msra.mxu0 0.0
    %1966 = vmatprep.subr.mxu0 0.0
    %1967 = vmatpush1.msra.mxu0 0.0
    %1968 = vmatprep.subr.mxu0 0.0
    %1969 = vmatpush1.msra.mxu0 0.0
    %1970 = vmatprep.subr.mxu0 0.0
    %1971 = vmatpush1.msra.mxu0 0.0
    %1972 = vmatprep.subr.mxu0 0.0
    %1973 = vmatpush1.msra.mxu0 0.0
    %1974 = vmatprep.subr.mxu0 0.0
    %1975 = vmatpush1.msra.mxu0 0.0
    %1976 = vmatprep.subr.mxu0 0.0
    %1977 = vmatpush1.msra.mxu0 0.0
    %1978 = vmatprep.subr.mxu0 0.0
    %1979 = vmatpush1.msra.mxu0 0.0
    %1980 = vmatprep.mubr.f32.mxu0 0.0
    %1981 = vmatmul.mubr.f32.gmra.mrb[0].mxu0 %v1899
    %v1982 = vpop.f32.mrb[0].mxu0
    %v1983 = vadd.f32 0.0, %v1982
    %v1984 = vpop.f32.mrb[0].mxu0
    %1985 = vmatprep.mubr.f32.mxu0 0.0
    %1986 = vmatmul.mubr.f32.gmra.mrb[0].mxu0 %v1902
    %v1987 = vpop.f32.mrb[0].mxu0
    %v1988 = vadd.f32 0.0, %v1987
    %v1989 = vpop.f32.mrb[0].mxu0
    %1990 = vmatprep.mubr.f32.mxu0 0.0
    %1991 = vmatmul.mubr.f32.gmra.mrb[0].mxu0 %v1905
    %v1992 = vpop.f32.mrb[0].mxu0
    %v1993 = vadd.f32 0.0, %v1992
    %v1994 = vpop.f32.mrb[0].mxu0
    %1995 = vmatprep.mubr.f32.mxu0 0.0
    %1996 = vmatmul.mubr.f32.gmra.mrb[0].mxu0 %v1908
    %v1997 = vpop.f32.mrb[0].mxu0
    %v1998 = vadd.f32 0.0, %v1997
    %v1999 = vpop.f32.mrb[0].mxu0
    %2000 = vmatprep.mubr.f32.mxu0 0.0
    %2001 = vmatmul.mubr.f32.gmra.mrb[0].mxu0 %v1911
    %v2002 = vpop.f32.mrb[0].mxu0
    %v2003 = vadd.f32 0.0, %v2002
    %v2004 = vpop.f32.mrb[0].mxu0
    %2005 = vdwg.mxu0
    %v2007 = vsel %vm52, %v893, 0
    %v2010 = vsel %vm52, %v894, 0
    %v2013 = vsel %vm52, %v895, 0
    %v2016 = vsel %vm52, %v896, 0
    %v2019 = vsel %vm52, %v897, 0
    %v2022 = vsel %vm57, %v1406, 0
    %2024 = vmatprep.subr.mxu0 0.0
    %2025 = vmatpush1.msra.mxu0 %v1396
    %2026 = vmatprep.subr.mxu0 0.0
    %2027 = vmatpush1.msra.mxu0 %v1401
    %2028 = vmatprep.subr.mxu0 0.0
    %2029 = vmatpush1.msra.mxu0 %v2022
    %2030 = vmatprep.subr.mxu0 0.0
    %2031 = vmatpush1.msra.mxu0 0.0
    %2032 = vmatprep.subr.mxu0 0.0
    %2033 = vmatpush1.msra.mxu0 0.0
    %2034 = vmatprep.subr.mxu0 0.0
    %2035 = vmatpush1.msra.mxu0 0.0
    %2036 = vmatprep.subr.mxu0 0.0
    %2037 = vmatpush1.msra.mxu0 0.0
    %2038 = vmatprep.subr.mxu0 0.0
    %2039 = vmatpush1.msra.mxu0 0.0
    %2040 = vmatprep.subr.mxu0 0.0
    %2041 = vmatpush1.msra.mxu0 0.0
    %2042 = vmatprep.subr.mxu0 0.0
    %2043 = vmatpush1.msra.mxu0 0.0
    %2044 = vmatprep.subr.mxu0 0.0
    %2045 = vmatpush1.msra.mxu0 0.0
    %2046 = vmatprep.subr.mxu0 0.0
    %2047 = vmatpush1.msra.mxu0 0.0
    %2048 = vmatprep.subr.mxu0 0.0
    %2049 = vmatpush1.msra.mxu0 0.0
    %2050 = vmatprep.subr.mxu0 0.0
    %2051 = vmatpush1.msra.mxu0 0.0
    %2052 = vmatprep.subr.mxu0 0.0
    %2053 = vmatpush1.msra.mxu0 0.0
    %2054 = vmatprep.subr.mxu0 0.0
    %2055 = vmatpush1.msra.mxu0 0.0
    %2056 = vmatprep.subr.mxu0 0.0
    %2057 = vmatpush1.msra.mxu0 0.0
    %2058 = vmatprep.subr.mxu0 0.0
    %2059 = vmatpush1.msra.mxu0 0.0
    %2060 = vmatprep.subr.mxu0 0.0
    %2061 = vmatpush1.msra.mxu0 0.0
    %2062 = vmatprep.subr.mxu0 0.0
    %2063 = vmatpush1.msra.mxu0 0.0
    %2064 = vmatprep.subr.mxu0 0.0
    %2065 = vmatpush1.msra.mxu0 0.0
    %2066 = vmatprep.subr.mxu0 0.0
    %2067 = vmatpush1.msra.mxu0 0.0
    %2068 = vmatprep.subr.mxu0 0.0
    %2069 = vmatpush1.msra.mxu0 0.0
    %2070 = vmatprep.subr.mxu0 0.0
    %2071 = vmatpush1.msra.mxu0 0.0
    %2072 = vmatprep.subr.mxu0 0.0
    %2073 = vmatpush1.msra.mxu0 0.0
    %2074 = vmatprep.subr.mxu0 0.0
    %2075 = vmatpush1.msra.mxu0 0.0
    %2076 = vmatprep.subr.mxu0 0.0
    %2077 = vmatpush1.msra.mxu0 0.0
    %2078 = vmatprep.subr.mxu0 0.0
    %2079 = vmatpush1.msra.mxu0 0.0
    %2080 = vmatprep.subr.mxu0 0.0
    %2081 = vmatpush1.msra.mxu0 0.0
    %2082 = vmatprep.subr.mxu0 0.0
    %2083 = vmatpush1.msra.mxu0 0.0
    %2084 = vmatprep.subr.mxu0 0.0
    %2085 = vmatpush1.msra.mxu0 0.0
    %2086 = vmatprep.subr.mxu0 0.0
    %2087 = vmatpush1.msra.mxu0 0.0
    %2088 = vmatprep.mubr.f32.mxu0 0.0
    %2089 = vmatmul.mubr.f32.gmra.mrb[0].mxu0 %v2007
    %v2090 = vpop.f32.mrb[0].mxu0
    %v2091 = vadd.f32 %v1983, %v2090
    %v2092 = vpop.f32.mrb[0].mxu0
    %2093 = vmatprep.mubr.f32.mxu0 0.0
    %2094 = vmatmul.mubr.f32.gmra.mrb[0].mxu0 %v2010
    %v2095 = vpop.f32.mrb[0].mxu0
    %v2096 = vadd.f32 %v1988, %v2095
    %v2097 = vpop.f32.mrb[0].mxu0
    %2098 = vmatprep.mubr.f32.mxu0 0.0
    %2099 = vmatmul.mubr.f32.gmra.mrb[0].mxu0 %v2013
    %v2100 = vpop.f32.mrb[0].mxu0
    %v2101 = vadd.f32 %v1993, %v2100
    %v2102 = vpop.f32.mrb[0].mxu0
    %2103 = vmatprep.mubr.f32.mxu0 0.0
    %2104 = vmatmul.mubr.f32.gmra.mrb[0].mxu0 %v2016
    %v2105 = vpop.f32.mrb[0].mxu0
    %v2106 = vadd.f32 %v1998, %v2105
    %v2107 = vpop.f32.mrb[0].mxu0
    %2108 = vmatprep.mubr.f32.mxu0 0.0
    %2109 = vmatmul.mubr.f32.gmra.mrb[0].mxu0 %v2019
    %v2110 = vpop.f32.mrb[0].mxu0
    %v2111 = vadd.f32 %v2003, %v2110
    %v2112 = vpop.f32.mrb[0].mxu0
    %2113 = vdwg.mxu0
    %v2114 = vmax.f32 %v2091, 0.0
    %v2115 = vmax.f32 %v2096, 0.0
    %v2116 = vmax.f32 %v2101, 0.0
    %v2117 = vmax.f32 %v2106, 0.0
    %v2118 = vmax.f32 %v2111, 0.0
    %vm2119 = vcmask 310272
    %2120 = vst.msk [vmem:[%s3] sm:$0xff] %vm2119, %v2114
    %2121 = vst.msk [vmem:[%s3 + $0x8] sm:$0xff] %vm2119, %v2115
    %2122 = vst.msk [vmem:[%s3 + $0x10] sm:$0xff] %vm2119, %v2116
    %2123 = vst.msk [vmem:[%s3 + $0x18] sm:$0xff] %vm2119, %v2117
    %vm2124 = vcmask 308224
    %2125 = vst.msk [vmem:[%s3 + $0x20] sm:$0x3f] %vm2124, %v2118
    %s2126 = sld [smem:[#allocation4 + $0x15]]
    %v2127 = vstv %s2126
    %v2128 = vmul.f32 %v808, %v2127
    %v2129 = vmul.f32 %v802, %v2127
    %v2130 = vmul.f32 %v810, %v2127
    %v2131 = vadd.f32 %v2128, 0.0
    %v2132 = vadd.f32 %v2129, 0.0
    %v2133 = vadd.f32 %v2130, 0.0
    %s2134 = sld [smem:[#allocation4 + $0x17]]
    %v2135 = vstv %s2134
    %v2136 = vmul.f32 %v808, %v2135
    %v2137 = vmul.f32 %v802, %v2135
    %v2138 = vmul.f32 %v810, %v2135
    %2142 = vrot.lane.b32.xlu0 %v2136, 1
    %v2143 = vpop.permute.xlu0 %2142
    %2144 = vrot.lane.b32.xlu0 %v2137, 1
    %v2145 = vpop.permute.xlu0 %2144
    %2146 = vrot.lane.b32.xlu0 %v2138, 1
    %v2147 = vpop.permute.xlu0 %2146
    %v2151 = vadd.f32 %v2131, %v2143
    %v2152 = vadd.f32 %v2132, %v2145
    %v2153 = vadd.f32 %v2133, %v2147
    %s2154 = sld [smem:[#allocation4 + $0x1d]]
    %v2155 = vstv %s2154
    %v2156 = vmul.f32 %v808, %v2155
    %v2157 = vmul.f32 %v802, %v2155
    %v2158 = vmul.f32 %v810, %v2155
    %v2162 = vrot.slane %v2156, 7
    %v2163 = vrot.slane %v2157, 7
    %v2164 = vsel %vm210, %v2162, %v2163
    %v2165 = vrot.slane %v2158, 7
    %v2166 = vsel %vm210, %v2163, %v2165
    %v2170 = vadd.f32 %v2151, %v2162
    %v2171 = vadd.f32 %v2152, %v2164
    %v2172 = vadd.f32 %v2153, %v2166
    %s2173 = sld [smem:[#allocation4 + $0x1f]]
    %v2174 = vstv %s2173
    %v2175 = vmul.f32 %v808, %v2174
    %v2176 = vmul.f32 %v802, %v2174
    %v2177 = vmul.f32 %v810, %v2174
    %v2181 = vrot.slane %v2175, 7
    %v2182 = vrot.slane %v2176, 7
    %v2183 = vsel %vm210, %v2181, %v2182
    %v2184 = vrot.slane %v2177, 7
    %v2185 = vsel %vm210, %v2182, %v2184
    %2186 = vrot.lane.b32.xlu0 %v2181, 1
    %v2187 = vpop.permute.xlu0 %2186
    %2188 = vrot.lane.b32.xlu0 %v2183, 1
    %v2189 = vpop.permute.xlu0 %2188
    %2190 = vrot.lane.b32.xlu0 %v2185, 1
    %v2191 = vpop.permute.xlu0 %2190
    %v2195 = vadd.f32 %v2170, %v2187
    %v2196 = vadd.f32 %v2171, %v2189
    %v2197 = vadd.f32 %v2172, %v2191
    %s2198 = sld [smem:[#allocation4 + $0x55]]
    %v2199 = vstv %s2198
    %v2200 = vmul.f32 %v848, %v2199
    %v2201 = vmul.f32 %v842, %v2199
    %v2202 = vmul.f32 %v849, %v2199
    %v2203 = vadd.f32 %v2195, %v2200
    %v2204 = vadd.f32 %v2196, %v2201
    %v2205 = vadd.f32 %v2197, %v2202
    %s2206 = sld [smem:[#allocation4 + $0x57]]
    %v2207 = vstv %s2206
    %v2208 = vmul.f32 %v848, %v2207
    %v2209 = vmul.f32 %v842, %v2207
    %v2210 = vmul.f32 %v849, %v2207
    %2214 = vrot.lane.b32.xlu0 %v2208, 1
    %v2215 = vpop.permute.xlu0 %2214
    %2216 = vrot.lane.b32.xlu0 %v2209, 1
    %v2217 = vpop.permute.xlu0 %2216
    %2218 = vrot.lane.b32.xlu0 %v2210, 1
    %v2219 = vpop.permute.xlu0 %2218
    %v2223 = vadd.f32 %v2203, %v2215
    %v2224 = vadd.f32 %v2204, %v2217
    %v2225 = vadd.f32 %v2205, %v2219
    %s2226 = sld [smem:[#allocation4 + $0x5d]]
    %v2227 = vstv %s2226
    %v2228 = vmul.f32 %v848, %v2227
    %v2229 = vmul.f32 %v842, %v2227
    %v2230 = vmul.f32 %v849, %v2227
    %v2234 = vrot.slane %v2228, 7
    %v2235 = vrot.slane %v2229, 7
    %v2236 = vsel %vm210, %v2234, %v2235
    %v2237 = vrot.slane %v2230, 7
    %v2238 = vsel %vm210, %v2235, %v2237
    %v2242 = vadd.f32 %v2223, %v2234
    %v2243 = vadd.f32 %v2224, %v2236
    %v2244 = vadd.f32 %v2225, %v2238
    %s2245 = sld [smem:[#allocation4 + $0x5f]]
    %v2246 = vstv %s2245
    %v2247 = vmul.f32 %v848, %v2246
    %v2248 = vmul.f32 %v842, %v2246
    %v2249 = vmul.f32 %v849, %v2246
    %v2253 = vrot.slane %v2247, 7
    %v2254 = vrot.slane %v2248, 7
    %v2255 = vsel %vm210, %v2253, %v2254
    %v2256 = vrot.slane %v2249, 7
    %v2257 = vsel %vm210, %v2254, %v2256
    %2258 = vrot.lane.b32.xlu0 %v2253, 1
    %v2259 = vpop.permute.xlu0 %2258
    %2260 = vrot.lane.b32.xlu0 %v2255, 1
    %v2261 = vpop.permute.xlu0 %2260
    %2262 = vrot.lane.b32.xlu0 %v2257, 1
    %v2263 = vpop.permute.xlu0 %2262
    %v2267 = vadd.f32 %v2242, %v2259
    %v2268 = vadd.f32 %v2243, %v2261
    %v2269 = vadd.f32 %v2244, %v2263
    %s2270 = sld [smem:[#allocation4 + $0x14]]
    %v2271 = vstv %s2270
    %v2272 = vmul.f32 %v808, %v2271
    %v2273 = vmul.f32 %v802, %v2271
    %v2274 = vmul.f32 %v810, %v2271
    %v2275 = vadd.f32 %v2272, 0.0
    %v2276 = vadd.f32 %v2273, 0.0
    %v2277 = vadd.f32 %v2274, 0.0
    %s2278 = sld [smem:[#allocation4 + $0x16]]
    %v2279 = vstv %s2278
    %v2280 = vmul.f32 %v808, %v2279
    %v2281 = vmul.f32 %v802, %v2279
    %v2282 = vmul.f32 %v810, %v2279
    %2286 = vrot.lane.b32.xlu0 %v2280, 1
    %v2287 = vpop.permute.xlu0 %2286
    %2288 = vrot.lane.b32.xlu0 %v2281, 1
    %v2289 = vpop.permute.xlu0 %2288
    %2290 = vrot.lane.b32.xlu0 %v2282, 1
    %v2291 = vpop.permute.xlu0 %2290
    %v2295 = vadd.f32 %v2275, %v2287
    %v2296 = vadd.f32 %v2276, %v2289
    %v2297 = vadd.f32 %v2277, %v2291
    %s2298 = sld [smem:[#allocation4 + $0x1c]]
    %v2299 = vstv %s2298
    %v2300 = vmul.f32 %v808, %v2299
    %v2301 = vmul.f32 %v802, %v2299
    %v2302 = vmul.f32 %v810, %v2299
    %v2306 = vrot.slane %v2300, 7
    %v2307 = vrot.slane %v2301, 7
    %v2308 = vsel %vm210, %v2306, %v2307
    %v2309 = vrot.slane %v2302, 7
    %v2310 = vsel %vm210, %v2307, %v2309
    %v2314 = vadd.f32 %v2295, %v2306
    %v2315 = vadd.f32 %v2296, %v2308
    %v2316 = vadd.f32 %v2297, %v2310
    %s2317 = sld [smem:[#allocation4 + $0x1e]]
    %v2318 = vstv %s2317
    %v2319 = vmul.f32 %v808, %v2318
    %v2320 = vmul.f32 %v802, %v2318
    %v2321 = vmul.f32 %v810, %v2318
    %v2325 = vrot.slane %v2319, 7
    %v2326 = vrot.slane %v2320, 7
    %v2327 = vsel %vm210, %v2325, %v2326
    %v2328 = vrot.slane %v2321, 7
    %v2329 = vsel %vm210, %v2326, %v2328
    %2330 = vrot.lane.b32.xlu0 %v2325, 1
    %v2331 = vpop.permute.xlu0 %2330
    %2332 = vrot.lane.b32.xlu0 %v2327, 1
    %v2333 = vpop.permute.xlu0 %2332
    %2334 = vrot.lane.b32.xlu0 %v2329, 1
    %v2335 = vpop.permute.xlu0 %2334
    %v2339 = vadd.f32 %v2314, %v2331
    %v2340 = vadd.f32 %v2315, %v2333
    %v2341 = vadd.f32 %v2316, %v2335
    %s2342 = sld [smem:[#allocation4 + $0x54]]
    %v2343 = vstv %s2342
    %v2344 = vmul.f32 %v848, %v2343
    %v2345 = vmul.f32 %v842, %v2343
    %v2346 = vmul.f32 %v849, %v2343
    %v2347 = vadd.f32 %v2339, %v2344
    %v2348 = vadd.f32 %v2340, %v2345
    %v2349 = vadd.f32 %v2341, %v2346
    %s2350 = sld [smem:[#allocation4 + $0x56]]
    %v2351 = vstv %s2350
    %v2352 = vmul.f32 %v848, %v2351
    %v2353 = vmul.f32 %v842, %v2351
    %v2354 = vmul.f32 %v849, %v2351
    %2358 = vrot.lane.b32.xlu0 %v2352, 1
    %v2359 = vpop.permute.xlu0 %2358
    %2360 = vrot.lane.b32.xlu0 %v2353, 1
    %v2361 = vpop.permute.xlu0 %2360
    %2362 = vrot.lane.b32.xlu0 %v2354, 1
    %v2363 = vpop.permute.xlu0 %2362
    %v2367 = vadd.f32 %v2347, %v2359
    %v2368 = vadd.f32 %v2348, %v2361
    %v2369 = vadd.f32 %v2349, %v2363
    %s2370 = sld [smem:[#allocation4 + $0x5c]]
    %v2371 = vstv %s2370
    %v2372 = vmul.f32 %v848, %v2371
    %v2373 = vmul.f32 %v842, %v2371
    %v2374 = vmul.f32 %v849, %v2371
    %v2378 = vrot.slane %v2372, 7
    %v2379 = vrot.slane %v2373, 7
    %v2380 = vsel %vm210, %v2378, %v2379
    %v2381 = vrot.slane %v2374, 7
    %v2382 = vsel %vm210, %v2379, %v2381
    %v2386 = vadd.f32 %v2367, %v2378
    %v2387 = vadd.f32 %v2368, %v2380
    %v2388 = vadd.f32 %v2369, %v2382
    %s2389 = sld [smem:[#allocation4 + $0x5e]]
    %v2390 = vstv %s2389
    %v2391 = vmul.f32 %v848, %v2390
    %v2392 = vmul.f32 %v842, %v2390
    %v2393 = vmul.f32 %v849, %v2390
    %v2397 = vrot.slane %v2391, 7
    %v2398 = vrot.slane %v2392, 7
    %v2399 = vsel %vm210, %v2397, %v2398
    %v2400 = vrot.slane %v2393, 7
    %v2401 = vsel %vm210, %v2398, %v2400
    %2402 = vrot.lane.b32.xlu0 %v2397, 1
    %v2403 = vpop.permute.xlu0 %2402
    %2404 = vrot.lane.b32.xlu0 %v2399, 1
    %v2405 = vpop.permute.xlu0 %2404
    %2406 = vrot.lane.b32.xlu0 %v2401, 1
    %v2407 = vpop.permute.xlu0 %2406
    %v2411 = vadd.f32 %v2386, %v2403
    %v2412 = vadd.f32 %v2387, %v2405
    %v2413 = vadd.f32 %v2388, %v2407
    %v2417 = vrot.slane %v2411, 1
    %v2418 = vrot.slane %v2412, 1
    %v2419 = vsel %vm1205, %v2417, %v2418
    %v2420 = vrot.slane %v2413, 1
    %v2421 = vsel %vm1205, %v2418, %v2420
    %2422 = vrot.lane.b32.xlu0 %v2419, 126
    %v2423 = vpop.permute.xlu0 %2422
    %2424 = vrot.lane.b32.xlu0 %v2421, 126
    %v2425 = vpop.permute.xlu0 %2424
    %2426 = vrot.lane.b32.xlu0 %v2420, 126
    %v2427 = vpop.permute.xlu0 %2426
    %v2428 = vsel %vm52, %v2423, 0
    %v2430 = vsel %vm52, %v2425, 0
    %v2432 = vsel %vm52, %v2427, 0
    %2434 = vmatprep.subr.mxu0 0.0
    %2435 = vmatpush1.msra.mxu0 %v877
    %2436 = vmatprep.subr.mxu0 0.0
    %2437 = vmatpush1.msra.mxu0 %v878
    %2438 = vmatprep.subr.mxu0 0.0
    %2439 = vmatpush1.msra.mxu0 %v1224
    %2440 = vmatprep.subr.mxu0 0.0
    %2441 = vmatpush1.msra.mxu0 0.0
    %2442 = vmatprep.subr.mxu0 0.0
    %2443 = vmatpush1.msra.mxu0 0.0
    %2444 = vmatprep.subr.mxu0 0.0
    %2445 = vmatpush1.msra.mxu0 0.0
    %2446 = vmatprep.subr.mxu0 0.0
    %2447 = vmatpush1.msra.mxu0 0.0
    %2448 = vmatprep.subr.mxu0 0.0
    %2449 = vmatpush1.msra.mxu0 0.0
    %2450 = vmatprep.subr.mxu0 0.0
    %2451 = vmatpush1.msra.mxu0 0.0
    %2452 = vmatprep.subr.mxu0 0.0
    %2453 = vmatpush1.msra.mxu0 0.0
    %2454 = vmatprep.subr.mxu0 0.0
    %2455 = vmatpush1.msra.mxu0 0.0
    %2456 = vmatprep.subr.mxu0 0.0
    %2457 = vmatpush1.msra.mxu0 0.0
    %2458 = vmatprep.subr.mxu0 0.0
    %2459 = vmatpush1.msra.mxu0 0.0
    %2460 = vmatprep.subr.mxu0 0.0
    %2461 = vmatpush1.msra.mxu0 0.0
    %2462 = vmatprep.subr.mxu0 0.0
    %2463 = vmatpush1.msra.mxu0 0.0
    %2464 = vmatprep.subr.mxu0 0.0
    %2465 = vmatpush1.msra.mxu0 0.0
    %2466 = vmatprep.subr.mxu0 0.0
    %2467 = vmatpush1.msra.mxu0 0.0
    %2468 = vmatprep.subr.mxu0 0.0
    %2469 = vmatpush1.msra.mxu0 0.0
    %2470 = vmatprep.subr.mxu0 0.0
    %2471 = vmatpush1.msra.mxu0 0.0
    %2472 = vmatprep.subr.mxu0 0.0
    %2473 = vmatpush1.msra.mxu0 0.0
    %2474 = vmatprep.subr.mxu0 0.0
    %2475 = vmatpush1.msra.mxu0 0.0
    %2476 = vmatprep.subr.mxu0 0.0
    %2477 = vmatpush1.msra.mxu0 0.0
    %2478 = vmatprep.subr.mxu0 0.0
    %2479 = vmatpush1.msra.mxu0 0.0
    %2480 = vmatprep.subr.mxu0 0.0
    %2481 = vmatpush1.msra.mxu0 0.0
    %2482 = vmatprep.subr.mxu0 0.0
    %2483 = vmatpush1.msra.mxu0 0.0
    %2484 = vmatprep.subr.mxu0 0.0
    %2485 = vmatpush1.msra.mxu0 0.0
    %2486 = vmatprep.subr.mxu0 0.0
    %2487 = vmatpush1.msra.mxu0 0.0
    %2488 = vmatprep.subr.mxu0 0.0
    %2489 = vmatpush1.msra.mxu0 0.0
    %2490 = vmatprep.subr.mxu0 0.0
    %2491 = vmatpush1.msra.mxu0 0.0
    %2492 = vmatprep.subr.mxu0 0.0
    %2493 = vmatpush1.msra.mxu0 0.0
    %2494 = vmatprep.subr.mxu0 0.0
    %2495 = vmatpush1.msra.mxu0 0.0
    %2496 = vmatprep.subr.mxu0 0.0
    %2497 = vmatpush1.msra.mxu0 0.0
    %2498 = vmatprep.mubr.f32.mxu0 0.0
    %2499 = vmatmul.mubr.f32.gmra.mrb[0].mxu0 %v2428
    %v2500 = vpop.f32.mrb[0].mxu0
    %v2501 = vadd.f32 0.0, %v2500
    %v2502 = vpop.f32.mrb[0].mxu0
    %2503 = vmatprep.mubr.f32.mxu0 0.0
    %2504 = vmatmul.mubr.f32.gmra.mrb[0].mxu0 %v2430
    %v2505 = vpop.f32.mrb[0].mxu0
    %v2506 = vadd.f32 0.0, %v2505
    %v2507 = vpop.f32.mrb[0].mxu0
    %2508 = vmatprep.mubr.f32.mxu0 0.0
    %2509 = vmatmul.mubr.f32.gmra.mrb[0].mxu0 %v2432
    %v2510 = vpop.f32.mrb[0].mxu0
    %v2511 = vadd.f32 0.0, %v2510
    %v2512 = vpop.f32.mrb[0].mxu0
    %2513 = vdwg.mxu0
    %v2517 = vrot.slane %v2267, 1
    %v2518 = vrot.slane %v2268, 1
    %v2519 = vsel %vm1205, %v2517, %v2518
    %v2520 = vrot.slane %v2269, 1
    %v2521 = vsel %vm1205, %v2518, %v2520
    %2522 = vrot.lane.b32.xlu0 %v2519, 127
    %v2523 = vpop.permute.xlu0 %2522
    %2524 = vrot.lane.b32.xlu0 %v2521, 127
    %v2525 = vpop.permute.xlu0 %2524
    %2526 = vrot.lane.b32.xlu0 %v2520, 127
    %v2527 = vpop.permute.xlu0 %2526
    %v2528 = vsel %vm52, %v2523, 0
    %v2530 = vsel %vm52, %v2525, 0
    %v2532 = vsel %vm52, %v2527, 0
    %2534 = vmatprep.subr.mxu0 0.0
    %2535 = vmatpush1.msra.mxu0 %v865
    %2536 = vmatprep.subr.mxu0 0.0
    %2537 = vmatpush1.msra.mxu0 %v866
    %2538 = vmatprep.subr.mxu0 0.0
    %2539 = vmatpush1.msra.mxu0 %v1327
    %2540 = vmatprep.subr.mxu0 0.0
    %2541 = vmatpush1.msra.mxu0 0.0
    %2542 = vmatprep.subr.mxu0 0.0
    %2543 = vmatpush1.msra.mxu0 0.0
    %2544 = vmatprep.subr.mxu0 0.0
    %2545 = vmatpush1.msra.mxu0 0.0
    %2546 = vmatprep.subr.mxu0 0.0
    %2547 = vmatpush1.msra.mxu0 0.0
    %2548 = vmatprep.subr.mxu0 0.0
    %2549 = vmatpush1.msra.mxu0 0.0
    %2550 = vmatprep.subr.mxu0 0.0
    %2551 = vmatpush1.msra.mxu0 0.0
    %2552 = vmatprep.subr.mxu0 0.0
    %2553 = vmatpush1.msra.mxu0 0.0
    %2554 = vmatprep.subr.mxu0 0.0
    %2555 = vmatpush1.msra.mxu0 0.0
    %2556 = vmatprep.subr.mxu0 0.0
    %2557 = vmatpush1.msra.mxu0 0.0
    %2558 = vmatprep.subr.mxu0 0.0
    %2559 = vmatpush1.msra.mxu0 0.0
    %2560 = vmatprep.subr.mxu0 0.0
    %2561 = vmatpush1.msra.mxu0 0.0
    %2562 = vmatprep.subr.mxu0 0.0
    %2563 = vmatpush1.msra.mxu0 0.0
    %2564 = vmatprep.subr.mxu0 0.0
    %2565 = vmatpush1.msra.mxu0 0.0
    %2566 = vmatprep.subr.mxu0 0.0
    %2567 = vmatpush1.msra.mxu0 0.0
    %2568 = vmatprep.subr.mxu0 0.0
    %2569 = vmatpush1.msra.mxu0 0.0
    %2570 = vmatprep.subr.mxu0 0.0
    %2571 = vmatpush1.msra.mxu0 0.0
    %2572 = vmatprep.subr.mxu0 0.0
    %2573 = vmatpush1.msra.mxu0 0.0
    %2574 = vmatprep.subr.mxu0 0.0
    %2575 = vmatpush1.msra.mxu0 0.0
    %2576 = vmatprep.subr.mxu0 0.0
    %2577 = vmatpush1.msra.mxu0 0.0
    %2578 = vmatprep.subr.mxu0 0.0
    %2579 = vmatpush1.msra.mxu0 0.0
    %2580 = vmatprep.subr.mxu0 0.0
    %2581 = vmatpush1.msra.mxu0 0.0
    %2582 = vmatprep.subr.mxu0 0.0
    %2583 = vmatpush1.msra.mxu0 0.0
    %2584 = vmatprep.subr.mxu0 0.0
    %2585 = vmatpush1.msra.mxu0 0.0
    %2586 = vmatprep.subr.mxu0 0.0
    %2587 = vmatpush1.msra.mxu0 0.0
    %2588 = vmatprep.subr.mxu0 0.0
    %2589 = vmatpush1.msra.mxu0 0.0
    %2590 = vmatprep.subr.mxu0 0.0
    %2591 = vmatpush1.msra.mxu0 0.0
    %2592 = vmatprep.subr.mxu0 0.0
    %2593 = vmatpush1.msra.mxu0 0.0
    %2594 = vmatprep.subr.mxu0 0.0
    %2595 = vmatpush1.msra.mxu0 0.0
    %2596 = vmatprep.subr.mxu0 0.0
    %2597 = vmatpush1.msra.mxu0 0.0
    %2598 = vmatprep.mubr.f32.mxu0 0.0
    %2599 = vmatmul.mubr.f32.gmra.mrb[0].mxu0 %v2528
    %v2600 = vpop.f32.mrb[0].mxu0
    %v2601 = vadd.f32 %v2501, %v2600
    %v2602 = vpop.f32.mrb[0].mxu0
    %2603 = vmatprep.mubr.f32.mxu0 0.0
    %2604 = vmatmul.mubr.f32.gmra.mrb[0].mxu0 %v2530
    %v2605 = vpop.f32.mrb[0].mxu0
    %v2606 = vadd.f32 %v2506, %v2605
    %v2607 = vpop.f32.mrb[0].mxu0
    %2608 = vmatprep.mubr.f32.mxu0 0.0
    %2609 = vmatmul.mubr.f32.gmra.mrb[0].mxu0 %v2532
    %v2610 = vpop.f32.mrb[0].mxu0
    %v2611 = vadd.f32 %v2511, %v2610
    %v2612 = vpop.f32.mrb[0].mxu0
    %2613 = vdwg.mxu0
    %s2614 = sld [smem:[#allocation4 + $0x11]]
    %v2615 = vstv %s2614
    %v2616 = vmul.f32 %v808, %v2615
    %v2617 = vmul.f32 %v802, %v2615
    %v2618 = vmul.f32 %v810, %v2615
    %v2619 = vadd.f32 %v2616, 0.0
    %v2620 = vadd.f32 %v2617, 0.0
    %v2621 = vadd.f32 %v2618, 0.0
    %s2622 = sld [smem:[#allocation4 + $0x13]]
    %v2623 = vstv %s2622
    %v2624 = vmul.f32 %v808, %v2623
    %v2625 = vmul.f32 %v802, %v2623
    %v2626 = vmul.f32 %v810, %v2623
    %2630 = vrot.lane.b32.xlu0 %v2624, 1
    %v2631 = vpop.permute.xlu0 %2630
    %2632 = vrot.lane.b32.xlu0 %v2625, 1
    %v2633 = vpop.permute.xlu0 %2632
    %2634 = vrot.lane.b32.xlu0 %v2626, 1
    %v2635 = vpop.permute.xlu0 %2634
    %v2639 = vadd.f32 %v2619, %v2631
    %v2640 = vadd.f32 %v2620, %v2633
    %v2641 = vadd.f32 %v2621, %v2635
    %s2642 = sld [smem:[#allocation4 + $0x19]]
    %v2643 = vstv %s2642
    %v2644 = vmul.f32 %v808, %v2643
    %v2645 = vmul.f32 %v802, %v2643
    %v2646 = vmul.f32 %v810, %v2643
    %v2650 = vrot.slane %v2644, 7
    %v2651 = vrot.slane %v2645, 7
    %v2652 = vsel %vm210, %v2650, %v2651
    %v2653 = vrot.slane %v2646, 7
    %v2654 = vsel %vm210, %v2651, %v2653
    %v2658 = vadd.f32 %v2639, %v2650
    %v2659 = vadd.f32 %v2640, %v2652
    %v2660 = vadd.f32 %v2641, %v2654
    %s2661 = sld [smem:[#allocation4 + $0x1b]]
    %v2662 = vstv %s2661
    %v2663 = vmul.f32 %v808, %v2662
    %v2664 = vmul.f32 %v802, %v2662
    %v2665 = vmul.f32 %v810, %v2662
    %v2669 = vrot.slane %v2663, 7
    %v2670 = vrot.slane %v2664, 7
    %v2671 = vsel %vm210, %v2669, %v2670
    %v2672 = vrot.slane %v2665, 7
    %v2673 = vsel %vm210, %v2670, %v2672
    %2674 = vrot.lane.b32.xlu0 %v2669, 1
    %v2675 = vpop.permute.xlu0 %2674
    %2676 = vrot.lane.b32.xlu0 %v2671, 1
    %v2677 = vpop.permute.xlu0 %2676
    %2678 = vrot.lane.b32.xlu0 %v2673, 1
    %v2679 = vpop.permute.xlu0 %2678
    %v2683 = vadd.f32 %v2658, %v2675
    %v2684 = vadd.f32 %v2659, %v2677
    %v2685 = vadd.f32 %v2660, %v2679
    %s2686 = sld [smem:[#allocation4 + $0x51]]
    %v2687 = vstv %s2686
    %v2688 = vmul.f32 %v848, %v2687
    %v2689 = vmul.f32 %v842, %v2687
    %v2690 = vmul.f32 %v849, %v2687
    %v2691 = vadd.f32 %v2683, %v2688
    %v2692 = vadd.f32 %v2684, %v2689
    %v2693 = vadd.f32 %v2685, %v2690
    %s2694 = sld [smem:[#allocation4 + $0x53]]
    %v2695 = vstv %s2694
    %v2696 = vmul.f32 %v848, %v2695
    %v2697 = vmul.f32 %v842, %v2695
    %v2698 = vmul.f32 %v849, %v2695
    %2702 = vrot.lane.b32.xlu0 %v2696, 1
    %v2703 = vpop.permute.xlu0 %2702
    %2704 = vrot.lane.b32.xlu0 %v2697, 1
    %v2705 = vpop.permute.xlu0 %2704
    %2706 = vrot.lane.b32.xlu0 %v2698, 1
    %v2707 = vpop.permute.xlu0 %2706
    %v2711 = vadd.f32 %v2691, %v2703
    %v2712 = vadd.f32 %v2692, %v2705
    %v2713 = vadd.f32 %v2693, %v2707
    %s2714 = sld [smem:[#allocation4 + $0x59]]
    %v2715 = vstv %s2714
    %v2716 = vmul.f32 %v848, %v2715
    %v2717 = vmul.f32 %v842, %v2715
    %v2718 = vmul.f32 %v849, %v2715
    %v2722 = vrot.slane %v2716, 7
    %v2723 = vrot.slane %v2717, 7
    %v2724 = vsel %vm210, %v2722, %v2723
    %v2725 = vrot.slane %v2718, 7
    %v2726 = vsel %vm210, %v2723, %v2725
    %v2730 = vadd.f32 %v2711, %v2722
    %v2731 = vadd.f32 %v2712, %v2724
    %v2732 = vadd.f32 %v2713, %v2726
    %s2733 = sld [smem:[#allocation4 + $0x5b]]
    %v2734 = vstv %s2733
    %v2735 = vmul.f32 %v848, %v2734
    %v2736 = vmul.f32 %v842, %v2734
    %v2737 = vmul.f32 %v849, %v2734
    %v2741 = vrot.slane %v2735, 7
    %v2742 = vrot.slane %v2736, 7
    %v2743 = vsel %vm210, %v2741, %v2742
    %v2744 = vrot.slane %v2737, 7
    %v2745 = vsel %vm210, %v2742, %v2744
    %2746 = vrot.lane.b32.xlu0 %v2741, 1
    %v2747 = vpop.permute.xlu0 %2746
    %2748 = vrot.lane.b32.xlu0 %v2743, 1
    %v2749 = vpop.permute.xlu0 %2748
    %2750 = vrot.lane.b32.xlu0 %v2745, 1
    %v2751 = vpop.permute.xlu0 %2750
    %v2755 = vadd.f32 %v2730, %v2747
    %v2756 = vadd.f32 %v2731, %v2749
    %v2757 = vadd.f32 %v2732, %v2751
    %s2758 = sld [smem:[#allocation4 + $0x10]]
    %v2759 = vstv %s2758
    %v2760 = vmul.f32 %v808, %v2759
    %v2761 = vmul.f32 %v802, %v2759
    %v2762 = vmul.f32 %v810, %v2759
    %v2763 = vadd.f32 %v2760, 0.0
    %v2764 = vadd.f32 %v2761, 0.0
    %v2765 = vadd.f32 %v2762, 0.0
    %s2766 = sld [smem:[#allocation4 + $0x12]]
    %v2767 = vstv %s2766
    %v2768 = vmul.f32 %v808, %v2767
    %v2769 = vmul.f32 %v802, %v2767
    %v2770 = vmul.f32 %v810, %v2767
    %2774 = vrot.lane.b32.xlu0 %v2768, 1
    %v2775 = vpop.permute.xlu0 %2774
    %2776 = vrot.lane.b32.xlu0 %v2769, 1
    %v2777 = vpop.permute.xlu0 %2776
    %2778 = vrot.lane.b32.xlu0 %v2770, 1
    %v2779 = vpop.permute.xlu0 %2778
    %v2783 = vadd.f32 %v2763, %v2775
    %v2784 = vadd.f32 %v2764, %v2777
    %v2785 = vadd.f32 %v2765, %v2779
    %s2786 = sld [smem:[#allocation4 + $0x18]]
    %v2787 = vstv %s2786
    %v2788 = vmul.f32 %v808, %v2787
    %v2789 = vmul.f32 %v802, %v2787
    %v2790 = vmul.f32 %v810, %v2787
    %v2794 = vrot.slane %v2788, 7
    %v2795 = vrot.slane %v2789, 7
    %v2796 = vsel %vm210, %v2794, %v2795
    %v2797 = vrot.slane %v2790, 7
    %v2798 = vsel %vm210, %v2795, %v2797
    %v2802 = vadd.f32 %v2783, %v2794
    %v2803 = vadd.f32 %v2784, %v2796
    %v2804 = vadd.f32 %v2785, %v2798
    %s2805 = sld [smem:[#allocation4 + $0x1a]]
    %v2806 = vstv %s2805
    %v2807 = vmul.f32 %v808, %v2806
    %v2808 = vmul.f32 %v802, %v2806
    %v2809 = vmul.f32 %v810, %v2806
    %v2813 = vrot.slane %v2807, 7
    %v2814 = vrot.slane %v2808, 7
    %v2815 = vsel %vm210, %v2813, %v2814
    %v2816 = vrot.slane %v2809, 7
    %v2817 = vsel %vm210, %v2814, %v2816
    %2818 = vrot.lane.b32.xlu0 %v2813, 1
    %v2819 = vpop.permute.xlu0 %2818
    %2820 = vrot.lane.b32.xlu0 %v2815, 1
    %v2821 = vpop.permute.xlu0 %2820
    %2822 = vrot.lane.b32.xlu0 %v2817, 1
    %v2823 = vpop.permute.xlu0 %2822
    %v2827 = vadd.f32 %v2802, %v2819
    %v2828 = vadd.f32 %v2803, %v2821
    %v2829 = vadd.f32 %v2804, %v2823
    %s2830 = sld [smem:[#allocation4 + $0x50]]
    %v2831 = vstv %s2830
    %v2832 = vmul.f32 %v848, %v2831
    %v2833 = vmul.f32 %v842, %v2831
    %v2834 = vmul.f32 %v849, %v2831
    %v2835 = vadd.f32 %v2827, %v2832
    %v2836 = vadd.f32 %v2828, %v2833
    %v2837 = vadd.f32 %v2829, %v2834
    %s2838 = sld [smem:[#allocation4 + $0x52]]
    %v2839 = vstv %s2838
    %v2840 = vmul.f32 %v848, %v2839
    %v2841 = vmul.f32 %v842, %v2839
    %v2842 = vmul.f32 %v849, %v2839
    %2846 = vrot.lane.b32.xlu0 %v2840, 1
    %v2847 = vpop.permute.xlu0 %2846
    %2848 = vrot.lane.b32.xlu0 %v2841, 1
    %v2849 = vpop.permute.xlu0 %2848
    %2850 = vrot.lane.b32.xlu0 %v2842, 1
    %v2851 = vpop.permute.xlu0 %2850
    %v2855 = vadd.f32 %v2835, %v2847
    %v2856 = vadd.f32 %v2836, %v2849
    %v2857 = vadd.f32 %v2837, %v2851
    %s2858 = sld [smem:[#allocation4 + $0x58]]
    %v2859 = vstv %s2858
    %v2860 = vmul.f32 %v848, %v2859
    %v2861 = vmul.f32 %v842, %v2859
    %v2862 = vmul.f32 %v849, %v2859
    %v2866 = vrot.slane %v2860, 7
    %v2867 = vrot.slane %v2861, 7
    %v2868 = vsel %vm210, %v2866, %v2867
    %v2869 = vrot.slane %v2862, 7
    %v2870 = vsel %vm210, %v2867, %v2869
    %v2874 = vadd.f32 %v2855, %v2866
    %v2875 = vadd.f32 %v2856, %v2868
    %v2876 = vadd.f32 %v2857, %v2870
    %s2877 = sld [smem:[#allocation4 + $0x5a]]
    %v2878 = vstv %s2877
    %v2879 = vmul.f32 %v848, %v2878
    %v2880 = vmul.f32 %v842, %v2878
    %v2881 = vmul.f32 %v849, %v2878
    %v2885 = vrot.slane %v2879, 7
    %v2886 = vrot.slane %v2880, 7
    %v2887 = vsel %vm210, %v2885, %v2886
    %v2888 = vrot.slane %v2881, 7
    %v2889 = vsel %vm210, %v2886, %v2888
    %2890 = vrot.lane.b32.xlu0 %v2885, 1
    %v2891 = vpop.permute.xlu0 %2890
    %2892 = vrot.lane.b32.xlu0 %v2887, 1
    %v2893 = vpop.permute.xlu0 %2892
    %2894 = vrot.lane.b32.xlu0 %v2889, 1
    %v2895 = vpop.permute.xlu0 %2894
    %v2899 = vadd.f32 %v2874, %v2891
    %v2900 = vadd.f32 %v2875, %v2893
    %v2901 = vadd.f32 %v2876, %v2895
    %v2905 = vrot.slane %v2899, 2
    %v2906 = vrot.slane %v2900, 2
    %v2907 = vsel %vm1700, %v2905, %v2906
    %v2908 = vrot.slane %v2901, 2
    %v2909 = vsel %vm1700, %v2906, %v2908
    %2910 = vrot.lane.b32.xlu0 %v2907, 126
    %v2911 = vpop.permute.xlu0 %2910
    %2912 = vrot.lane.b32.xlu0 %v2909, 126
    %v2913 = vpop.permute.xlu0 %2912
    %2914 = vrot.lane.b32.xlu0 %v2908, 126
    %v2915 = vpop.permute.xlu0 %2914
    %v2916 = vsel %vm52, %v2911, 0
    %v2918 = vsel %vm52, %v2913, 0
    %v2920 = vsel %vm52, %v2915, 0
    %2922 = vmatprep.subr.mxu0 0.0
    %2923 = vmatpush1.msra.mxu0 %v877
    %2924 = vmatprep.subr.mxu0 0.0
    %2925 = vmatpush1.msra.mxu0 %v878
    %2926 = vmatprep.subr.mxu0 0.0
    %2927 = vmatpush1.msra.mxu0 %v1224
    %2928 = vmatprep.subr.mxu0 0.0
    %2929 = vmatpush1.msra.mxu0 0.0
    %2930 = vmatprep.subr.mxu0 0.0
    %2931 = vmatpush1.msra.mxu0 0.0
    %2932 = vmatprep.subr.mxu0 0.0
    %2933 = vmatpush1.msra.mxu0 0.0
    %2934 = vmatprep.subr.mxu0 0.0
    %2935 = vmatpush1.msra.mxu0 0.0
    %2936 = vmatprep.subr.mxu0 0.0
    %2937 = vmatpush1.msra.mxu0 0.0
    %2938 = vmatprep.subr.mxu0 0.0
    %2939 = vmatpush1.msra.mxu0 0.0
    %2940 = vmatprep.subr.mxu0 0.0
    %2941 = vmatpush1.msra.mxu0 0.0
    %2942 = vmatprep.subr.mxu0 0.0
    %2943 = vmatpush1.msra.mxu0 0.0
    %2944 = vmatprep.subr.mxu0 0.0
    %2945 = vmatpush1.msra.mxu0 0.0
    %2946 = vmatprep.subr.mxu0 0.0
    %2947 = vmatpush1.msra.mxu0 0.0
    %2948 = vmatprep.subr.mxu0 0.0
    %2949 = vmatpush1.msra.mxu0 0.0
    %2950 = vmatprep.subr.mxu0 0.0
    %2951 = vmatpush1.msra.mxu0 0.0
    %2952 = vmatprep.subr.mxu0 0.0
    %2953 = vmatpush1.msra.mxu0 0.0
    %2954 = vmatprep.subr.mxu0 0.0
    %2955 = vmatpush1.msra.mxu0 0.0
    %2956 = vmatprep.subr.mxu0 0.0
    %2957 = vmatpush1.msra.mxu0 0.0
    %2958 = vmatprep.subr.mxu0 0.0
    %2959 = vmatpush1.msra.mxu0 0.0
    %2960 = vmatprep.subr.mxu0 0.0
    %2961 = vmatpush1.msra.mxu0 0.0
    %2962 = vmatprep.subr.mxu0 0.0
    %2963 = vmatpush1.msra.mxu0 0.0
    %2964 = vmatprep.subr.mxu0 0.0
    %2965 = vmatpush1.msra.mxu0 0.0
    %2966 = vmatprep.subr.mxu0 0.0
    %2967 = vmatpush1.msra.mxu0 0.0
    %2968 = vmatprep.subr.mxu0 0.0
    %2969 = vmatpush1.msra.mxu0 0.0
    %2970 = vmatprep.subr.mxu0 0.0
    %2971 = vmatpush1.msra.mxu0 0.0
    %2972 = vmatprep.subr.mxu0 0.0
    %2973 = vmatpush1.msra.mxu0 0.0
    %2974 = vmatprep.subr.mxu0 0.0
    %2975 = vmatpush1.msra.mxu0 0.0
    %2976 = vmatprep.subr.mxu0 0.0
    %2977 = vmatpush1.msra.mxu0 0.0
    %2978 = vmatprep.subr.mxu0 0.0
    %2979 = vmatpush1.msra.mxu0 0.0
    %2980 = vmatprep.subr.mxu0 0.0
    %2981 = vmatpush1.msra.mxu0 0.0
    %2982 = vmatprep.subr.mxu0 0.0
    %2983 = vmatpush1.msra.mxu0 0.0
    %2984 = vmatprep.subr.mxu0 0.0
    %2985 = vmatpush1.msra.mxu0 0.0
    %2986 = vmatprep.mubr.f32.mxu0 0.0
    %2987 = vmatmul.mubr.f32.gmra.mrb[0].mxu0 %v2916
    %v2988 = vpop.f32.mrb[0].mxu0
    %v2989 = vadd.f32 0.0, %v2988
    %v2990 = vpop.f32.mrb[0].mxu0
    %2991 = vmatprep.mubr.f32.mxu0 0.0
    %2992 = vmatmul.mubr.f32.gmra.mrb[0].mxu0 %v2918
    %v2993 = vpop.f32.mrb[0].mxu0
    %v2994 = vadd.f32 0.0, %v2993
    %v2995 = vpop.f32.mrb[0].mxu0
    %2996 = vmatprep.mubr.f32.mxu0 0.0
    %2997 = vmatmul.mubr.f32.gmra.mrb[0].mxu0 %v2920
    %v2998 = vpop.f32.mrb[0].mxu0
    %v2999 = vadd.f32 0.0, %v2998
    %v3000 = vpop.f32.mrb[0].mxu0
    %3001 = vdwg.mxu0
    %v3005 = vrot.slane %v2755, 2
    %v3006 = vrot.slane %v2756, 2
    %v3007 = vsel %vm1700, %v3005, %v3006
    %v3008 = vrot.slane %v2757, 2
    %v3009 = vsel %vm1700, %v3006, %v3008
    %3010 = vrot.lane.b32.xlu0 %v3007, 127
    %v3011 = vpop.permute.xlu0 %3010
    %3012 = vrot.lane.b32.xlu0 %v3009, 127
    %v3013 = vpop.permute.xlu0 %3012
    %3014 = vrot.lane.b32.xlu0 %v3008, 127
    %v3015 = vpop.permute.xlu0 %3014
    %v3016 = vsel %vm52, %v3011, 0
    %v3018 = vsel %vm52, %v3013, 0
    %v3020 = vsel %vm52, %v3015, 0
    %3022 = vmatprep.subr.mxu0 0.0
    %3023 = vmatpush1.msra.mxu0 %v865
    %3024 = vmatprep.subr.mxu0 0.0
    %3025 = vmatpush1.msra.mxu0 %v866
    %3026 = vmatprep.subr.mxu0 0.0
    %3027 = vmatpush1.msra.mxu0 %v1327
    %3028 = vmatprep.subr.mxu0 0.0
    %3029 = vmatpush1.msra.mxu0 0.0
    %3030 = vmatprep.subr.mxu0 0.0
    %3031 = vmatpush1.msra.mxu0 0.0
    %3032 = vmatprep.subr.mxu0 0.0
    %3033 = vmatpush1.msra.mxu0 0.0
    %3034 = vmatprep.subr.mxu0 0.0
    %3035 = vmatpush1.msra.mxu0 0.0
    %3036 = vmatprep.subr.mxu0 0.0
    %3037 = vmatpush1.msra.mxu0 0.0
    %3038 = vmatprep.subr.mxu0 0.0
    %3039 = vmatpush1.msra.mxu0 0.0
    %3040 = vmatprep.subr.mxu0 0.0
    %3041 = vmatpush1.msra.mxu0 0.0
    %3042 = vmatprep.subr.mxu0 0.0
    %3043 = vmatpush1.msra.mxu0 0.0
    %3044 = vmatprep.subr.mxu0 0.0
    %3045 = vmatpush1.msra.mxu0 0.0
    %3046 = vmatprep.subr.mxu0 0.0
    %3047 = vmatpush1.msra.mxu0 0.0
    %3048 = vmatprep.subr.mxu0 0.0
    %3049 = vmatpush1.msra.mxu0 0.0
    %3050 = vmatprep.subr.mxu0 0.0
    %3051 = vmatpush1.msra.mxu0 0.0
    %3052 = vmatprep.subr.mxu0 0.0
    %3053 = vmatpush1.msra.mxu0 0.0
    %3054 = vmatprep.subr.mxu0 0.0
    %3055 = vmatpush1.msra.mxu0 0.0
    %3056 = vmatprep.subr.mxu0 0.0
    %3057 = vmatpush1.msra.mxu0 0.0
    %3058 = vmatprep.subr.mxu0 0.0
    %3059 = vmatpush1.msra.mxu0 0.0
    %3060 = vmatprep.subr.mxu0 0.0
    %3061 = vmatpush1.msra.mxu0 0.0
    %3062 = vmatprep.subr.mxu0 0.0
    %3063 = vmatpush1.msra.mxu0 0.0
    %3064 = vmatprep.subr.mxu0 0.0
    %3065 = vmatpush1.msra.mxu0 0.0
    %3066 = vmatprep.subr.mxu0 0.0
    %3067 = vmatpush1.msra.mxu0 0.0
    %3068 = vmatprep.subr.mxu0 0.0
    %3069 = vmatpush1.msra.mxu0 0.0
    %3070 = vmatprep.subr.mxu0 0.0
    %3071 = vmatpush1.msra.mxu0 0.0
    %3072 = vmatprep.subr.mxu0 0.0
    %3073 = vmatpush1.msra.mxu0 0.0
    %3074 = vmatprep.subr.mxu0 0.0
    %3075 = vmatpush1.msra.mxu0 0.0
    %3076 = vmatprep.subr.mxu0 0.0
    %3077 = vmatpush1.msra.mxu0 0.0
    %3078 = vmatprep.subr.mxu0 0.0
    %3079 = vmatpush1.msra.mxu0 0.0
    %3080 = vmatprep.subr.mxu0 0.0
    %3081 = vmatpush1.msra.mxu0 0.0
    %3082 = vmatprep.subr.mxu0 0.0
    %3083 = vmatpush1.msra.mxu0 0.0
    %3084 = vmatprep.subr.mxu0 0.0
    %3085 = vmatpush1.msra.mxu0 0.0
    %3086 = vmatprep.mubr.f32.mxu0 0.0
    %3087 = vmatmul.mubr.f32.gmra.mrb[0].mxu0 %v3016
    %v3088 = vpop.f32.mrb[0].mxu0
    %v3089 = vadd.f32 %v2989, %v3088
    %v3090 = vpop.f32.mrb[0].mxu0
    %3091 = vmatprep.mubr.f32.mxu0 0.0
    %3092 = vmatmul.mubr.f32.gmra.mrb[0].mxu0 %v3018
    %v3093 = vpop.f32.mrb[0].mxu0
    %v3094 = vadd.f32 %v2994, %v3093
    %v3095 = vpop.f32.mrb[0].mxu0
    %3096 = vmatprep.mubr.f32.mxu0 0.0
    %3097 = vmatmul.mubr.f32.gmra.mrb[0].mxu0 %v3020
    %v3098 = vpop.f32.mrb[0].mxu0
    %v3099 = vadd.f32 %v2999, %v3098
    %v3100 = vpop.f32.mrb[0].mxu0
    %3101 = vdwg.mxu0
    %v3103 = vsel %vm57, %v3099, 0
    %3105 = vmatprep.subr.mxu0 0.0
    %3106 = vmatpush1.msra.mxu0 %v3089
    %3107 = vmatprep.subr.mxu0 0.0
    %3108 = vmatpush1.msra.mxu0 %v3094
    %3109 = vmatprep.subr.mxu0 0.0
    %3110 = vmatpush1.msra.mxu0 %v3103
    %3111 = vmatprep.subr.mxu0 0.0
    %3112 = vmatpush1.msra.mxu0 0.0
    %3113 = vmatprep.subr.mxu0 0.0
    %3114 = vmatpush1.msra.mxu0 0.0
    %3115 = vmatprep.subr.mxu0 0.0
    %3116 = vmatpush1.msra.mxu0 0.0
    %3117 = vmatprep.subr.mxu0 0.0
    %3118 = vmatpush1.msra.mxu0 0.0
    %3119 = vmatprep.subr.mxu0 0.0
    %3120 = vmatpush1.msra.mxu0 0.0
    %3121 = vmatprep.subr.mxu0 0.0
    %3122 = vmatpush1.msra.mxu0 0.0
    %3123 = vmatprep.subr.mxu0 0.0
    %3124 = vmatpush1.msra.mxu0 0.0
    %3125 = vmatprep.subr.mxu0 0.0
    %3126 = vmatpush1.msra.mxu0 0.0
    %3127 = vmatprep.subr.mxu0 0.0
    %3128 = vmatpush1.msra.mxu0 0.0
    %3129 = vmatprep.subr.mxu0 0.0
    %3130 = vmatpush1.msra.mxu0 0.0
    %3131 = vmatprep.subr.mxu0 0.0
    %3132 = vmatpush1.msra.mxu0 0.0
    %3133 = vmatprep.subr.mxu0 0.0
    %3134 = vmatpush1.msra.mxu0 0.0
    %3135 = vmatprep.subr.mxu0 0.0
    %3136 = vmatpush1.msra.mxu0 0.0
    %3137 = vmatprep.subr.mxu0 0.0
    %3138 = vmatpush1.msra.mxu0 0.0
    %3139 = vmatprep.subr.mxu0 0.0
    %3140 = vmatpush1.msra.mxu0 0.0
    %3141 = vmatprep.subr.mxu0 0.0
    %3142 = vmatpush1.msra.mxu0 0.0
    %3143 = vmatprep.subr.mxu0 0.0
    %3144 = vmatpush1.msra.mxu0 0.0
    %3145 = vmatprep.subr.mxu0 0.0
    %3146 = vmatpush1.msra.mxu0 0.0
    %3147 = vmatprep.subr.mxu0 0.0
    %3148 = vmatpush1.msra.mxu0 0.0
    %3149 = vmatprep.subr.mxu0 0.0
    %3150 = vmatpush1.msra.mxu0 0.0
    %3151 = vmatprep.subr.mxu0 0.0
    %3152 = vmatpush1.msra.mxu0 0.0
    %3153 = vmatprep.subr.mxu0 0.0
    %3154 = vmatpush1.msra.mxu0 0.0
    %3155 = vmatprep.subr.mxu0 0.0
    %3156 = vmatpush1.msra.mxu0 0.0
    %3157 = vmatprep.subr.mxu0 0.0
    %3158 = vmatpush1.msra.mxu0 0.0
    %3159 = vmatprep.subr.mxu0 0.0
    %3160 = vmatpush1.msra.mxu0 0.0
    %3161 = vmatprep.subr.mxu0 0.0
    %3162 = vmatpush1.msra.mxu0 0.0
    %3163 = vmatprep.subr.mxu0 0.0
    %3164 = vmatpush1.msra.mxu0 0.0
    %3165 = vmatprep.subr.mxu0 0.0
    %3166 = vmatpush1.msra.mxu0 0.0
    %3167 = vmatprep.subr.mxu0 0.0
    %3168 = vmatpush1.msra.mxu0 0.0
    %3169 = vmatprep.mubr.f32.mxu0 0.0
    %3170 = vmatmul.mubr.f32.gmra.mrb[0].mxu0 %v1899
    %v3171 = vpop.f32.mrb[0].mxu0
    %v3172 = vadd.f32 0.0, %v3171
    %v3173 = vpop.f32.mrb[0].mxu0
    %3174 = vmatprep.mubr.f32.mxu0 0.0
    %3175 = vmatmul.mubr.f32.gmra.mrb[0].mxu0 %v1902
    %v3176 = vpop.f32.mrb[0].mxu0
    %v3177 = vadd.f32 0.0, %v3176
    %v3178 = vpop.f32.mrb[0].mxu0
    %3179 = vmatprep.mubr.f32.mxu0 0.0
    %3180 = vmatmul.mubr.f32.gmra.mrb[0].mxu0 %v1905
    %v3181 = vpop.f32.mrb[0].mxu0
    %v3182 = vadd.f32 0.0, %v3181
    %v3183 = vpop.f32.mrb[0].mxu0
    %3184 = vmatprep.mubr.f32.mxu0 0.0
    %3185 = vmatmul.mubr.f32.gmra.mrb[0].mxu0 %v1908
    %v3186 = vpop.f32.mrb[0].mxu0
    %v3187 = vadd.f32 0.0, %v3186
    %v3188 = vpop.f32.mrb[0].mxu0
    %3189 = vmatprep.mubr.f32.mxu0 0.0
    %3190 = vmatmul.mubr.f32.gmra.mrb[0].mxu0 %v1911
    %v3191 = vpop.f32.mrb[0].mxu0
    %v3192 = vadd.f32 0.0, %v3191
    %v3193 = vpop.f32.mrb[0].mxu0
    %3194 = vdwg.mxu0
    %v3196 = vsel %vm57, %v2611, 0
    %3198 = vmatprep.subr.mxu0 0.0
    %3199 = vmatpush1.msra.mxu0 %v2601
    %3200 = vmatprep.subr.mxu0 0.0
    %3201 = vmatpush1.msra.mxu0 %v2606
    %3202 = vmatprep.subr.mxu0 0.0
    %3203 = vmatpush1.msra.mxu0 %v3196
    %3204 = vmatprep.subr.mxu0 0.0
    %3205 = vmatpush1.msra.mxu0 0.0
    %3206 = vmatprep.subr.mxu0 0.0
    %3207 = vmatpush1.msra.mxu0 0.0
    %3208 = vmatprep.subr.mxu0 0.0
    %3209 = vmatpush1.msra.mxu0 0.0
    %3210 = vmatprep.subr.mxu0 0.0
    %3211 = vmatpush1.msra.mxu0 0.0
    %3212 = vmatprep.subr.mxu0 0.0
    %3213 = vmatpush1.msra.mxu0 0.0
    %3214 = vmatprep.subr.mxu0 0.0
    %3215 = vmatpush1.msra.mxu0 0.0
    %3216 = vmatprep.subr.mxu0 0.0
    %3217 = vmatpush1.msra.mxu0 0.0
    %3218 = vmatprep.subr.mxu0 0.0
    %3219 = vmatpush1.msra.mxu0 0.0
    %3220 = vmatprep.subr.mxu0 0.0
    %3221 = vmatpush1.msra.mxu0 0.0
    %3222 = vmatprep.subr.mxu0 0.0
    %3223 = vmatpush1.msra.mxu0 0.0
    %3224 = vmatprep.subr.mxu0 0.0
    %3225 = vmatpush1.msra.mxu0 0.0
    %3226 = vmatprep.subr.mxu0 0.0
    %3227 = vmatpush1.msra.mxu0 0.0
    %3228 = vmatprep.subr.mxu0 0.0
    %3229 = vmatpush1.msra.mxu0 0.0
    %3230 = vmatprep.subr.mxu0 0.0
    %3231 = vmatpush1.msra.mxu0 0.0
    %3232 = vmatprep.subr.mxu0 0.0
    %3233 = vmatpush1.msra.mxu0 0.0
    %3234 = vmatprep.subr.mxu0 0.0
    %3235 = vmatpush1.msra.mxu0 0.0
    %3236 = vmatprep.subr.mxu0 0.0
    %3237 = vmatpush1.msra.mxu0 0.0
    %3238 = vmatprep.subr.mxu0 0.0
    %3239 = vmatpush1.msra.mxu0 0.0
    %3240 = vmatprep.subr.mxu0 0.0
    %3241 = vmatpush1.msra.mxu0 0.0
    %3242 = vmatprep.subr.mxu0 0.0
    %3243 = vmatpush1.msra.mxu0 0.0
    %3244 = vmatprep.subr.mxu0 0.0
    %3245 = vmatpush1.msra.mxu0 0.0
    %3246 = vmatprep.subr.mxu0 0.0
    %3247 = vmatpush1.msra.mxu0 0.0
    %3248 = vmatprep.subr.mxu0 0.0
    %3249 = vmatpush1.msra.mxu0 0.0
    %3250 = vmatprep.subr.mxu0 0.0
    %3251 = vmatpush1.msra.mxu0 0.0
    %3252 = vmatprep.subr.mxu0 0.0
    %3253 = vmatpush1.msra.mxu0 0.0
    %3254 = vmatprep.subr.mxu0 0.0
    %3255 = vmatpush1.msra.mxu0 0.0
    %3256 = vmatprep.subr.mxu0 0.0
    %3257 = vmatpush1.msra.mxu0 0.0
    %3258 = vmatprep.subr.mxu0 0.0
    %3259 = vmatpush1.msra.mxu0 0.0
    %3260 = vmatprep.subr.mxu0 0.0
    %3261 = vmatpush1.msra.mxu0 0.0
    %3262 = vmatprep.mubr.f32.mxu0 0.0
    %3263 = vmatmul.mubr.f32.gmra.mrb[0].mxu0 %v2007
    %v3264 = vpop.f32.mrb[0].mxu0
    %v3265 = vadd.f32 %v3172, %v3264
    %v3266 = vpop.f32.mrb[0].mxu0
    %3267 = vmatprep.mubr.f32.mxu0 0.0
    %3268 = vmatmul.mubr.f32.gmra.mrb[0].mxu0 %v2010
    %v3269 = vpop.f32.mrb[0].mxu0
    %v3270 = vadd.f32 %v3177, %v3269
    %v3271 = vpop.f32.mrb[0].mxu0
    %3272 = vmatprep.mubr.f32.mxu0 0.0
    %3273 = vmatmul.mubr.f32.gmra.mrb[0].mxu0 %v2013
    %v3274 = vpop.f32.mrb[0].mxu0
    %v3275 = vadd.f32 %v3182, %v3274
    %v3276 = vpop.f32.mrb[0].mxu0
    %3277 = vmatprep.mubr.f32.mxu0 0.0
    %3278 = vmatmul.mubr.f32.gmra.mrb[0].mxu0 %v2016
    %v3279 = vpop.f32.mrb[0].mxu0
    %v3280 = vadd.f32 %v3187, %v3279
    %v3281 = vpop.f32.mrb[0].mxu0
    %3282 = vmatprep.mubr.f32.mxu0 0.0
    %3283 = vmatmul.mubr.f32.gmra.mrb[0].mxu0 %v2019
    %v3284 = vpop.f32.mrb[0].mxu0
    %v3285 = vadd.f32 %v3192, %v3284
    %v3286 = vpop.f32.mrb[0].mxu0
    %3287 = vdwg.mxu0
    %v3288 = vmax.f32 %v3265, 0.0
    %v3289 = vmax.f32 %v3270, 0.0
    %v3290 = vmax.f32 %v3275, 0.0
    %v3291 = vmax.f32 %v3280, 0.0
    %v3292 = vmax.f32 %v3285, 0.0
    %s3293 = scalar_lea.vmem %s3, 40
    %3294 = vst.msk [vmem:[%s3293] sm:$0xff] %vm2119, %v3288
    %3295 = vst.msk [vmem:[%s3293 + $0x8] sm:$0xff] %vm2119, %v3289
    %3296 = vst.msk [vmem:[%s3293 + $0x10] sm:$0xff] %vm2119, %v3290
    %3297 = vst.msk [vmem:[%s3293 + $0x18] sm:$0xff] %vm2119, %v3291
    %3298 = vst.msk [vmem:[%s3293 + $0x20] sm:$0x3f] %vm2124, %v3292
    %s3299 = sld [smem:[#allocation4 + $0x25]]
    %v3300 = vstv %s3299
    %v3301 = vmul.f32 %v808, %v3300
    %v3302 = vmul.f32 %v802, %v3300
    %v3303 = vmul.f32 %v810, %v3300
    %v3304 = vadd.f32 %v3301, 0.0
    %v3305 = vadd.f32 %v3302, 0.0
    %v3306 = vadd.f32 %v3303, 0.0
    %s3307 = sld [smem:[#allocation4 + $0x27]]
    %v3308 = vstv %s3307
    %v3309 = vmul.f32 %v808, %v3308
    %v3310 = vmul.f32 %v802, %v3308
    %v3311 = vmul.f32 %v810, %v3308
    %3315 = vrot.lane.b32.xlu0 %v3309, 1
    %v3316 = vpop.permute.xlu0 %3315
    %3317 = vrot.lane.b32.xlu0 %v3310, 1
    %v3318 = vpop.permute.xlu0 %3317
    %3319 = vrot.lane.b32.xlu0 %v3311, 1
    %v3320 = vpop.permute.xlu0 %3319
    %v3324 = vadd.f32 %v3304, %v3316
    %v3325 = vadd.f32 %v3305, %v3318
    %v3326 = vadd.f32 %v3306, %v3320
    %s3327 = sld [smem:[#allocation4 + $0x2d]]
    %v3328 = vstv %s3327
    %v3329 = vmul.f32 %v808, %v3328
    %v3330 = vmul.f32 %v802, %v3328
    %v3331 = vmul.f32 %v810, %v3328
    %v3335 = vrot.slane %v3329, 7
    %v3336 = vrot.slane %v3330, 7
    %v3337 = vsel %vm210, %v3335, %v3336
    %v3338 = vrot.slane %v3331, 7
    %v3339 = vsel %vm210, %v3336, %v3338
    %v3343 = vadd.f32 %v3324, %v3335
    %v3344 = vadd.f32 %v3325, %v3337
    %v3345 = vadd.f32 %v3326, %v3339
    %s3346 = sld [smem:[#allocation4 + $0x2f]]
    %v3347 = vstv %s3346
    %v3348 = vmul.f32 %v808, %v3347
    %v3349 = vmul.f32 %v802, %v3347
    %v3350 = vmul.f32 %v810, %v3347
    %v3354 = vrot.slane %v3348, 7
    %v3355 = vrot.slane %v3349, 7
    %v3356 = vsel %vm210, %v3354, %v3355
    %v3357 = vrot.slane %v3350, 7
    %v3358 = vsel %vm210, %v3355, %v3357
    %3359 = vrot.lane.b32.xlu0 %v3354, 1
    %v3360 = vpop.permute.xlu0 %3359
    %3361 = vrot.lane.b32.xlu0 %v3356, 1
    %v3362 = vpop.permute.xlu0 %3361
    %3363 = vrot.lane.b32.xlu0 %v3358, 1
    %v3364 = vpop.permute.xlu0 %3363
    %v3368 = vadd.f32 %v3343, %v3360
    %v3369 = vadd.f32 %v3344, %v3362
    %v3370 = vadd.f32 %v3345, %v3364
    %s3371 = sld [smem:[#allocation4 + $0x65]]
    %v3372 = vstv %s3371
    %v3373 = vmul.f32 %v848, %v3372
    %v3374 = vmul.f32 %v842, %v3372
    %v3375 = vmul.f32 %v849, %v3372
    %v3376 = vadd.f32 %v3368, %v3373
    %v3377 = vadd.f32 %v3369, %v3374
    %v3378 = vadd.f32 %v3370, %v3375
    %s3379 = sld [smem:[#allocation4 + $0x67]]
    %v3380 = vstv %s3379
    %v3381 = vmul.f32 %v848, %v3380
    %v3382 = vmul.f32 %v842, %v3380
    %v3383 = vmul.f32 %v849, %v3380
    %3387 = vrot.lane.b32.xlu0 %v3381, 1
    %v3388 = vpop.permute.xlu0 %3387
    %3389 = vrot.lane.b32.xlu0 %v3382, 1
    %v3390 = vpop.permute.xlu0 %3389
    %3391 = vrot.lane.b32.xlu0 %v3383, 1
    %v3392 = vpop.permute.xlu0 %3391
    %v3396 = vadd.f32 %v3376, %v3388
    %v3397 = vadd.f32 %v3377, %v3390
    %v3398 = vadd.f32 %v3378, %v3392
    %s3399 = sld [smem:[#allocation4 + $0x6d]]
    %v3400 = vstv %s3399
    %v3401 = vmul.f32 %v848, %v3400
    %v3402 = vmul.f32 %v842, %v3400
    %v3403 = vmul.f32 %v849, %v3400
    %v3407 = vrot.slane %v3401, 7
    %v3408 = vrot.slane %v3402, 7
    %v3409 = vsel %vm210, %v3407, %v3408
    %v3410 = vrot.slane %v3403, 7
    %v3411 = vsel %vm210, %v3408, %v3410
    %v3415 = vadd.f32 %v3396, %v3407
    %v3416 = vadd.f32 %v3397, %v3409
    %v3417 = vadd.f32 %v3398, %v3411
    %s3418 = sld [smem:[#allocation4 + $0x6f]]
    %v3419 = vstv %s3418
    %v3420 = vmul.f32 %v848, %v3419
    %v3421 = vmul.f32 %v842, %v3419
    %v3422 = vmul.f32 %v849, %v3419
    %v3426 = vrot.slane %v3420, 7
    %v3427 = vrot.slane %v3421, 7
    %v3428 = vsel %vm210, %v3426, %v3427
    %v3429 = vrot.slane %v3422, 7
    %v3430 = vsel %vm210, %v3427, %v3429
    %3431 = vrot.lane.b32.xlu0 %v3426, 1
    %v3432 = vpop.permute.xlu0 %3431
    %3433 = vrot.lane.b32.xlu0 %v3428, 1
    %v3434 = vpop.permute.xlu0 %3433
    %3435 = vrot.lane.b32.xlu0 %v3430, 1
    %v3436 = vpop.permute.xlu0 %3435
    %v3440 = vadd.f32 %v3415, %v3432
    %v3441 = vadd.f32 %v3416, %v3434
    %v3442 = vadd.f32 %v3417, %v3436
    %s3443 = sld [smem:[#allocation4 + $0x24]]
    %v3444 = vstv %s3443
    %v3445 = vmul.f32 %v808, %v3444
    %v3446 = vmul.f32 %v802, %v3444
    %v3447 = vmul.f32 %v810, %v3444
    %v3448 = vadd.f32 %v3445, 0.0
    %v3449 = vadd.f32 %v3446, 0.0
    %v3450 = vadd.f32 %v3447, 0.0
    %s3451 = sld [smem:[#allocation4 + $0x26]]
    %v3452 = vstv %s3451
    %v3453 = vmul.f32 %v808, %v3452
    %v3454 = vmul.f32 %v802, %v3452
    %v3455 = vmul.f32 %v810, %v3452
    %3459 = vrot.lane.b32.xlu0 %v3453, 1
    %v3460 = vpop.permute.xlu0 %3459
    %3461 = vrot.lane.b32.xlu0 %v3454, 1
    %v3462 = vpop.permute.xlu0 %3461
    %3463 = vrot.lane.b32.xlu0 %v3455, 1
    %v3464 = vpop.permute.xlu0 %3463
    %v3468 = vadd.f32 %v3448, %v3460
    %v3469 = vadd.f32 %v3449, %v3462
    %v3470 = vadd.f32 %v3450, %v3464
    %s3471 = sld [smem:[#allocation4 + $0x2c]]
    %v3472 = vstv %s3471
    %v3473 = vmul.f32 %v808, %v3472
    %v3474 = vmul.f32 %v802, %v3472
    %v3475 = vmul.f32 %v810, %v3472
    %v3479 = vrot.slane %v3473, 7
    %v3480 = vrot.slane %v3474, 7
    %v3481 = vsel %vm210, %v3479, %v3480
    %v3482 = vrot.slane %v3475, 7
    %v3483 = vsel %vm210, %v3480, %v3482
    %v3487 = vadd.f32 %v3468, %v3479
    %v3488 = vadd.f32 %v3469, %v3481
    %v3489 = vadd.f32 %v3470, %v3483
    %s3490 = sld [smem:[#allocation4 + $0x2e]]
    %v3491 = vstv %s3490
    %v3492 = vmul.f32 %v808, %v3491
    %v3493 = vmul.f32 %v802, %v3491
    %v3494 = vmul.f32 %v810, %v3491
    %v3498 = vrot.slane %v3492, 7
    %v3499 = vrot.slane %v3493, 7
    %v3500 = vsel %vm210, %v3498, %v3499
    %v3501 = vrot.slane %v3494, 7
    %v3502 = vsel %vm210, %v3499, %v3501
    %3503 = vrot.lane.b32.xlu0 %v3498, 1
    %v3504 = vpop.permute.xlu0 %3503
    %3505 = vrot.lane.b32.xlu0 %v3500, 1
    %v3506 = vpop.permute.xlu0 %3505
    %3507 = vrot.lane.b32.xlu0 %v3502, 1
    %v3508 = vpop.permute.xlu0 %3507
    %v3512 = vadd.f32 %v3487, %v3504
    %v3513 = vadd.f32 %v3488, %v3506
    %v3514 = vadd.f32 %v3489, %v3508
    %s3515 = sld [smem:[#allocation4 + $0x64]]
    %v3516 = vstv %s3515
    %v3517 = vmul.f32 %v848, %v3516
    %v3518 = vmul.f32 %v842, %v3516
    %v3519 = vmul.f32 %v849, %v3516
    %v3520 = vadd.f32 %v3512, %v3517
    %v3521 = vadd.f32 %v3513, %v3518
    %v3522 = vadd.f32 %v3514, %v3519
    %s3523 = sld [smem:[#allocation4 + $0x66]]
    %v3524 = vstv %s3523
    %v3525 = vmul.f32 %v848, %v3524
    %v3526 = vmul.f32 %v842, %v3524
    %v3527 = vmul.f32 %v849, %v3524
    %3531 = vrot.lane.b32.xlu0 %v3525, 1
    %v3532 = vpop.permute.xlu0 %3531
    %3533 = vrot.lane.b32.xlu0 %v3526, 1
    %v3534 = vpop.permute.xlu0 %3533
    %3535 = vrot.lane.b32.xlu0 %v3527, 1
    %v3536 = vpop.permute.xlu0 %3535
    %v3540 = vadd.f32 %v3520, %v3532
    %v3541 = vadd.f32 %v3521, %v3534
    %v3542 = vadd.f32 %v3522, %v3536
    %s3543 = sld [smem:[#allocation4 + $0x6c]]
    %v3544 = vstv %s3543
    %v3545 = vmul.f32 %v848, %v3544
    %v3546 = vmul.f32 %v842, %v3544
    %v3547 = vmul.f32 %v849, %v3544
    %v3551 = vrot.slane %v3545, 7
    %v3552 = vrot.slane %v3546, 7
    %v3553 = vsel %vm210, %v3551, %v3552
    %v3554 = vrot.slane %v3547, 7
    %v3555 = vsel %vm210, %v3552, %v3554
    %v3559 = vadd.f32 %v3540, %v3551
    %v3560 = vadd.f32 %v3541, %v3553
    %v3561 = vadd.f32 %v3542, %v3555
    %s3562 = sld [smem:[#allocation4 + $0x6e]]
    %v3563 = vstv %s3562
    %v3564 = vmul.f32 %v848, %v3563
    %v3565 = vmul.f32 %v842, %v3563
    %v3566 = vmul.f32 %v849, %v3563
    %v3570 = vrot.slane %v3564, 7
    %v3571 = vrot.slane %v3565, 7
    %v3572 = vsel %vm210, %v3570, %v3571
    %v3573 = vrot.slane %v3566, 7
    %v3574 = vsel %vm210, %v3571, %v3573
    %3575 = vrot.lane.b32.xlu0 %v3570, 1
    %v3576 = vpop.permute.xlu0 %3575
    %3577 = vrot.lane.b32.xlu0 %v3572, 1
    %v3578 = vpop.permute.xlu0 %3577
    %3579 = vrot.lane.b32.xlu0 %v3574, 1
    %v3580 = vpop.permute.xlu0 %3579
    %v3584 = vadd.f32 %v3559, %v3576
    %v3585 = vadd.f32 %v3560, %v3578
    %v3586 = vadd.f32 %v3561, %v3580
    %v3590 = vrot.slane %v3584, 1
    %v3591 = vrot.slane %v3585, 1
    %v3592 = vsel %vm1205, %v3590, %v3591
    %v3593 = vrot.slane %v3586, 1
    %v3594 = vsel %vm1205, %v3591, %v3593
    %3595 = vrot.lane.b32.xlu0 %v3592, 126
    %v3596 = vpop.permute.xlu0 %3595
    %3597 = vrot.lane.b32.xlu0 %v3594, 126
    %v3598 = vpop.permute.xlu0 %3597
    %3599 = vrot.lane.b32.xlu0 %v3593, 126
    %v3600 = vpop.permute.xlu0 %3599
    %v3601 = vsel %vm52, %v3596, 0
    %v3603 = vsel %vm52, %v3598, 0
    %v3605 = vsel %vm52, %v3600, 0
    %3607 = vmatprep.subr.mxu0 0.0
    %3608 = vmatpush1.msra.mxu0 %v877
    %3609 = vmatprep.subr.mxu0 0.0
    %3610 = vmatpush1.msra.mxu0 %v878
    %3611 = vmatprep.subr.mxu0 0.0
    %3612 = vmatpush1.msra.mxu0 %v1224
    %3613 = vmatprep.subr.mxu0 0.0
    %3614 = vmatpush1.msra.mxu0 0.0
    %3615 = vmatprep.subr.mxu0 0.0
    %3616 = vmatpush1.msra.mxu0 0.0
    %3617 = vmatprep.subr.mxu0 0.0
    %3618 = vmatpush1.msra.mxu0 0.0
    %3619 = vmatprep.subr.mxu0 0.0
    %3620 = vmatpush1.msra.mxu0 0.0
    %3621 = vmatprep.subr.mxu0 0.0
    %3622 = vmatpush1.msra.mxu0 0.0
    %3623 = vmatprep.subr.mxu0 0.0
    %3624 = vmatpush1.msra.mxu0 0.0
    %3625 = vmatprep.subr.mxu0 0.0
    %3626 = vmatpush1.msra.mxu0 0.0
    %3627 = vmatprep.subr.mxu0 0.0
    %3628 = vmatpush1.msra.mxu0 0.0
    %3629 = vmatprep.subr.mxu0 0.0
    %3630 = vmatpush1.msra.mxu0 0.0
    %3631 = vmatprep.subr.mxu0 0.0
    %3632 = vmatpush1.msra.mxu0 0.0
    %3633 = vmatprep.subr.mxu0 0.0
    %3634 = vmatpush1.msra.mxu0 0.0
    %3635 = vmatprep.subr.mxu0 0.0
    %3636 = vmatpush1.msra.mxu0 0.0
    %3637 = vmatprep.subr.mxu0 0.0
    %3638 = vmatpush1.msra.mxu0 0.0
    %3639 = vmatprep.subr.mxu0 0.0
    %3640 = vmatpush1.msra.mxu0 0.0
    %3641 = vmatprep.subr.mxu0 0.0
    %3642 = vmatpush1.msra.mxu0 0.0
    %3643 = vmatprep.subr.mxu0 0.0
    %3644 = vmatpush1.msra.mxu0 0.0
    %3645 = vmatprep.subr.mxu0 0.0
    %3646 = vmatpush1.msra.mxu0 0.0
    %3647 = vmatprep.subr.mxu0 0.0
    %3648 = vmatpush1.msra.mxu0 0.0
    %3649 = vmatprep.subr.mxu0 0.0
    %3650 = vmatpush1.msra.mxu0 0.0
    %3651 = vmatprep.subr.mxu0 0.0
    %3652 = vmatpush1.msra.mxu0 0.0
    %3653 = vmatprep.subr.mxu0 0.0
    %3654 = vmatpush1.msra.mxu0 0.0
    %3655 = vmatprep.subr.mxu0 0.0
    %3656 = vmatpush1.msra.mxu0 0.0
    %3657 = vmatprep.subr.mxu0 0.0
    %3658 = vmatpush1.msra.mxu0 0.0
    %3659 = vmatprep.subr.mxu0 0.0
    %3660 = vmatpush1.msra.mxu0 0.0
    %3661 = vmatprep.subr.mxu0 0.0
    %3662 = vmatpush1.msra.mxu0 0.0
    %3663 = vmatprep.subr.mxu0 0.0
    %3664 = vmatpush1.msra.mxu0 0.0
    %3665 = vmatprep.subr.mxu0 0.0
    %3666 = vmatpush1.msra.mxu0 0.0
    %3667 = vmatprep.subr.mxu0 0.0
    %3668 = vmatpush1.msra.mxu0 0.0
    %3669 = vmatprep.subr.mxu0 0.0
    %3670 = vmatpush1.msra.mxu0 0.0
    %3671 = vmatprep.mubr.f32.mxu0 0.0
    %3672 = vmatmul.mubr.f32.gmra.mrb[0].mxu0 %v3601
    %v3673 = vpop.f32.mrb[0].mxu0
    %v3674 = vadd.f32 0.0, %v3673
    %v3675 = vpop.f32.mrb[0].mxu0
    %3676 = vmatprep.mubr.f32.mxu0 0.0
    %3677 = vmatmul.mubr.f32.gmra.mrb[0].mxu0 %v3603
    %v3678 = vpop.f32.mrb[0].mxu0
    %v3679 = vadd.f32 0.0, %v3678
    %v3680 = vpop.f32.mrb[0].mxu0
    %3681 = vmatprep.mubr.f32.mxu0 0.0
    %3682 = vmatmul.mubr.f32.gmra.mrb[0].mxu0 %v3605
    %v3683 = vpop.f32.mrb[0].mxu0
    %v3684 = vadd.f32 0.0, %v3683
    %v3685 = vpop.f32.mrb[0].mxu0
    %3686 = vdwg.mxu0
    %v3690 = vrot.slane %v3440, 1
    %v3691 = vrot.slane %v3441, 1
    %v3692 = vsel %vm1205, %v3690, %v3691
    %v3693 = vrot.slane %v3442, 1
    %v3694 = vsel %vm1205, %v3691, %v3693
    %3695 = vrot.lane.b32.xlu0 %v3692, 127
    %v3696 = vpop.permute.xlu0 %3695
    %3697 = vrot.lane.b32.xlu0 %v3694, 127
    %v3698 = vpop.permute.xlu0 %3697
    %3699 = vrot.lane.b32.xlu0 %v3693, 127
    %v3700 = vpop.permute.xlu0 %3699
    %v3701 = vsel %vm52, %v3696, 0
    %v3703 = vsel %vm52, %v3698, 0
    %v3705 = vsel %vm52, %v3700, 0
    %3707 = vmatprep.subr.mxu0 0.0
    %3708 = vmatpush1.msra.mxu0 %v865
    %3709 = vmatprep.subr.mxu0 0.0
    %3710 = vmatpush1.msra.mxu0 %v866
    %3711 = vmatprep.subr.mxu0 0.0
    %3712 = vmatpush1.msra.mxu0 %v1327
    %3713 = vmatprep.subr.mxu0 0.0
    %3714 = vmatpush1.msra.mxu0 0.0
    %3715 = vmatprep.subr.mxu0 0.0
    %3716 = vmatpush1.msra.mxu0 0.0
    %3717 = vmatprep.subr.mxu0 0.0
    %3718 = vmatpush1.msra.mxu0 0.0
    %3719 = vmatprep.subr.mxu0 0.0
    %3720 = vmatpush1.msra.mxu0 0.0
    %3721 = vmatprep.subr.mxu0 0.0
    %3722 = vmatpush1.msra.mxu0 0.0
    %3723 = vmatprep.subr.mxu0 0.0
    %3724 = vmatpush1.msra.mxu0 0.0
    %3725 = vmatprep.subr.mxu0 0.0
    %3726 = vmatpush1.msra.mxu0 0.0
    %3727 = vmatprep.subr.mxu0 0.0
    %3728 = vmatpush1.msra.mxu0 0.0
    %3729 = vmatprep.subr.mxu0 0.0
    %3730 = vmatpush1.msra.mxu0 0.0
    %3731 = vmatprep.subr.mxu0 0.0
    %3732 = vmatpush1.msra.mxu0 0.0
    %3733 = vmatprep.subr.mxu0 0.0
    %3734 = vmatpush1.msra.mxu0 0.0
    %3735 = vmatprep.subr.mxu0 0.0
    %3736 = vmatpush1.msra.mxu0 0.0
    %3737 = vmatprep.subr.mxu0 0.0
    %3738 = vmatpush1.msra.mxu0 0.0
    %3739 = vmatprep.subr.mxu0 0.0
    %3740 = vmatpush1.msra.mxu0 0.0
    %3741 = vmatprep.subr.mxu0 0.0
    %3742 = vmatpush1.msra.mxu0 0.0
    %3743 = vmatprep.subr.mxu0 0.0
    %3744 = vmatpush1.msra.mxu0 0.0
    %3745 = vmatprep.subr.mxu0 0.0
    %3746 = vmatpush1.msra.mxu0 0.0
    %3747 = vmatprep.subr.mxu0 0.0
    %3748 = vmatpush1.msra.mxu0 0.0
    %3749 = vmatprep.subr.mxu0 0.0
    %3750 = vmatpush1.msra.mxu0 0.0
    %3751 = vmatprep.subr.mxu0 0.0
    %3752 = vmatpush1.msra.mxu0 0.0
    %3753 = vmatprep.subr.mxu0 0.0
    %3754 = vmatpush1.msra.mxu0 0.0
    %3755 = vmatprep.subr.mxu0 0.0
    %3756 = vmatpush1.msra.mxu0 0.0
    %3757 = vmatprep.subr.mxu0 0.0
    %3758 = vmatpush1.msra.mxu0 0.0
    %3759 = vmatprep.subr.mxu0 0.0
    %3760 = vmatpush1.msra.mxu0 0.0
    %3761 = vmatprep.subr.mxu0 0.0
    %3762 = vmatpush1.msra.mxu0 0.0
    %3763 = vmatprep.subr.mxu0 0.0
    %3764 = vmatpush1.msra.mxu0 0.0
    %3765 = vmatprep.subr.mxu0 0.0
    %3766 = vmatpush1.msra.mxu0 0.0
    %3767 = vmatprep.subr.mxu0 0.0
    %3768 = vmatpush1.msra.mxu0 0.0
    %3769 = vmatprep.subr.mxu0 0.0
    %3770 = vmatpush1.msra.mxu0 0.0
    %3771 = vmatprep.mubr.f32.mxu0 0.0
    %3772 = vmatmul.mubr.f32.gmra.mrb[0].mxu0 %v3701
    %v3773 = vpop.f32.mrb[0].mxu0
    %v3774 = vadd.f32 %v3674, %v3773
    %v3775 = vpop.f32.mrb[0].mxu0
    %3776 = vmatprep.mubr.f32.mxu0 0.0
    %3777 = vmatmul.mubr.f32.gmra.mrb[0].mxu0 %v3703
    %v3778 = vpop.f32.mrb[0].mxu0
    %v3779 = vadd.f32 %v3679, %v3778
    %v3780 = vpop.f32.mrb[0].mxu0
    %3781 = vmatprep.mubr.f32.mxu0 0.0
    %3782 = vmatmul.mubr.f32.gmra.mrb[0].mxu0 %v3705
    %v3783 = vpop.f32.mrb[0].mxu0
    %v3784 = vadd.f32 %v3684, %v3783
    %v3785 = vpop.f32.mrb[0].mxu0
    %3786 = vdwg.mxu0
    %s3787 = sld [smem:[#allocation4 + $0x21]]
    %v3788 = vstv %s3787
    %v3789 = vmul.f32 %v808, %v3788
    %v3790 = vmul.f32 %v802, %v3788
    %v3791 = vmul.f32 %v810, %v3788
    %v3792 = vadd.f32 %v3789, 0.0
    %v3793 = vadd.f32 %v3790, 0.0
    %v3794 = vadd.f32 %v3791, 0.0
    %s3795 = sld [smem:[#allocation4 + $0x23]]
    %v3796 = vstv %s3795
    %v3797 = vmul.f32 %v808, %v3796
    %v3798 = vmul.f32 %v802, %v3796
    %v3799 = vmul.f32 %v810, %v3796
    %3803 = vrot.lane.b32.xlu0 %v3797, 1
    %v3804 = vpop.permute.xlu0 %3803
    %3805 = vrot.lane.b32.xlu0 %v3798, 1
    %v3806 = vpop.permute.xlu0 %3805
    %3807 = vrot.lane.b32.xlu0 %v3799, 1
    %v3808 = vpop.permute.xlu0 %3807
    %v3812 = vadd.f32 %v3792, %v3804
    %v3813 = vadd.f32 %v3793, %v3806
    %v3814 = vadd.f32 %v3794, %v3808
    %s3815 = sld [smem:[#allocation4 + $0x29]]
    %v3816 = vstv %s3815
    %v3817 = vmul.f32 %v808, %v3816
    %v3818 = vmul.f32 %v802, %v3816
    %v3819 = vmul.f32 %v810, %v3816
    %v3823 = vrot.slane %v3817, 7
    %v3824 = vrot.slane %v3818, 7
    %v3825 = vsel %vm210, %v3823, %v3824
    %v3826 = vrot.slane %v3819, 7
    %v3827 = vsel %vm210, %v3824, %v3826
    %v3831 = vadd.f32 %v3812, %v3823
    %v3832 = vadd.f32 %v3813, %v3825
    %v3833 = vadd.f32 %v3814, %v3827
    %s3834 = sld [smem:[#allocation4 + $0x2b]]
    %v3835 = vstv %s3834
    %v3836 = vmul.f32 %v808, %v3835
    %v3837 = vmul.f32 %v802, %v3835
    %v3838 = vmul.f32 %v810, %v3835
    %v3842 = vrot.slane %v3836, 7
    %v3843 = vrot.slane %v3837, 7
    %v3844 = vsel %vm210, %v3842, %v3843
    %v3845 = vrot.slane %v3838, 7
    %v3846 = vsel %vm210, %v3843, %v3845
    %3847 = vrot.lane.b32.xlu0 %v3842, 1
    %v3848 = vpop.permute.xlu0 %3847
    %3849 = vrot.lane.b32.xlu0 %v3844, 1
    %v3850 = vpop.permute.xlu0 %3849
    %3851 = vrot.lane.b32.xlu0 %v3846, 1
    %v3852 = vpop.permute.xlu0 %3851
    %v3856 = vadd.f32 %v3831, %v3848
    %v3857 = vadd.f32 %v3832, %v3850
    %v3858 = vadd.f32 %v3833, %v3852
    %s3859 = sld [smem:[#allocation4 + $0x61]]
    %v3860 = vstv %s3859
    %v3861 = vmul.f32 %v848, %v3860
    %v3862 = vmul.f32 %v842, %v3860
    %v3863 = vmul.f32 %v849, %v3860
    %v3864 = vadd.f32 %v3856, %v3861
    %v3865 = vadd.f32 %v3857, %v3862
    %v3866 = vadd.f32 %v3858, %v3863
    %s3867 = sld [smem:[#allocation4 + $0x63]]
    %v3868 = vstv %s3867
    %v3869 = vmul.f32 %v848, %v3868
    %v3870 = vmul.f32 %v842, %v3868
    %v3871 = vmul.f32 %v849, %v3868
    %3875 = vrot.lane.b32.xlu0 %v3869, 1
    %v3876 = vpop.permute.xlu0 %3875
    %3877 = vrot.lane.b32.xlu0 %v3870, 1
    %v3878 = vpop.permute.xlu0 %3877
    %3879 = vrot.lane.b32.xlu0 %v3871, 1
    %v3880 = vpop.permute.xlu0 %3879
    %v3884 = vadd.f32 %v3864, %v3876
    %v3885 = vadd.f32 %v3865, %v3878
    %v3886 = vadd.f32 %v3866, %v3880
    %s3887 = sld [smem:[#allocation4 + $0x69]]
    %v3888 = vstv %s3887
    %v3889 = vmul.f32 %v848, %v3888
    %v3890 = vmul.f32 %v842, %v3888
    %v3891 = vmul.f32 %v849, %v3888
    %v3895 = vrot.slane %v3889, 7
    %v3896 = vrot.slane %v3890, 7
    %v3897 = vsel %vm210, %v3895, %v3896
    %v3898 = vrot.slane %v3891, 7
    %v3899 = vsel %vm210, %v3896, %v3898
    %v3903 = vadd.f32 %v3884, %v3895
    %v3904 = vadd.f32 %v3885, %v3897
    %v3905 = vadd.f32 %v3886, %v3899
    %s3906 = sld [smem:[#allocation4 + $0x6b]]
    %v3907 = vstv %s3906
    %v3908 = vmul.f32 %v848, %v3907
    %v3909 = vmul.f32 %v842, %v3907
    %v3910 = vmul.f32 %v849, %v3907
    %v3914 = vrot.slane %v3908, 7
    %v3915 = vrot.slane %v3909, 7
    %v3916 = vsel %vm210, %v3914, %v3915
    %v3917 = vrot.slane %v3910, 7
    %v3918 = vsel %vm210, %v3915, %v3917
    %3919 = vrot.lane.b32.xlu0 %v3914, 1
    %v3920 = vpop.permute.xlu0 %3919
    %3921 = vrot.lane.b32.xlu0 %v3916, 1
    %v3922 = vpop.permute.xlu0 %3921
    %3923 = vrot.lane.b32.xlu0 %v3918, 1
    %v3924 = vpop.permute.xlu0 %3923
    %v3928 = vadd.f32 %v3903, %v3920
    %v3929 = vadd.f32 %v3904, %v3922
    %v3930 = vadd.f32 %v3905, %v3924
    %s3931 = sld [smem:[#allocation4 + $0x20]]
    %v3932 = vstv %s3931
    %v3933 = vmul.f32 %v808, %v3932
    %v3934 = vmul.f32 %v802, %v3932
    %v3935 = vmul.f32 %v810, %v3932
    %v3936 = vadd.f32 %v3933, 0.0
    %v3937 = vadd.f32 %v3934, 0.0
    %v3938 = vadd.f32 %v3935, 0.0
    %s3939 = sld [smem:[#allocation4 + $0x22]]
    %v3940 = vstv %s3939
    %v3941 = vmul.f32 %v808, %v3940
    %v3942 = vmul.f32 %v802, %v3940
    %v3943 = vmul.f32 %v810, %v3940
    %3947 = vrot.lane.b32.xlu0 %v3941, 1
    %v3948 = vpop.permute.xlu0 %3947
    %3949 = vrot.lane.b32.xlu0 %v3942, 1
    %v3950 = vpop.permute.xlu0 %3949
    %3951 = vrot.lane.b32.xlu0 %v3943, 1
    %v3952 = vpop.permute.xlu0 %3951
    %v3956 = vadd.f32 %v3936, %v3948
    %v3957 = vadd.f32 %v3937, %v3950
    %v3958 = vadd.f32 %v3938, %v3952
    %s3959 = sld [smem:[#allocation4 + $0x28]]
    %v3960 = vstv %s3959
    %v3961 = vmul.f32 %v808, %v3960
    %v3962 = vmul.f32 %v802, %v3960
    %v3963 = vmul.f32 %v810, %v3960
    %v3967 = vrot.slane %v3961, 7
    %v3968 = vrot.slane %v3962, 7
    %v3969 = vsel %vm210, %v3967, %v3968
    %v3970 = vrot.slane %v3963, 7
    %v3971 = vsel %vm210, %v3968, %v3970
    %v3975 = vadd.f32 %v3956, %v3967
    %v3976 = vadd.f32 %v3957, %v3969
    %v3977 = vadd.f32 %v3958, %v3971
    %s3978 = sld [smem:[#allocation4 + $0x2a]]
    %v3979 = vstv %s3978
    %v3980 = vmul.f32 %v808, %v3979
    %v3981 = vmul.f32 %v802, %v3979
    %v3982 = vmul.f32 %v810, %v3979
    %v3986 = vrot.slane %v3980, 7
    %v3987 = vrot.slane %v3981, 7
    %v3988 = vsel %vm210, %v3986, %v3987
    %v3989 = vrot.slane %v3982, 7
    %v3990 = vsel %vm210, %v3987, %v3989
    %3991 = vrot.lane.b32.xlu0 %v3986, 1
    %v3992 = vpop.permute.xlu0 %3991
    %3993 = vrot.lane.b32.xlu0 %v3988, 1
    %v3994 = vpop.permute.xlu0 %3993
    %3995 = vrot.lane.b32.xlu0 %v3990, 1
    %v3996 = vpop.permute.xlu0 %3995
    %v4000 = vadd.f32 %v3975, %v3992
    %v4001 = vadd.f32 %v3976, %v3994
    %v4002 = vadd.f32 %v3977, %v3996
    %s4003 = sld [smem:[#allocation4 + $0x60]]
    %v4004 = vstv %s4003
    %v4005 = vmul.f32 %v848, %v4004
    %v4006 = vmul.f32 %v842, %v4004
    %v4007 = vmul.f32 %v849, %v4004
    %v4008 = vadd.f32 %v4000, %v4005
    %v4009 = vadd.f32 %v4001, %v4006
    %v4010 = vadd.f32 %v4002, %v4007
    %s4011 = sld [smem:[#allocation4 + $0x62]]
    %v4012 = vstv %s4011
    %v4013 = vmul.f32 %v848, %v4012
    %v4014 = vmul.f32 %v842, %v4012
    %v4015 = vmul.f32 %v849, %v4012
    %4019 = vrot.lane.b32.xlu0 %v4013, 1
    %v4020 = vpop.permute.xlu0 %4019
    %4021 = vrot.lane.b32.xlu0 %v4014, 1
    %v4022 = vpop.permute.xlu0 %4021
    %4023 = vrot.lane.b32.xlu0 %v4015, 1
    %v4024 = vpop.permute.xlu0 %4023
    %v4028 = vadd.f32 %v4008, %v4020
    %v4029 = vadd.f32 %v4009, %v4022
    %v4030 = vadd.f32 %v4010, %v4024
    %s4031 = sld [smem:[#allocation4 + $0x68]]
    %v4032 = vstv %s4031
    %v4033 = vmul.f32 %v848, %v4032
    %v4034 = vmul.f32 %v842, %v4032
    %v4035 = vmul.f32 %v849, %v4032
    %v4039 = vrot.slane %v4033, 7
    %v4040 = vrot.slane %v4034, 7
    %v4041 = vsel %vm210, %v4039, %v4040
    %v4042 = vrot.slane %v4035, 7
    %v4043 = vsel %vm210, %v4040, %v4042
    %v4047 = vadd.f32 %v4028, %v4039
    %v4048 = vadd.f32 %v4029, %v4041
    %v4049 = vadd.f32 %v4030, %v4043
    %s4050 = sld [smem:[#allocation4 + $0x6a]]
    %v4051 = vstv %s4050
    %v4052 = vmul.f32 %v848, %v4051
    %v4053 = vmul.f32 %v842, %v4051
    %v4054 = vmul.f32 %v849, %v4051
    %v4058 = vrot.slane %v4052, 7
    %v4059 = vrot.slane %v4053, 7
    %v4060 = vsel %vm210, %v4058, %v4059
    %v4061 = vrot.slane %v4054, 7
    %v4062 = vsel %vm210, %v4059, %v4061
    %4063 = vrot.lane.b32.xlu0 %v4058, 1
    %v4064 = vpop.permute.xlu0 %4063
    %4065 = vrot.lane.b32.xlu0 %v4060, 1
    %v4066 = vpop.permute.xlu0 %4065
    %4067 = vrot.lane.b32.xlu0 %v4062, 1
    %v4068 = vpop.permute.xlu0 %4067
    %v4072 = vadd.f32 %v4047, %v4064
    %v4073 = vadd.f32 %v4048, %v4066
    %v4074 = vadd.f32 %v4049, %v4068
    %v4078 = vrot.slane %v4072, 2
    %v4079 = vrot.slane %v4073, 2
    %v4080 = vsel %vm1700, %v4078, %v4079
    %v4081 = vrot.slane %v4074, 2
    %v4082 = vsel %vm1700, %v4079, %v4081
    %4083 = vrot.lane.b32.xlu0 %v4080, 126
    %v4084 = vpop.permute.xlu0 %4083
    %4085 = vrot.lane.b32.xlu0 %v4082, 126
    %v4086 = vpop.permute.xlu0 %4085
    %4087 = vrot.lane.b32.xlu0 %v4081, 126
    %v4088 = vpop.permute.xlu0 %4087
    %v4089 = vsel %vm52, %v4084, 0
    %v4091 = vsel %vm52, %v4086, 0
    %v4093 = vsel %vm52, %v4088, 0
    %4095 = vmatprep.subr.mxu0 0.0
    %4096 = vmatpush1.msra.mxu0 %v877
    %4097 = vmatprep.subr.mxu0 0.0
    %4098 = vmatpush1.msra.mxu0 %v878
    %4099 = vmatprep.subr.mxu0 0.0
    %4100 = vmatpush1.msra.mxu0 %v1224
    %4101 = vmatprep.subr.mxu0 0.0
    %4102 = vmatpush1.msra.mxu0 0.0
    %4103 = vmatprep.subr.mxu0 0.0
    %4104 = vmatpush1.msra.mxu0 0.0
    %4105 = vmatprep.subr.mxu0 0.0
    %4106 = vmatpush1.msra.mxu0 0.0
    %4107 = vmatprep.subr.mxu0 0.0
    %4108 = vmatpush1.msra.mxu0 0.0
    %4109 = vmatprep.subr.mxu0 0.0
    %4110 = vmatpush1.msra.mxu0 0.0
    %4111 = vmatprep.subr.mxu0 0.0
    %4112 = vmatpush1.msra.mxu0 0.0
    %4113 = vmatprep.subr.mxu0 0.0
    %4114 = vmatpush1.msra.mxu0 0.0
    %4115 = vmatprep.subr.mxu0 0.0
    %4116 = vmatpush1.msra.mxu0 0.0
    %4117 = vmatprep.subr.mxu0 0.0
    %4118 = vmatpush1.msra.mxu0 0.0
    %4119 = vmatprep.subr.mxu0 0.0
    %4120 = vmatpush1.msra.mxu0 0.0
    %4121 = vmatprep.subr.mxu0 0.0
    %4122 = vmatpush1.msra.mxu0 0.0
    %4123 = vmatprep.subr.mxu0 0.0
    %4124 = vmatpush1.msra.mxu0 0.0
    %4125 = vmatprep.subr.mxu0 0.0
    %4126 = vmatpush1.msra.mxu0 0.0
    %4127 = vmatprep.subr.mxu0 0.0
    %4128 = vmatpush1.msra.mxu0 0.0
    %4129 = vmatprep.subr.mxu0 0.0
    %4130 = vmatpush1.msra.mxu0 0.0
    %4131 = vmatprep.subr.mxu0 0.0
    %4132 = vmatpush1.msra.mxu0 0.0
    %4133 = vmatprep.subr.mxu0 0.0
    %4134 = vmatpush1.msra.mxu0 0.0
    %4135 = vmatprep.subr.mxu0 0.0
    %4136 = vmatpush1.msra.mxu0 0.0
    %4137 = vmatprep.subr.mxu0 0.0
    %4138 = vmatpush1.msra.mxu0 0.0
    %4139 = vmatprep.subr.mxu0 0.0
    %4140 = vmatpush1.msra.mxu0 0.0
    %4141 = vmatprep.subr.mxu0 0.0
    %4142 = vmatpush1.msra.mxu0 0.0
    %4143 = vmatprep.subr.mxu0 0.0
    %4144 = vmatpush1.msra.mxu0 0.0
    %4145 = vmatprep.subr.mxu0 0.0
    %4146 = vmatpush1.msra.mxu0 0.0
    %4147 = vmatprep.subr.mxu0 0.0
    %4148 = vmatpush1.msra.mxu0 0.0
    %4149 = vmatprep.subr.mxu0 0.0
    %4150 = vmatpush1.msra.mxu0 0.0
    %4151 = vmatprep.subr.mxu0 0.0
    %4152 = vmatpush1.msra.mxu0 0.0
    %4153 = vmatprep.subr.mxu0 0.0
    %4154 = vmatpush1.msra.mxu0 0.0
    %4155 = vmatprep.subr.mxu0 0.0
    %4156 = vmatpush1.msra.mxu0 0.0
    %4157 = vmatprep.subr.mxu0 0.0
    %4158 = vmatpush1.msra.mxu0 0.0
    %4159 = vmatprep.mubr.f32.mxu0 0.0
    %4160 = vmatmul.mubr.f32.gmra.mrb[0].mxu0 %v4089
    %v4161 = vpop.f32.mrb[0].mxu0
    %v4162 = vadd.f32 0.0, %v4161
    %v4163 = vpop.f32.mrb[0].mxu0
    %4164 = vmatprep.mubr.f32.mxu0 0.0
    %4165 = vmatmul.mubr.f32.gmra.mrb[0].mxu0 %v4091
    %v4166 = vpop.f32.mrb[0].mxu0
    %v4167 = vadd.f32 0.0, %v4166
    %v4168 = vpop.f32.mrb[0].mxu0
    %4169 = vmatprep.mubr.f32.mxu0 0.0
    %4170 = vmatmul.mubr.f32.gmra.mrb[0].mxu0 %v4093
    %v4171 = vpop.f32.mrb[0].mxu0
    %v4172 = vadd.f32 0.0, %v4171
    %v4173 = vpop.f32.mrb[0].mxu0
    %4174 = vdwg.mxu0
    %v4178 = vrot.slane %v3928, 2
    %v4179 = vrot.slane %v3929, 2
    %v4180 = vsel %vm1700, %v4178, %v4179
    %v4181 = vrot.slane %v3930, 2
    %v4182 = vsel %vm1700, %v4179, %v4181
    %4183 = vrot.lane.b32.xlu0 %v4180, 127
    %v4184 = vpop.permute.xlu0 %4183
    %4185 = vrot.lane.b32.xlu0 %v4182, 127
    %v4186 = vpop.permute.xlu0 %4185
    %4187 = vrot.lane.b32.xlu0 %v4181, 127
    %v4188 = vpop.permute.xlu0 %4187
    %v4189 = vsel %vm52, %v4184, 0
    %v4191 = vsel %vm52, %v4186, 0
    %v4193 = vsel %vm52, %v4188, 0
    %4195 = vmatprep.subr.mxu0 0.0
    %4196 = vmatpush1.msra.mxu0 %v865
    %4197 = vmatprep.subr.mxu0 0.0
    %4198 = vmatpush1.msra.mxu0 %v866
    %4199 = vmatprep.subr.mxu0 0.0
    %4200 = vmatpush1.msra.mxu0 %v1327
    %4201 = vmatprep.subr.mxu0 0.0
    %4202 = vmatpush1.msra.mxu0 0.0
    %4203 = vmatprep.subr.mxu0 0.0
    %4204 = vmatpush1.msra.mxu0 0.0
    %4205 = vmatprep.subr.mxu0 0.0
    %4206 = vmatpush1.msra.mxu0 0.0
    %4207 = vmatprep.subr.mxu0 0.0
    %4208 = vmatpush1.msra.mxu0 0.0
    %4209 = vmatprep.subr.mxu0 0.0
    %4210 = vmatpush1.msra.mxu0 0.0
    %4211 = vmatprep.subr.mxu0 0.0
    %4212 = vmatpush1.msra.mxu0 0.0
    %4213 = vmatprep.subr.mxu0 0.0
    %4214 = vmatpush1.msra.mxu0 0.0
    %4215 = vmatprep.subr.mxu0 0.0
    %4216 = vmatpush1.msra.mxu0 0.0
    %4217 = vmatprep.subr.mxu0 0.0
    %4218 = vmatpush1.msra.mxu0 0.0
    %4219 = vmatprep.subr.mxu0 0.0
    %4220 = vmatpush1.msra.mxu0 0.0
    %4221 = vmatprep.subr.mxu0 0.0
    %4222 = vmatpush1.msra.mxu0 0.0
    %4223 = vmatprep.subr.mxu0 0.0
    %4224 = vmatpush1.msra.mxu0 0.0
    %4225 = vmatprep.subr.mxu0 0.0
    %4226 = vmatpush1.msra.mxu0 0.0
    %4227 = vmatprep.subr.mxu0 0.0
    %4228 = vmatpush1.msra.mxu0 0.0
    %4229 = vmatprep.subr.mxu0 0.0
    %4230 = vmatpush1.msra.mxu0 0.0
    %4231 = vmatprep.subr.mxu0 0.0
    %4232 = vmatpush1.msra.mxu0 0.0
    %4233 = vmatprep.subr.mxu0 0.0
    %4234 = vmatpush1.msra.mxu0 0.0
    %4235 = vmatprep.subr.mxu0 0.0
    %4236 = vmatpush1.msra.mxu0 0.0
    %4237 = vmatprep.subr.mxu0 0.0
    %4238 = vmatpush1.msra.mxu0 0.0
    %4239 = vmatprep.subr.mxu0 0.0
    %4240 = vmatpush1.msra.mxu0 0.0
    %4241 = vmatprep.subr.mxu0 0.0
    %4242 = vmatpush1.msra.mxu0 0.0
    %4243 = vmatprep.subr.mxu0 0.0
    %4244 = vmatpush1.msra.mxu0 0.0
    %4245 = vmatprep.subr.mxu0 0.0
    %4246 = vmatpush1.msra.mxu0 0.0
    %4247 = vmatprep.subr.mxu0 0.0
    %4248 = vmatpush1.msra.mxu0 0.0
    %4249 = vmatprep.subr.mxu0 0.0
    %4250 = vmatpush1.msra.mxu0 0.0
    %4251 = vmatprep.subr.mxu0 0.0
    %4252 = vmatpush1.msra.mxu0 0.0
    %4253 = vmatprep.subr.mxu0 0.0
    %4254 = vmatpush1.msra.mxu0 0.0
    %4255 = vmatprep.subr.mxu0 0.0
    %4256 = vmatpush1.msra.mxu0 0.0
    %4257 = vmatprep.subr.mxu0 0.0
    %4258 = vmatpush1.msra.mxu0 0.0
    %4259 = vmatprep.mubr.f32.mxu0 0.0
    %4260 = vmatmul.mubr.f32.gmra.mrb[0].mxu0 %v4189
    %v4261 = vpop.f32.mrb[0].mxu0
    %v4262 = vadd.f32 %v4162, %v4261
    %v4263 = vpop.f32.mrb[0].mxu0
    %4264 = vmatprep.mubr.f32.mxu0 0.0
    %4265 = vmatmul.mubr.f32.gmra.mrb[0].mxu0 %v4191
    %v4266 = vpop.f32.mrb[0].mxu0
    %v4267 = vadd.f32 %v4167, %v4266
    %v4268 = vpop.f32.mrb[0].mxu0
    %4269 = vmatprep.mubr.f32.mxu0 0.0
    %4270 = vmatmul.mubr.f32.gmra.mrb[0].mxu0 %v4193
    %v4271 = vpop.f32.mrb[0].mxu0
    %v4272 = vadd.f32 %v4172, %v4271
    %v4273 = vpop.f32.mrb[0].mxu0
    %4274 = vdwg.mxu0
    %v4276 = vsel %vm57, %v4272, 0
    %4278 = vmatprep.subr.mxu0 0.0
    %4279 = vmatpush1.msra.mxu0 %v4262
    %4280 = vmatprep.subr.mxu0 0.0
    %4281 = vmatpush1.msra.mxu0 %v4267
    %4282 = vmatprep.subr.mxu0 0.0
    %4283 = vmatpush1.msra.mxu0 %v4276
    %4284 = vmatprep.subr.mxu0 0.0
    %4285 = vmatpush1.msra.mxu0 0.0
    %4286 = vmatprep.subr.mxu0 0.0
    %4287 = vmatpush1.msra.mxu0 0.0
    %4288 = vmatprep.subr.mxu0 0.0
    %4289 = vmatpush1.msra.mxu0 0.0
    %4290 = vmatprep.subr.mxu0 0.0
    %4291 = vmatpush1.msra.mxu0 0.0
    %4292 = vmatprep.subr.mxu0 0.0
    %4293 = vmatpush1.msra.mxu0 0.0
    %4294 = vmatprep.subr.mxu0 0.0
    %4295 = vmatpush1.msra.mxu0 0.0
    %4296 = vmatprep.subr.mxu0 0.0
    %4297 = vmatpush1.msra.mxu0 0.0
    %4298 = vmatprep.subr.mxu0 0.0
    %4299 = vmatpush1.msra.mxu0 0.0
    %4300 = vmatprep.subr.mxu0 0.0
    %4301 = vmatpush1.msra.mxu0 0.0
    %4302 = vmatprep.subr.mxu0 0.0
    %4303 = vmatpush1.msra.mxu0 0.0
    %4304 = vmatprep.subr.mxu0 0.0
    %4305 = vmatpush1.msra.mxu0 0.0
    %4306 = vmatprep.subr.mxu0 0.0
    %4307 = vmatpush1.msra.mxu0 0.0
    %4308 = vmatprep.subr.mxu0 0.0
    %4309 = vmatpush1.msra.mxu0 0.0
    %4310 = vmatprep.subr.mxu0 0.0
    %4311 = vmatpush1.msra.mxu0 0.0
    %4312 = vmatprep.subr.mxu0 0.0
    %4313 = vmatpush1.msra.mxu0 0.0
    %4314 = vmatprep.subr.mxu0 0.0
    %4315 = vmatpush1.msra.mxu0 0.0
    %4316 = vmatprep.subr.mxu0 0.0
    %4317 = vmatpush1.msra.mxu0 0.0
    %4318 = vmatprep.subr.mxu0 0.0
    %4319 = vmatpush1.msra.mxu0 0.0
    %4320 = vmatprep.subr.mxu0 0.0
    %4321 = vmatpush1.msra.mxu0 0.0
    %4322 = vmatprep.subr.mxu0 0.0
    %4323 = vmatpush1.msra.mxu0 0.0
    %4324 = vmatprep.subr.mxu0 0.0
    %4325 = vmatpush1.msra.mxu0 0.0
    %4326 = vmatprep.subr.mxu0 0.0
    %4327 = vmatpush1.msra.mxu0 0.0
    %4328 = vmatprep.subr.mxu0 0.0
    %4329 = vmatpush1.msra.mxu0 0.0
    %4330 = vmatprep.subr.mxu0 0.0
    %4331 = vmatpush1.msra.mxu0 0.0
    %4332 = vmatprep.subr.mxu0 0.0
    %4333 = vmatpush1.msra.mxu0 0.0
    %4334 = vmatprep.subr.mxu0 0.0
    %4335 = vmatpush1.msra.mxu0 0.0
    %4336 = vmatprep.subr.mxu0 0.0
    %4337 = vmatpush1.msra.mxu0 0.0
    %4338 = vmatprep.subr.mxu0 0.0
    %4339 = vmatpush1.msra.mxu0 0.0
    %4340 = vmatprep.subr.mxu0 0.0
    %4341 = vmatpush1.msra.mxu0 0.0
    %4342 = vmatprep.mubr.f32.mxu0 0.0
    %4343 = vmatmul.mubr.f32.gmra.mrb[0].mxu0 %v1899
    %v4344 = vpop.f32.mrb[0].mxu0
    %v4345 = vadd.f32 0.0, %v4344
    %v4346 = vpop.f32.mrb[0].mxu0
    %4347 = vmatprep.mubr.f32.mxu0 0.0
    %4348 = vmatmul.mubr.f32.gmra.mrb[0].mxu0 %v1902
    %v4349 = vpop.f32.mrb[0].mxu0
    %v4350 = vadd.f32 0.0, %v4349
    %v4351 = vpop.f32.mrb[0].mxu0
    %4352 = vmatprep.mubr.f32.mxu0 0.0
    %4353 = vmatmul.mubr.f32.gmra.mrb[0].mxu0 %v1905
    %v4354 = vpop.f32.mrb[0].mxu0
    %v4355 = vadd.f32 0.0, %v4354
    %v4356 = vpop.f32.mrb[0].mxu0
    %4357 = vmatprep.mubr.f32.mxu0 0.0
    %4358 = vmatmul.mubr.f32.gmra.mrb[0].mxu0 %v1908
    %v4359 = vpop.f32.mrb[0].mxu0
    %v4360 = vadd.f32 0.0, %v4359
    %v4361 = vpop.f32.mrb[0].mxu0
    %4362 = vmatprep.mubr.f32.mxu0 0.0
    %4363 = vmatmul.mubr.f32.gmra.mrb[0].mxu0 %v1911
    %v4364 = vpop.f32.mrb[0].mxu0
    %v4365 = vadd.f32 0.0, %v4364
    %v4366 = vpop.f32.mrb[0].mxu0
    %4367 = vdwg.mxu0
    %v4369 = vsel %vm57, %v3784, 0
    %4371 = vmatprep.subr.mxu0 0.0
    %4372 = vmatpush1.msra.mxu0 %v3774
    %4373 = vmatprep.subr.mxu0 0.0
    %4374 = vmatpush1.msra.mxu0 %v3779
    %4375 = vmatprep.subr.mxu0 0.0
    %4376 = vmatpush1.msra.mxu0 %v4369
    %4377 = vmatprep.subr.mxu0 0.0
    %4378 = vmatpush1.msra.mxu0 0.0
    %4379 = vmatprep.subr.mxu0 0.0
    %4380 = vmatpush1.msra.mxu0 0.0
    %4381 = vmatprep.subr.mxu0 0.0
    %4382 = vmatpush1.msra.mxu0 0.0
    %4383 = vmatprep.subr.mxu0 0.0
    %4384 = vmatpush1.msra.mxu0 0.0
    %4385 = vmatprep.subr.mxu0 0.0
    %4386 = vmatpush1.msra.mxu0 0.0
    %4387 = vmatprep.subr.mxu0 0.0
    %4388 = vmatpush1.msra.mxu0 0.0
    %4389 = vmatprep.subr.mxu0 0.0
    %4390 = vmatpush1.msra.mxu0 0.0
    %4391 = vmatprep.subr.mxu0 0.0
    %4392 = vmatpush1.msra.mxu0 0.0
    %4393 = vmatprep.subr.mxu0 0.0
    %4394 = vmatpush1.msra.mxu0 0.0
    %4395 = vmatprep.subr.mxu0 0.0
    %4396 = vmatpush1.msra.mxu0 0.0
    %4397 = vmatprep.subr.mxu0 0.0
    %4398 = vmatpush1.msra.mxu0 0.0
    %4399 = vmatprep.subr.mxu0 0.0
    %4400 = vmatpush1.msra.mxu0 0.0
    %4401 = vmatprep.subr.mxu0 0.0
    %4402 = vmatpush1.msra.mxu0 0.0
    %4403 = vmatprep.subr.mxu0 0.0
    %4404 = vmatpush1.msra.mxu0 0.0
    %4405 = vmatprep.subr.mxu0 0.0
    %4406 = vmatpush1.msra.mxu0 0.0
    %4407 = vmatprep.subr.mxu0 0.0
    %4408 = vmatpush1.msra.mxu0 0.0
    %4409 = vmatprep.subr.mxu0 0.0
    %4410 = vmatpush1.msra.mxu0 0.0
    %4411 = vmatprep.subr.mxu0 0.0
    %4412 = vmatpush1.msra.mxu0 0.0
    %4413 = vmatprep.subr.mxu0 0.0
    %4414 = vmatpush1.msra.mxu0 0.0
    %4415 = vmatprep.subr.mxu0 0.0
    %4416 = vmatpush1.msra.mxu0 0.0
    %4417 = vmatprep.subr.mxu0 0.0
    %4418 = vmatpush1.msra.mxu0 0.0
    %4419 = vmatprep.subr.mxu0 0.0
    %4420 = vmatpush1.msra.mxu0 0.0
    %4421 = vmatprep.subr.mxu0 0.0
    %4422 = vmatpush1.msra.mxu0 0.0
    %4423 = vmatprep.subr.mxu0 0.0
    %4424 = vmatpush1.msra.mxu0 0.0
    %4425 = vmatprep.subr.mxu0 0.0
    %4426 = vmatpush1.msra.mxu0 0.0
    %4427 = vmatprep.subr.mxu0 0.0
    %4428 = vmatpush1.msra.mxu0 0.0
    %4429 = vmatprep.subr.mxu0 0.0
    %4430 = vmatpush1.msra.mxu0 0.0
    %4431 = vmatprep.subr.mxu0 0.0
    %4432 = vmatpush1.msra.mxu0 0.0
    %4433 = vmatprep.subr.mxu0 0.0
    %4434 = vmatpush1.msra.mxu0 0.0
    %4435 = vmatprep.mubr.f32.mxu0 0.0
    %4436 = vmatmul.mubr.f32.gmra.mrb[0].mxu0 %v2007
    %v4437 = vpop.f32.mrb[0].mxu0
    %v4438 = vadd.f32 %v4345, %v4437
    %v4439 = vpop.f32.mrb[0].mxu0
    %4440 = vmatprep.mubr.f32.mxu0 0.0
    %4441 = vmatmul.mubr.f32.gmra.mrb[0].mxu0 %v2010
    %v4442 = vpop.f32.mrb[0].mxu0
    %v4443 = vadd.f32 %v4350, %v4442
    %v4444 = vpop.f32.mrb[0].mxu0
    %4445 = vmatprep.mubr.f32.mxu0 0.0
    %4446 = vmatmul.mubr.f32.gmra.mrb[0].mxu0 %v2013
    %v4447 = vpop.f32.mrb[0].mxu0
    %v4448 = vadd.f32 %v4355, %v4447
    %v4449 = vpop.f32.mrb[0].mxu0
    %4450 = vmatprep.mubr.f32.mxu0 0.0
    %4451 = vmatmul.mubr.f32.gmra.mrb[0].mxu0 %v2016
    %v4452 = vpop.f32.mrb[0].mxu0
    %v4453 = vadd.f32 %v4360, %v4452
    %v4454 = vpop.f32.mrb[0].mxu0
    %4455 = vmatprep.mubr.f32.mxu0 0.0
    %4456 = vmatmul.mubr.f32.gmra.mrb[0].mxu0 %v2019
    %v4457 = vpop.f32.mrb[0].mxu0
    %v4458 = vadd.f32 %v4365, %v4457
    %v4459 = vpop.f32.mrb[0].mxu0
    %4460 = vdwg.mxu0
    %v4461 = vmax.f32 %v4438, 0.0
    %v4462 = vmax.f32 %v4443, 0.0
    %v4463 = vmax.f32 %v4448, 0.0
    %v4464 = vmax.f32 %v4453, 0.0
    %v4465 = vmax.f32 %v4458, 0.0
    %s4466 = scalar_lea.vmem %s3, 80
    %4467 = vst.msk [vmem:[%s4466] sm:$0xff] %vm2119, %v4461
    %4468 = vst.msk [vmem:[%s4466 + $0x8] sm:$0xff] %vm2119, %v4462
    %4469 = vst.msk [vmem:[%s4466 + $0x10] sm:$0xff] %vm2119, %v4463
    %4470 = vst.msk [vmem:[%s4466 + $0x18] sm:$0xff] %vm2119, %v4464
    %4471 = vst.msk [vmem:[%s4466 + $0x20] sm:$0x3f] %vm2124, %v4465
    %s4472 = sld [smem:[#allocation4 + $0x35]]
    %v4473 = vstv %s4472
    %v4474 = vmul.f32 %v808, %v4473
    %v4475 = vmul.f32 %v802, %v4473
    %v4476 = vmul.f32 %v810, %v4473
    %v4477 = vadd.f32 %v4474, 0.0
    %v4478 = vadd.f32 %v4475, 0.0
    %v4479 = vadd.f32 %v4476, 0.0
    %s4480 = sld [smem:[#allocation4 + $0x37]]
    %v4481 = vstv %s4480
    %v4482 = vmul.f32 %v808, %v4481
    %v4483 = vmul.f32 %v802, %v4481
    %v4484 = vmul.f32 %v810, %v4481
    %4488 = vrot.lane.b32.xlu0 %v4482, 1
    %v4489 = vpop.permute.xlu0 %4488
    %4490 = vrot.lane.b32.xlu0 %v4483, 1
    %v4491 = vpop.permute.xlu0 %4490
    %4492 = vrot.lane.b32.xlu0 %v4484, 1
    %v4493 = vpop.permute.xlu0 %4492
    %v4497 = vadd.f32 %v4477, %v4489
    %v4498 = vadd.f32 %v4478, %v4491
    %v4499 = vadd.f32 %v4479, %v4493
    %s4500 = sld [smem:[#allocation4 + $0x3d]]
    %v4501 = vstv %s4500
    %v4502 = vmul.f32 %v808, %v4501
    %v4503 = vmul.f32 %v802, %v4501
    %v4504 = vmul.f32 %v810, %v4501
    %v4508 = vrot.slane %v4502, 7
    %v4509 = vrot.slane %v4503, 7
    %v4510 = vsel %vm210, %v4508, %v4509
    %v4511 = vrot.slane %v4504, 7
    %v4512 = vsel %vm210, %v4509, %v4511
    %v4516 = vadd.f32 %v4497, %v4508
    %v4517 = vadd.f32 %v4498, %v4510
    %v4518 = vadd.f32 %v4499, %v4512
    %s4519 = sld [smem:[#allocation4 + $0x3f]]
    %v4520 = vstv %s4519
    %v4521 = vmul.f32 %v808, %v4520
    %v4522 = vmul.f32 %v802, %v4520
    %v4523 = vmul.f32 %v810, %v4520
    %v4527 = vrot.slane %v4521, 7
    %v4528 = vrot.slane %v4522, 7
    %v4529 = vsel %vm210, %v4527, %v4528
    %v4530 = vrot.slane %v4523, 7
    %v4531 = vsel %vm210, %v4528, %v4530
    %4532 = vrot.lane.b32.xlu0 %v4527, 1
    %v4533 = vpop.permute.xlu0 %4532
    %4534 = vrot.lane.b32.xlu0 %v4529, 1
    %v4535 = vpop.permute.xlu0 %4534
    %4536 = vrot.lane.b32.xlu0 %v4531, 1
    %v4537 = vpop.permute.xlu0 %4536
    %v4541 = vadd.f32 %v4516, %v4533
    %v4542 = vadd.f32 %v4517, %v4535
    %v4543 = vadd.f32 %v4518, %v4537
    %s4544 = sld [smem:[#allocation4 + $0x75]]
    %v4545 = vstv %s4544
    %v4546 = vmul.f32 %v848, %v4545
    %v4547 = vmul.f32 %v842, %v4545
    %v4548 = vmul.f32 %v849, %v4545
    %v4549 = vadd.f32 %v4541, %v4546
    %v4550 = vadd.f32 %v4542, %v4547
    %v4551 = vadd.f32 %v4543, %v4548
    %s4552 = sld [smem:[#allocation4 + $0x77]]
    %v4553 = vstv %s4552
    %v4554 = vmul.f32 %v848, %v4553
    %v4555 = vmul.f32 %v842, %v4553
    %v4556 = vmul.f32 %v849, %v4553
    %4560 = vrot.lane.b32.xlu0 %v4554, 1
    %v4561 = vpop.permute.xlu0 %4560
    %4562 = vrot.lane.b32.xlu0 %v4555, 1
    %v4563 = vpop.permute.xlu0 %4562
    %4564 = vrot.lane.b32.xlu0 %v4556, 1
    %v4565 = vpop.permute.xlu0 %4564
    %v4569 = vadd.f32 %v4549, %v4561
    %v4570 = vadd.f32 %v4550, %v4563
    %v4571 = vadd.f32 %v4551, %v4565
    %s4572 = sld [smem:[#allocation4 + $0x7d]]
    %v4573 = vstv %s4572
    %v4574 = vmul.f32 %v848, %v4573
    %v4575 = vmul.f32 %v842, %v4573
    %v4576 = vmul.f32 %v849, %v4573
    %v4580 = vrot.slane %v4574, 7
    %v4581 = vrot.slane %v4575, 7
    %v4582 = vsel %vm210, %v4580, %v4581
    %v4583 = vrot.slane %v4576, 7
    %v4584 = vsel %vm210, %v4581, %v4583
    %v4588 = vadd.f32 %v4569, %v4580
    %v4589 = vadd.f32 %v4570, %v4582
    %v4590 = vadd.f32 %v4571, %v4584
    %s4591 = sld [smem:[#allocation4 + $0x7f]]
    %v4592 = vstv %s4591
    %v4593 = vmul.f32 %v848, %v4592
    %v4594 = vmul.f32 %v842, %v4592
    %v4595 = vmul.f32 %v849, %v4592
    %v4599 = vrot.slane %v4593, 7
    %v4600 = vrot.slane %v4594, 7
    %v4601 = vsel %vm210, %v4599, %v4600
    %v4602 = vrot.slane %v4595, 7
    %v4603 = vsel %vm210, %v4600, %v4602
    %4604 = vrot.lane.b32.xlu0 %v4599, 1
    %v4605 = vpop.permute.xlu0 %4604
    %4606 = vrot.lane.b32.xlu0 %v4601, 1
    %v4607 = vpop.permute.xlu0 %4606
    %4608 = vrot.lane.b32.xlu0 %v4603, 1
    %v4609 = vpop.permute.xlu0 %4608
    %v4613 = vadd.f32 %v4588, %v4605
    %v4614 = vadd.f32 %v4589, %v4607
    %v4615 = vadd.f32 %v4590, %v4609
    %s4616 = sld [smem:[#allocation4 + $0x34]]
    %v4617 = vstv %s4616
    %v4618 = vmul.f32 %v808, %v4617
    %v4619 = vmul.f32 %v802, %v4617
    %v4620 = vmul.f32 %v810, %v4617
    %v4621 = vadd.f32 %v4618, 0.0
    %v4622 = vadd.f32 %v4619, 0.0
    %v4623 = vadd.f32 %v4620, 0.0
    %s4624 = sld [smem:[#allocation4 + $0x36]]
    %v4625 = vstv %s4624
    %v4626 = vmul.f32 %v808, %v4625
    %v4627 = vmul.f32 %v802, %v4625
    %v4628 = vmul.f32 %v810, %v4625
    %4632 = vrot.lane.b32.xlu0 %v4626, 1
    %v4633 = vpop.permute.xlu0 %4632
    %4634 = vrot.lane.b32.xlu0 %v4627, 1
    %v4635 = vpop.permute.xlu0 %4634
    %4636 = vrot.lane.b32.xlu0 %v4628, 1
    %v4637 = vpop.permute.xlu0 %4636
    %v4641 = vadd.f32 %v4621, %v4633
    %v4642 = vadd.f32 %v4622, %v4635
    %v4643 = vadd.f32 %v4623, %v4637
    %s4644 = sld [smem:[#allocation4 + $0x3c]]
    %v4645 = vstv %s4644
    %v4646 = vmul.f32 %v808, %v4645
    %v4647 = vmul.f32 %v802, %v4645
    %v4648 = vmul.f32 %v810, %v4645
    %v4652 = vrot.slane %v4646, 7
    %v4653 = vrot.slane %v4647, 7
    %v4654 = vsel %vm210, %v4652, %v4653
    %v4655 = vrot.slane %v4648, 7
    %v4656 = vsel %vm210, %v4653, %v4655
    %v4660 = vadd.f32 %v4641, %v4652
    %v4661 = vadd.f32 %v4642, %v4654
    %v4662 = vadd.f32 %v4643, %v4656
    %s4663 = sld [smem:[#allocation4 + $0x3e]]
    %v4664 = vstv %s4663
    %v4665 = vmul.f32 %v808, %v4664
    %v4666 = vmul.f32 %v802, %v4664
    %v4667 = vmul.f32 %v810, %v4664
    %v4671 = vrot.slane %v4665, 7
    %v4672 = vrot.slane %v4666, 7
    %v4673 = vsel %vm210, %v4671, %v4672
    %v4674 = vrot.slane %v4667, 7
    %v4675 = vsel %vm210, %v4672, %v4674
    %4676 = vrot.lane.b32.xlu0 %v4671, 1
    %v4677 = vpop.permute.xlu0 %4676
    %4678 = vrot.lane.b32.xlu0 %v4673, 1
    %v4679 = vpop.permute.xlu0 %4678
    %4680 = vrot.lane.b32.xlu0 %v4675, 1
    %v4681 = vpop.permute.xlu0 %4680
    %v4685 = vadd.f32 %v4660, %v4677
    %v4686 = vadd.f32 %v4661, %v4679
    %v4687 = vadd.f32 %v4662, %v4681
    %s4688 = sld [smem:[#allocation4 + $0x74]]
    %v4689 = vstv %s4688
    %v4690 = vmul.f32 %v848, %v4689
    %v4691 = vmul.f32 %v842, %v4689
    %v4692 = vmul.f32 %v849, %v4689
    %v4693 = vadd.f32 %v4685, %v4690
    %v4694 = vadd.f32 %v4686, %v4691
    %v4695 = vadd.f32 %v4687, %v4692
    %s4696 = sld [smem:[#allocation4 + $0x76]]
    %v4697 = vstv %s4696
    %v4698 = vmul.f32 %v848, %v4697
    %v4699 = vmul.f32 %v842, %v4697
    %v4700 = vmul.f32 %v849, %v4697
    %4704 = vrot.lane.b32.xlu0 %v4698, 1
    %v4705 = vpop.permute.xlu0 %4704
    %4706 = vrot.lane.b32.xlu0 %v4699, 1
    %v4707 = vpop.permute.xlu0 %4706
    %4708 = vrot.lane.b32.xlu0 %v4700, 1
    %v4709 = vpop.permute.xlu0 %4708
    %v4713 = vadd.f32 %v4693, %v4705
    %v4714 = vadd.f32 %v4694, %v4707
    %v4715 = vadd.f32 %v4695, %v4709
    %s4716 = sld [smem:[#allocation4 + $0x7c]]
    %v4717 = vstv %s4716
    %v4718 = vmul.f32 %v848, %v4717
    %v4719 = vmul.f32 %v842, %v4717
    %v4720 = vmul.f32 %v849, %v4717
    %v4724 = vrot.slane %v4718, 7
    %v4725 = vrot.slane %v4719, 7
    %v4726 = vsel %vm210, %v4724, %v4725
    %v4727 = vrot.slane %v4720, 7
    %v4728 = vsel %vm210, %v4725, %v4727
    %v4732 = vadd.f32 %v4713, %v4724
    %v4733 = vadd.f32 %v4714, %v4726
    %v4734 = vadd.f32 %v4715, %v4728
    %s4735 = sld [smem:[#allocation4 + $0x7e]]
    %v4736 = vstv %s4735
    %v4737 = vmul.f32 %v848, %v4736
    %v4738 = vmul.f32 %v842, %v4736
    %v4739 = vmul.f32 %v849, %v4736
    %v4743 = vrot.slane %v4737, 7
    %v4744 = vrot.slane %v4738, 7
    %v4745 = vsel %vm210, %v4743, %v4744
    %v4746 = vrot.slane %v4739, 7
    %v4747 = vsel %vm210, %v4744, %v4746
    %4748 = vrot.lane.b32.xlu0 %v4743, 1
    %v4749 = vpop.permute.xlu0 %4748
    %4750 = vrot.lane.b32.xlu0 %v4745, 1
    %v4751 = vpop.permute.xlu0 %4750
    %4752 = vrot.lane.b32.xlu0 %v4747, 1
    %v4753 = vpop.permute.xlu0 %4752
    %v4757 = vadd.f32 %v4732, %v4749
    %v4758 = vadd.f32 %v4733, %v4751
    %v4759 = vadd.f32 %v4734, %v4753
    %v4763 = vrot.slane %v4757, 1
    %v4764 = vrot.slane %v4758, 1
    %v4765 = vsel %vm1205, %v4763, %v4764
    %v4766 = vrot.slane %v4759, 1
    %v4767 = vsel %vm1205, %v4764, %v4766
    %4768 = vrot.lane.b32.xlu0 %v4765, 126
    %v4769 = vpop.permute.xlu0 %4768
    %4770 = vrot.lane.b32.xlu0 %v4767, 126
    %v4771 = vpop.permute.xlu0 %4770
    %4772 = vrot.lane.b32.xlu0 %v4766, 126
    %v4773 = vpop.permute.xlu0 %4772
    %v4774 = vsel %vm52, %v4769, 0
    %v4776 = vsel %vm52, %v4771, 0
    %v4778 = vsel %vm52, %v4773, 0
    %4780 = vmatprep.subr.mxu0 0.0
    %4781 = vmatpush1.msra.mxu0 %v877
    %4782 = vmatprep.subr.mxu0 0.0
    %4783 = vmatpush1.msra.mxu0 %v878
    %4784 = vmatprep.subr.mxu0 0.0
    %4785 = vmatpush1.msra.mxu0 %v1224
    %4786 = vmatprep.subr.mxu0 0.0
    %4787 = vmatpush1.msra.mxu0 0.0
    %4788 = vmatprep.subr.mxu0 0.0
    %4789 = vmatpush1.msra.mxu0 0.0
    %4790 = vmatprep.subr.mxu0 0.0
    %4791 = vmatpush1.msra.mxu0 0.0
    %4792 = vmatprep.subr.mxu0 0.0
    %4793 = vmatpush1.msra.mxu0 0.0
    %4794 = vmatprep.subr.mxu0 0.0
    %4795 = vmatpush1.msra.mxu0 0.0
    %4796 = vmatprep.subr.mxu0 0.0
    %4797 = vmatpush1.msra.mxu0 0.0
    %4798 = vmatprep.subr.mxu0 0.0
    %4799 = vmatpush1.msra.mxu0 0.0
    %4800 = vmatprep.subr.mxu0 0.0
    %4801 = vmatpush1.msra.mxu0 0.0
    %4802 = vmatprep.subr.mxu0 0.0
    %4803 = vmatpush1.msra.mxu0 0.0
    %4804 = vmatprep.subr.mxu0 0.0
    %4805 = vmatpush1.msra.mxu0 0.0
    %4806 = vmatprep.subr.mxu0 0.0
    %4807 = vmatpush1.msra.mxu0 0.0
    %4808 = vmatprep.subr.mxu0 0.0
    %4809 = vmatpush1.msra.mxu0 0.0
    %4810 = vmatprep.subr.mxu0 0.0
    %4811 = vmatpush1.msra.mxu0 0.0
    %4812 = vmatprep.subr.mxu0 0.0
    %4813 = vmatpush1.msra.mxu0 0.0
    %4814 = vmatprep.subr.mxu0 0.0
    %4815 = vmatpush1.msra.mxu0 0.0
    %4816 = vmatprep.subr.mxu0 0.0
    %4817 = vmatpush1.msra.mxu0 0.0
    %4818 = vmatprep.subr.mxu0 0.0
    %4819 = vmatpush1.msra.mxu0 0.0
    %4820 = vmatprep.subr.mxu0 0.0
    %4821 = vmatpush1.msra.mxu0 0.0
    %4822 = vmatprep.subr.mxu0 0.0
    %4823 = vmatpush1.msra.mxu0 0.0
    %4824 = vmatprep.subr.mxu0 0.0
    %4825 = vmatpush1.msra.mxu0 0.0
    %4826 = vmatprep.subr.mxu0 0.0
    %4827 = vmatpush1.msra.mxu0 0.0
    %4828 = vmatprep.subr.mxu0 0.0
    %4829 = vmatpush1.msra.mxu0 0.0
    %4830 = vmatprep.subr.mxu0 0.0
    %4831 = vmatpush1.msra.mxu0 0.0
    %4832 = vmatprep.subr.mxu0 0.0
    %4833 = vmatpush1.msra.mxu0 0.0
    %4834 = vmatprep.subr.mxu0 0.0
    %4835 = vmatpush1.msra.mxu0 0.0
    %4836 = vmatprep.subr.mxu0 0.0
    %4837 = vmatpush1.msra.mxu0 0.0
    %4838 = vmatprep.subr.mxu0 0.0
    %4839 = vmatpush1.msra.mxu0 0.0
    %4840 = vmatprep.subr.mxu0 0.0
    %4841 = vmatpush1.msra.mxu0 0.0
    %4842 = vmatprep.subr.mxu0 0.0
    %4843 = vmatpush1.msra.mxu0 0.0
    %4844 = vmatprep.mubr.f32.mxu0 0.0
    %4845 = vmatmul.mubr.f32.gmra.mrb[0].mxu0 %v4774
    %v4846 = vpop.f32.mrb[0].mxu0
    %v4847 = vadd.f32 0.0, %v4846
    %v4848 = vpop.f32.mrb[0].mxu0
    %4849 = vmatprep.mubr.f32.mxu0 0.0
    %4850 = vmatmul.mubr.f32.gmra.mrb[0].mxu0 %v4776
    %v4851 = vpop.f32.mrb[0].mxu0
    %v4852 = vadd.f32 0.0, %v4851
    %v4853 = vpop.f32.mrb[0].mxu0
    %4854 = vmatprep.mubr.f32.mxu0 0.0
    %4855 = vmatmul.mubr.f32.gmra.mrb[0].mxu0 %v4778
    %v4856 = vpop.f32.mrb[0].mxu0
    %v4857 = vadd.f32 0.0, %v4856
    %v4858 = vpop.f32.mrb[0].mxu0
    %4859 = vdwg.mxu0
    %v4863 = vrot.slane %v4613, 1
    %v4864 = vrot.slane %v4614, 1
    %v4865 = vsel %vm1205, %v4863, %v4864
    %v4866 = vrot.slane %v4615, 1
    %v4867 = vsel %vm1205, %v4864, %v4866
    %4868 = vrot.lane.b32.xlu0 %v4865, 127
    %v4869 = vpop.permute.xlu0 %4868
    %4870 = vrot.lane.b32.xlu0 %v4867, 127
    %v4871 = vpop.permute.xlu0 %4870
    %4872 = vrot.lane.b32.xlu0 %v4866, 127
    %v4873 = vpop.permute.xlu0 %4872
    %v4874 = vsel %vm52, %v4869, 0
    %v4876 = vsel %vm52, %v4871, 0
    %v4878 = vsel %vm52, %v4873, 0
    %4880 = vmatprep.subr.mxu0 0.0
    %4881 = vmatpush1.msra.mxu0 %v865
    %4882 = vmatprep.subr.mxu0 0.0
    %4883 = vmatpush1.msra.mxu0 %v866
    %4884 = vmatprep.subr.mxu0 0.0
    %4885 = vmatpush1.msra.mxu0 %v1327
    %4886 = vmatprep.subr.mxu0 0.0
    %4887 = vmatpush1.msra.mxu0 0.0
    %4888 = vmatprep.subr.mxu0 0.0
    %4889 = vmatpush1.msra.mxu0 0.0
    %4890 = vmatprep.subr.mxu0 0.0
    %4891 = vmatpush1.msra.mxu0 0.0
    %4892 = vmatprep.subr.mxu0 0.0
    %4893 = vmatpush1.msra.mxu0 0.0
    %4894 = vmatprep.subr.mxu0 0.0
    %4895 = vmatpush1.msra.mxu0 0.0
    %4896 = vmatprep.subr.mxu0 0.0
    %4897 = vmatpush1.msra.mxu0 0.0
    %4898 = vmatprep.subr.mxu0 0.0
    %4899 = vmatpush1.msra.mxu0 0.0
    %4900 = vmatprep.subr.mxu0 0.0
    %4901 = vmatpush1.msra.mxu0 0.0
    %4902 = vmatprep.subr.mxu0 0.0
    %4903 = vmatpush1.msra.mxu0 0.0
    %4904 = vmatprep.subr.mxu0 0.0
    %4905 = vmatpush1.msra.mxu0 0.0
    %4906 = vmatprep.subr.mxu0 0.0
    %4907 = vmatpush1.msra.mxu0 0.0
    %4908 = vmatprep.subr.mxu0 0.0
    %4909 = vmatpush1.msra.mxu0 0.0
    %4910 = vmatprep.subr.mxu0 0.0
    %4911 = vmatpush1.msra.mxu0 0.0
    %4912 = vmatprep.subr.mxu0 0.0
    %4913 = vmatpush1.msra.mxu0 0.0
    %4914 = vmatprep.subr.mxu0 0.0
    %4915 = vmatpush1.msra.mxu0 0.0
    %4916 = vmatprep.subr.mxu0 0.0
    %4917 = vmatpush1.msra.mxu0 0.0
    %4918 = vmatprep.subr.mxu0 0.0
    %4919 = vmatpush1.msra.mxu0 0.0
    %4920 = vmatprep.subr.mxu0 0.0
    %4921 = vmatpush1.msra.mxu0 0.0
    %4922 = vmatprep.subr.mxu0 0.0
    %4923 = vmatpush1.msra.mxu0 0.0
    %4924 = vmatprep.subr.mxu0 0.0
    %4925 = vmatpush1.msra.mxu0 0.0
    %4926 = vmatprep.subr.mxu0 0.0
    %4927 = vmatpush1.msra.mxu0 0.0
    %4928 = vmatprep.subr.mxu0 0.0
    %4929 = vmatpush1.msra.mxu0 0.0
    %4930 = vmatprep.subr.mxu0 0.0
    %4931 = vmatpush1.msra.mxu0 0.0
    %4932 = vmatprep.subr.mxu0 0.0
    %4933 = vmatpush1.msra.mxu0 0.0
    %4934 = vmatprep.subr.mxu0 0.0
    %4935 = vmatpush1.msra.mxu0 0.0
    %4936 = vmatprep.subr.mxu0 0.0
    %4937 = vmatpush1.msra.mxu0 0.0
    %4938 = vmatprep.subr.mxu0 0.0
    %4939 = vmatpush1.msra.mxu0 0.0
    %4940 = vmatprep.subr.mxu0 0.0
    %4941 = vmatpush1.msra.mxu0 0.0
    %4942 = vmatprep.subr.mxu0 0.0
    %4943 = vmatpush1.msra.mxu0 0.0
    %4944 = vmatprep.mubr.f32.mxu0 0.0
    %4945 = vmatmul.mubr.f32.gmra.mrb[0].mxu0 %v4874
    %v4946 = vpop.f32.mrb[0].mxu0
    %v4947 = vadd.f32 %v4847, %v4946
    %v4948 = vpop.f32.mrb[0].mxu0
    %4949 = vmatprep.mubr.f32.mxu0 0.0
    %4950 = vmatmul.mubr.f32.gmra.mrb[0].mxu0 %v4876
    %v4951 = vpop.f32.mrb[0].mxu0
    %v4952 = vadd.f32 %v4852, %v4951
    %v4953 = vpop.f32.mrb[0].mxu0
    %4954 = vmatprep.mubr.f32.mxu0 0.0
    %4955 = vmatmul.mubr.f32.gmra.mrb[0].mxu0 %v4878
    %v4956 = vpop.f32.mrb[0].mxu0
    %v4957 = vadd.f32 %v4857, %v4956
    %v4958 = vpop.f32.mrb[0].mxu0
    %4959 = vdwg.mxu0
    %s4960 = sld [smem:[#allocation4 + $0x31]]
    %v4961 = vstv %s4960
    %v4962 = vmul.f32 %v808, %v4961
    %v4963 = vmul.f32 %v802, %v4961
    %v4964 = vmul.f32 %v810, %v4961
    %v4965 = vadd.f32 %v4962, 0.0
    %v4966 = vadd.f32 %v4963, 0.0
    %v4967 = vadd.f32 %v4964, 0.0
    %s4968 = sld [smem:[#allocation4 + $0x33]]
    %v4969 = vstv %s4968
    %v4970 = vmul.f32 %v808, %v4969
    %v4971 = vmul.f32 %v802, %v4969
    %v4972 = vmul.f32 %v810, %v4969
    %4976 = vrot.lane.b32.xlu0 %v4970, 1
    %v4977 = vpop.permute.xlu0 %4976
    %4978 = vrot.lane.b32.xlu0 %v4971, 1
    %v4979 = vpop.permute.xlu0 %4978
    %4980 = vrot.lane.b32.xlu0 %v4972, 1
    %v4981 = vpop.permute.xlu0 %4980
    %v4985 = vadd.f32 %v4965, %v4977
    %v4986 = vadd.f32 %v4966, %v4979
    %v4987 = vadd.f32 %v4967, %v4981
    %s4988 = sld [smem:[#allocation4 + $0x39]]
    %v4989 = vstv %s4988
    %v4990 = vmul.f32 %v808, %v4989
    %v4991 = vmul.f32 %v802, %v4989
    %v4992 = vmul.f32 %v810, %v4989
    %v4996 = vrot.slane %v4990, 7
    %v4997 = vrot.slane %v4991, 7
    %v4998 = vsel %vm210, %v4996, %v4997
    %v4999 = vrot.slane %v4992, 7
    %v5000 = vsel %vm210, %v4997, %v4999
    %v5004 = vadd.f32 %v4985, %v4996
    %v5005 = vadd.f32 %v4986, %v4998
    %v5006 = vadd.f32 %v4987, %v5000
    %s5007 = sld [smem:[#allocation4 + $0x3b]]
    %v5008 = vstv %s5007
    %v5009 = vmul.f32 %v808, %v5008
    %v5010 = vmul.f32 %v802, %v5008
    %v5011 = vmul.f32 %v810, %v5008
    %v5015 = vrot.slane %v5009, 7
    %v5016 = vrot.slane %v5010, 7
    %v5017 = vsel %vm210, %v5015, %v5016
    %v5018 = vrot.slane %v5011, 7
    %v5019 = vsel %vm210, %v5016, %v5018
    %5020 = vrot.lane.b32.xlu0 %v5015, 1
    %v5021 = vpop.permute.xlu0 %5020
    %5022 = vrot.lane.b32.xlu0 %v5017, 1
    %v5023 = vpop.permute.xlu0 %5022
    %5024 = vrot.lane.b32.xlu0 %v5019, 1
    %v5025 = vpop.permute.xlu0 %5024
    %v5029 = vadd.f32 %v5004, %v5021
    %v5030 = vadd.f32 %v5005, %v5023
    %v5031 = vadd.f32 %v5006, %v5025
    %s5032 = sld [smem:[#allocation4 + $0x71]]
    %v5033 = vstv %s5032
    %v5034 = vmul.f32 %v848, %v5033
    %v5035 = vmul.f32 %v842, %v5033
    %v5036 = vmul.f32 %v849, %v5033
    %v5037 = vadd.f32 %v5029, %v5034
    %v5038 = vadd.f32 %v5030, %v5035
    %v5039 = vadd.f32 %v5031, %v5036
    %s5040 = sld [smem:[#allocation4 + $0x73]]
    %v5041 = vstv %s5040
    %v5042 = vmul.f32 %v848, %v5041
    %v5043 = vmul.f32 %v842, %v5041
    %v5044 = vmul.f32 %v849, %v5041
    %5048 = vrot.lane.b32.xlu0 %v5042, 1
    %v5049 = vpop.permute.xlu0 %5048
    %5050 = vrot.lane.b32.xlu0 %v5043, 1
    %v5051 = vpop.permute.xlu0 %5050
    %5052 = vrot.lane.b32.xlu0 %v5044, 1
    %v5053 = vpop.permute.xlu0 %5052
    %v5057 = vadd.f32 %v5037, %v5049
    %v5058 = vadd.f32 %v5038, %v5051
    %v5059 = vadd.f32 %v5039, %v5053
    %s5060 = sld [smem:[#allocation4 + $0x79]]
    %v5061 = vstv %s5060
    %v5062 = vmul.f32 %v848, %v5061
    %v5063 = vmul.f32 %v842, %v5061
    %v5064 = vmul.f32 %v849, %v5061
    %v5068 = vrot.slane %v5062, 7
    %v5069 = vrot.slane %v5063, 7
    %v5070 = vsel %vm210, %v5068, %v5069
    %v5071 = vrot.slane %v5064, 7
    %v5072 = vsel %vm210, %v5069, %v5071
    %v5076 = vadd.f32 %v5057, %v5068
    %v5077 = vadd.f32 %v5058, %v5070
    %v5078 = vadd.f32 %v5059, %v5072
    %s5079 = sld [smem:[#allocation4 + $0x7b]]
    %v5080 = vstv %s5079
    %v5081 = vmul.f32 %v848, %v5080
    %v5082 = vmul.f32 %v842, %v5080
    %v5083 = vmul.f32 %v849, %v5080
    %v5087 = vrot.slane %v5081, 7
    %v5088 = vrot.slane %v5082, 7
    %v5089 = vsel %vm210, %v5087, %v5088
    %v5090 = vrot.slane %v5083, 7
    %v5091 = vsel %vm210, %v5088, %v5090
    %5092 = vrot.lane.b32.xlu0 %v5087, 1
    %v5093 = vpop.permute.xlu0 %5092
    %5094 = vrot.lane.b32.xlu0 %v5089, 1
    %v5095 = vpop.permute.xlu0 %5094
    %5096 = vrot.lane.b32.xlu0 %v5091, 1
    %v5097 = vpop.permute.xlu0 %5096
    %v5101 = vadd.f32 %v5076, %v5093
    %v5102 = vadd.f32 %v5077, %v5095
    %v5103 = vadd.f32 %v5078, %v5097
    %s5104 = sld [smem:[#allocation4 + $0x30]]
    %v5105 = vstv %s5104
    %v5106 = vmul.f32 %v808, %v5105
    %v5107 = vmul.f32 %v802, %v5105
    %v5108 = vmul.f32 %v810, %v5105
    %v5109 = vadd.f32 %v5106, 0.0
    %v5110 = vadd.f32 %v5107, 0.0
    %v5111 = vadd.f32 %v5108, 0.0
    %s5112 = sld [smem:[#allocation4 + $0x32]]
    %v5113 = vstv %s5112
    %v5114 = vmul.f32 %v808, %v5113
    %v5115 = vmul.f32 %v802, %v5113
    %v5116 = vmul.f32 %v810, %v5113
    %5120 = vrot.lane.b32.xlu0 %v5114, 1
    %v5121 = vpop.permute.xlu0 %5120
    %5122 = vrot.lane.b32.xlu0 %v5115, 1
    %v5123 = vpop.permute.xlu0 %5122
    %5124 = vrot.lane.b32.xlu0 %v5116, 1
    %v5125 = vpop.permute.xlu0 %5124
    %v5129 = vadd.f32 %v5109, %v5121
    %v5130 = vadd.f32 %v5110, %v5123
    %v5131 = vadd.f32 %v5111, %v5125
    %s5132 = sld [smem:[#allocation4 + $0x38]]
    %v5133 = vstv %s5132
    %v5134 = vmul.f32 %v808, %v5133
    %v5135 = vmul.f32 %v802, %v5133
    %v5136 = vmul.f32 %v810, %v5133
    %v5140 = vrot.slane %v5134, 7
    %v5141 = vrot.slane %v5135, 7
    %v5142 = vsel %vm210, %v5140, %v5141
    %v5143 = vrot.slane %v5136, 7
    %v5144 = vsel %vm210, %v5141, %v5143
    %v5148 = vadd.f32 %v5129, %v5140
    %v5149 = vadd.f32 %v5130, %v5142
    %v5150 = vadd.f32 %v5131, %v5144
    %s5151 = sld [smem:[#allocation4 + $0x3a]]
    %v5152 = vstv %s5151
    %v5153 = vmul.f32 %v808, %v5152
    %v5154 = vmul.f32 %v802, %v5152
    %v5155 = vmul.f32 %v810, %v5152
    %v5159 = vrot.slane %v5153, 7
    %v5160 = vrot.slane %v5154, 7
    %v5161 = vsel %vm210, %v5159, %v5160
    %v5162 = vrot.slane %v5155, 7
    %v5163 = vsel %vm210, %v5160, %v5162
    %5164 = vrot.lane.b32.xlu0 %v5159, 1
    %v5165 = vpop.permute.xlu0 %5164
    %5166 = vrot.lane.b32.xlu0 %v5161, 1
    %v5167 = vpop.permute.xlu0 %5166
    %5168 = vrot.lane.b32.xlu0 %v5163, 1
    %v5169 = vpop.permute.xlu0 %5168
    %v5173 = vadd.f32 %v5148, %v5165
    %v5174 = vadd.f32 %v5149, %v5167
    %v5175 = vadd.f32 %v5150, %v5169
    %s5176 = sld [smem:[#allocation4 + $0x70]]
    %v5177 = vstv %s5176
    %v5178 = vmul.f32 %v848, %v5177
    %v5179 = vmul.f32 %v842, %v5177
    %v5180 = vmul.f32 %v849, %v5177
    %v5181 = vadd.f32 %v5173, %v5178
    %v5182 = vadd.f32 %v5174, %v5179
    %v5183 = vadd.f32 %v5175, %v5180
    %s5184 = sld [smem:[#allocation4 + $0x72]]
    %v5185 = vstv %s5184
    %v5186 = vmul.f32 %v848, %v5185
    %v5187 = vmul.f32 %v842, %v5185
    %v5188 = vmul.f32 %v849, %v5185
    %5192 = vrot.lane.b32.xlu0 %v5186, 1
    %v5193 = vpop.permute.xlu0 %5192
    %5194 = vrot.lane.b32.xlu0 %v5187, 1
    %v5195 = vpop.permute.xlu0 %5194
    %5196 = vrot.lane.b32.xlu0 %v5188, 1
    %v5197 = vpop.permute.xlu0 %5196
    %v5201 = vadd.f32 %v5181, %v5193
    %v5202 = vadd.f32 %v5182, %v5195
    %v5203 = vadd.f32 %v5183, %v5197
    %s5204 = sld [smem:[#allocation4 + $0x78]]
    %v5205 = vstv %s5204
    %v5206 = vmul.f32 %v848, %v5205
    %v5207 = vmul.f32 %v842, %v5205
    %v5208 = vmul.f32 %v849, %v5205
    %v5212 = vrot.slane %v5206, 7
    %v5213 = vrot.slane %v5207, 7
    %v5214 = vsel %vm210, %v5212, %v5213
    %v5215 = vrot.slane %v5208, 7
    %v5216 = vsel %vm210, %v5213, %v5215
    %v5220 = vadd.f32 %v5201, %v5212
    %v5221 = vadd.f32 %v5202, %v5214
    %v5222 = vadd.f32 %v5203, %v5216
    %s5223 = sld [smem:[#allocation4 + $0x7a]]
    %v5224 = vstv %s5223
    %v5225 = vmul.f32 %v848, %v5224
    %v5226 = vmul.f32 %v842, %v5224
    %v5227 = vmul.f32 %v849, %v5224
    %v5231 = vrot.slane %v5225, 7
    %v5232 = vrot.slane %v5226, 7
    %v5233 = vsel %vm210, %v5231, %v5232
    %v5234 = vrot.slane %v5227, 7
    %v5235 = vsel %vm210, %v5232, %v5234
    %5236 = vrot.lane.b32.xlu0 %v5231, 1
    %v5237 = vpop.permute.xlu0 %5236
    %5238 = vrot.lane.b32.xlu0 %v5233, 1
    %v5239 = vpop.permute.xlu0 %5238
    %5240 = vrot.lane.b32.xlu0 %v5235, 1
    %v5241 = vpop.permute.xlu0 %5240
    %v5245 = vadd.f32 %v5220, %v5237
    %v5246 = vadd.f32 %v5221, %v5239
    %v5247 = vadd.f32 %v5222, %v5241
    %v5251 = vrot.slane %v5245, 2
    %v5252 = vrot.slane %v5246, 2
    %v5253 = vsel %vm1700, %v5251, %v5252
    %v5254 = vrot.slane %v5247, 2
    %v5255 = vsel %vm1700, %v5252, %v5254
    %5256 = vrot.lane.b32.xlu0 %v5253, 126
    %v5257 = vpop.permute.xlu0 %5256
    %5258 = vrot.lane.b32.xlu0 %v5255, 126
    %v5259 = vpop.permute.xlu0 %5258
    %5260 = vrot.lane.b32.xlu0 %v5254, 126
    %v5261 = vpop.permute.xlu0 %5260
    %v5262 = vsel %vm52, %v5257, 0
    %v5264 = vsel %vm52, %v5259, 0
    %v5266 = vsel %vm52, %v5261, 0
    %5268 = vmatprep.subr.mxu0 0.0
    %5269 = vmatpush1.msra.mxu0 %v877
    %5270 = vmatprep.subr.mxu0 0.0
    %5271 = vmatpush1.msra.mxu0 %v878
    %5272 = vmatprep.subr.mxu0 0.0
    %5273 = vmatpush1.msra.mxu0 %v1224
    %5274 = vmatprep.subr.mxu0 0.0
    %5275 = vmatpush1.msra.mxu0 0.0
    %5276 = vmatprep.subr.mxu0 0.0
    %5277 = vmatpush1.msra.mxu0 0.0
    %5278 = vmatprep.subr.mxu0 0.0
    %5279 = vmatpush1.msra.mxu0 0.0
    %5280 = vmatprep.subr.mxu0 0.0
    %5281 = vmatpush1.msra.mxu0 0.0
    %5282 = vmatprep.subr.mxu0 0.0
    %5283 = vmatpush1.msra.mxu0 0.0
    %5284 = vmatprep.subr.mxu0 0.0
    %5285 = vmatpush1.msra.mxu0 0.0
    %5286 = vmatprep.subr.mxu0 0.0
    %5287 = vmatpush1.msra.mxu0 0.0
    %5288 = vmatprep.subr.mxu0 0.0
    %5289 = vmatpush1.msra.mxu0 0.0
    %5290 = vmatprep.subr.mxu0 0.0
    %5291 = vmatpush1.msra.mxu0 0.0
    %5292 = vmatprep.subr.mxu0 0.0
    %5293 = vmatpush1.msra.mxu0 0.0
    %5294 = vmatprep.subr.mxu0 0.0
    %5295 = vmatpush1.msra.mxu0 0.0
    %5296 = vmatprep.subr.mxu0 0.0
    %5297 = vmatpush1.msra.mxu0 0.0
    %5298 = vmatprep.subr.mxu0 0.0
    %5299 = vmatpush1.msra.mxu0 0.0
    %5300 = vmatprep.subr.mxu0 0.0
    %5301 = vmatpush1.msra.mxu0 0.0
    %5302 = vmatprep.subr.mxu0 0.0
    %5303 = vmatpush1.msra.mxu0 0.0
    %5304 = vmatprep.subr.mxu0 0.0
    %5305 = vmatpush1.msra.mxu0 0.0
    %5306 = vmatprep.subr.mxu0 0.0
    %5307 = vmatpush1.msra.mxu0 0.0
    %5308 = vmatprep.subr.mxu0 0.0
    %5309 = vmatpush1.msra.mxu0 0.0
    %5310 = vmatprep.subr.mxu0 0.0
    %5311 = vmatpush1.msra.mxu0 0.0
    %5312 = vmatprep.subr.mxu0 0.0
    %5313 = vmatpush1.msra.mxu0 0.0
    %5314 = vmatprep.subr.mxu0 0.0
    %5315 = vmatpush1.msra.mxu0 0.0
    %5316 = vmatprep.subr.mxu0 0.0
    %5317 = vmatpush1.msra.mxu0 0.0
    %5318 = vmatprep.subr.mxu0 0.0
    %5319 = vmatpush1.msra.mxu0 0.0
    %5320 = vmatprep.subr.mxu0 0.0
    %5321 = vmatpush1.msra.mxu0 0.0
    %5322 = vmatprep.subr.mxu0 0.0
    %5323 = vmatpush1.msra.mxu0 0.0
    %5324 = vmatprep.subr.mxu0 0.0
    %5325 = vmatpush1.msra.mxu0 0.0
    %5326 = vmatprep.subr.mxu0 0.0
    %5327 = vmatpush1.msra.mxu0 0.0
    %5328 = vmatprep.subr.mxu0 0.0
    %5329 = vmatpush1.msra.mxu0 0.0
    %5330 = vmatprep.subr.mxu0 0.0
    %5331 = vmatpush1.msra.mxu0 0.0
    %5332 = vmatprep.mubr.f32.mxu0 0.0
    %5333 = vmatmul.mubr.f32.gmra.mrb[0].mxu0 %v5262
    %v5334 = vpop.f32.mrb[0].mxu0
    %v5335 = vadd.f32 0.0, %v5334
    %v5336 = vpop.f32.mrb[0].mxu0
    %5337 = vmatprep.mubr.f32.mxu0 0.0
    %5338 = vmatmul.mubr.f32.gmra.mrb[0].mxu0 %v5264
    %v5339 = vpop.f32.mrb[0].mxu0
    %v5340 = vadd.f32 0.0, %v5339
    %v5341 = vpop.f32.mrb[0].mxu0
    %5342 = vmatprep.mubr.f32.mxu0 0.0
    %5343 = vmatmul.mubr.f32.gmra.mrb[0].mxu0 %v5266
    %v5344 = vpop.f32.mrb[0].mxu0
    %v5345 = vadd.f32 0.0, %v5344
    %v5346 = vpop.f32.mrb[0].mxu0
    %5347 = vdwg.mxu0
    %v5351 = vrot.slane %v5101, 2
    %v5352 = vrot.slane %v5102, 2
    %v5353 = vsel %vm1700, %v5351, %v5352
    %v5354 = vrot.slane %v5103, 2
    %v5355 = vsel %vm1700, %v5352, %v5354
    %5356 = vrot.lane.b32.xlu0 %v5353, 127
    %v5357 = vpop.permute.xlu0 %5356
    %5358 = vrot.lane.b32.xlu0 %v5355, 127
    %v5359 = vpop.permute.xlu0 %5358
    %5360 = vrot.lane.b32.xlu0 %v5354, 127
    %v5361 = vpop.permute.xlu0 %5360
    %v5362 = vsel %vm52, %v5357, 0
    %v5364 = vsel %vm52, %v5359, 0
    %v5366 = vsel %vm52, %v5361, 0
    %5368 = vmatprep.subr.mxu0 0.0
    %5369 = vmatpush1.msra.mxu0 %v865
    %5370 = vmatprep.subr.mxu0 0.0
    %5371 = vmatpush1.msra.mxu0 %v866
    %5372 = vmatprep.subr.mxu0 0.0
    %5373 = vmatpush1.msra.mxu0 %v1327
    %5374 = vmatprep.subr.mxu0 0.0
    %5375 = vmatpush1.msra.mxu0 0.0
    %5376 = vmatprep.subr.mxu0 0.0
    %5377 = vmatpush1.msra.mxu0 0.0
    %5378 = vmatprep.subr.mxu0 0.0
    %5379 = vmatpush1.msra.mxu0 0.0
    %5380 = vmatprep.subr.mxu0 0.0
    %5381 = vmatpush1.msra.mxu0 0.0
    %5382 = vmatprep.subr.mxu0 0.0
    %5383 = vmatpush1.msra.mxu0 0.0
    %5384 = vmatprep.subr.mxu0 0.0
    %5385 = vmatpush1.msra.mxu0 0.0
    %5386 = vmatprep.subr.mxu0 0.0
    %5387 = vmatpush1.msra.mxu0 0.0
    %5388 = vmatprep.subr.mxu0 0.0
    %5389 = vmatpush1.msra.mxu0 0.0
    %5390 = vmatprep.subr.mxu0 0.0
    %5391 = vmatpush1.msra.mxu0 0.0
    %5392 = vmatprep.subr.mxu0 0.0
    %5393 = vmatpush1.msra.mxu0 0.0
    %5394 = vmatprep.subr.mxu0 0.0
    %5395 = vmatpush1.msra.mxu0 0.0
    %5396 = vmatprep.subr.mxu0 0.0
    %5397 = vmatpush1.msra.mxu0 0.0
    %5398 = vmatprep.subr.mxu0 0.0
    %5399 = vmatpush1.msra.mxu0 0.0
    %5400 = vmatprep.subr.mxu0 0.0
    %5401 = vmatpush1.msra.mxu0 0.0
    %5402 = vmatprep.subr.mxu0 0.0
    %5403 = vmatpush1.msra.mxu0 0.0
    %5404 = vmatprep.subr.mxu0 0.0
    %5405 = vmatpush1.msra.mxu0 0.0
    %5406 = vmatprep.subr.mxu0 0.0
    %5407 = vmatpush1.msra.mxu0 0.0
    %5408 = vmatprep.subr.mxu0 0.0
    %5409 = vmatpush1.msra.mxu0 0.0
    %5410 = vmatprep.subr.mxu0 0.0
    %5411 = vmatpush1.msra.mxu0 0.0
    %5412 = vmatprep.subr.mxu0 0.0
    %5413 = vmatpush1.msra.mxu0 0.0
    %5414 = vmatprep.subr.mxu0 0.0
    %5415 = vmatpush1.msra.mxu0 0.0
    %5416 = vmatprep.subr.mxu0 0.0
    %5417 = vmatpush1.msra.mxu0 0.0
    %5418 = vmatprep.subr.mxu0 0.0
    %5419 = vmatpush1.msra.mxu0 0.0
    %5420 = vmatprep.subr.mxu0 0.0
    %5421 = vmatpush1.msra.mxu0 0.0
    %5422 = vmatprep.subr.mxu0 0.0
    %5423 = vmatpush1.msra.mxu0 0.0
    %5424 = vmatprep.subr.mxu0 0.0
    %5425 = vmatpush1.msra.mxu0 0.0
    %5426 = vmatprep.subr.mxu0 0.0
    %5427 = vmatpush1.msra.mxu0 0.0
    %5428 = vmatprep.subr.mxu0 0.0
    %5429 = vmatpush1.msra.mxu0 0.0
    %5430 = vmatprep.subr.mxu0 0.0
    %5431 = vmatpush1.msra.mxu0 0.0
    %5432 = vmatprep.mubr.f32.mxu0 0.0
    %5433 = vmatmul.mubr.f32.gmra.mrb[0].mxu0 %v5362
    %v5434 = vpop.f32.mrb[0].mxu0
    %v5435 = vadd.f32 %v5335, %v5434
    %v5436 = vpop.f32.mrb[0].mxu0
    %5437 = vmatprep.mubr.f32.mxu0 0.0
    %5438 = vmatmul.mubr.f32.gmra.mrb[0].mxu0 %v5364
    %v5439 = vpop.f32.mrb[0].mxu0
    %v5440 = vadd.f32 %v5340, %v5439
    %v5441 = vpop.f32.mrb[0].mxu0
    %5442 = vmatprep.mubr.f32.mxu0 0.0
    %5443 = vmatmul.mubr.f32.gmra.mrb[0].mxu0 %v5366
    %v5444 = vpop.f32.mrb[0].mxu0
    %v5445 = vadd.f32 %v5345, %v5444
    %v5446 = vpop.f32.mrb[0].mxu0
    %5447 = vdwg.mxu0
    %v5449 = vsel %vm57, %v5445, 0
    %5451 = vmatprep.subr.mxu0 0.0
    %5452 = vmatpush1.msra.mxu0 %v5435
    %5453 = vmatprep.subr.mxu0 0.0
    %5454 = vmatpush1.msra.mxu0 %v5440
    %5455 = vmatprep.subr.mxu0 0.0
    %5456 = vmatpush1.msra.mxu0 %v5449
    %5457 = vmatprep.subr.mxu0 0.0
    %5458 = vmatpush1.msra.mxu0 0.0
    %5459 = vmatprep.subr.mxu0 0.0
    %5460 = vmatpush1.msra.mxu0 0.0
    %5461 = vmatprep.subr.mxu0 0.0
    %5462 = vmatpush1.msra.mxu0 0.0
    %5463 = vmatprep.subr.mxu0 0.0
    %5464 = vmatpush1.msra.mxu0 0.0
    %5465 = vmatprep.subr.mxu0 0.0
    %5466 = vmatpush1.msra.mxu0 0.0
    %5467 = vmatprep.subr.mxu0 0.0
    %5468 = vmatpush1.msra.mxu0 0.0
    %5469 = vmatprep.subr.mxu0 0.0
    %5470 = vmatpush1.msra.mxu0 0.0
    %5471 = vmatprep.subr.mxu0 0.0
    %5472 = vmatpush1.msra.mxu0 0.0
    %5473 = vmatprep.subr.mxu0 0.0
    %5474 = vmatpush1.msra.mxu0 0.0
    %5475 = vmatprep.subr.mxu0 0.0
    %5476 = vmatpush1.msra.mxu0 0.0
    %5477 = vmatprep.subr.mxu0 0.0
    %5478 = vmatpush1.msra.mxu0 0.0
    %5479 = vmatprep.subr.mxu0 0.0
    %5480 = vmatpush1.msra.mxu0 0.0
    %5481 = vmatprep.subr.mxu0 0.0
    %5482 = vmatpush1.msra.mxu0 0.0
    %5483 = vmatprep.subr.mxu0 0.0
    %5484 = vmatpush1.msra.mxu0 0.0
    %5485 = vmatprep.subr.mxu0 0.0
    %5486 = vmatpush1.msra.mxu0 0.0
    %5487 = vmatprep.subr.mxu0 0.0
    %5488 = vmatpush1.msra.mxu0 0.0
    %5489 = vmatprep.subr.mxu0 0.0
    %5490 = vmatpush1.msra.mxu0 0.0
    %5491 = vmatprep.subr.mxu0 0.0
    %5492 = vmatpush1.msra.mxu0 0.0
    %5493 = vmatprep.subr.mxu0 0.0
    %5494 = vmatpush1.msra.mxu0 0.0
    %5495 = vmatprep.subr.mxu0 0.0
    %5496 = vmatpush1.msra.mxu0 0.0
    %5497 = vmatprep.subr.mxu0 0.0
    %5498 = vmatpush1.msra.mxu0 0.0
    %5499 = vmatprep.subr.mxu0 0.0
    %5500 = vmatpush1.msra.mxu0 0.0
    %5501 = vmatprep.subr.mxu0 0.0
    %5502 = vmatpush1.msra.mxu0 0.0
    %5503 = vmatprep.subr.mxu0 0.0
    %5504 = vmatpush1.msra.mxu0 0.0
    %5505 = vmatprep.subr.mxu0 0.0
    %5506 = vmatpush1.msra.mxu0 0.0
    %5507 = vmatprep.subr.mxu0 0.0
    %5508 = vmatpush1.msra.mxu0 0.0
    %5509 = vmatprep.subr.mxu0 0.0
    %5510 = vmatpush1.msra.mxu0 0.0
    %5511 = vmatprep.subr.mxu0 0.0
    %5512 = vmatpush1.msra.mxu0 0.0
    %5513 = vmatprep.subr.mxu0 0.0
    %5514 = vmatpush1.msra.mxu0 0.0
    %5515 = vmatprep.mubr.f32.mxu0 0.0
    %5516 = vmatmul.mubr.f32.gmra.mrb[0].mxu0 %v1899
    %v5517 = vpop.f32.mrb[0].mxu0
    %v5518 = vadd.f32 0.0, %v5517
    %v5519 = vpop.f32.mrb[0].mxu0
    %5520 = vmatprep.mubr.f32.mxu0 0.0
    %5521 = vmatmul.mubr.f32.gmra.mrb[0].mxu0 %v1902
    %v5522 = vpop.f32.mrb[0].mxu0
    %v5523 = vadd.f32 0.0, %v5522
    %v5524 = vpop.f32.mrb[0].mxu0
    %5525 = vmatprep.mubr.f32.mxu0 0.0
    %5526 = vmatmul.mubr.f32.gmra.mrb[0].mxu0 %v1905
    %v5527 = vpop.f32.mrb[0].mxu0
    %v5528 = vadd.f32 0.0, %v5527
    %v5529 = vpop.f32.mrb[0].mxu0
    %5530 = vmatprep.mubr.f32.mxu0 0.0
    %5531 = vmatmul.mubr.f32.gmra.mrb[0].mxu0 %v1908
    %v5532 = vpop.f32.mrb[0].mxu0
    %v5533 = vadd.f32 0.0, %v5532
    %v5534 = vpop.f32.mrb[0].mxu0
    %5535 = vmatprep.mubr.f32.mxu0 0.0
    %5536 = vmatmul.mubr.f32.gmra.mrb[0].mxu0 %v1911
    %v5537 = vpop.f32.mrb[0].mxu0
    %v5538 = vadd.f32 0.0, %v5537
    %v5539 = vpop.f32.mrb[0].mxu0
    %5540 = vdwg.mxu0
    %v5542 = vsel %vm57, %v4957, 0
    %5544 = vmatprep.subr.mxu0 0.0
    %5545 = vmatpush1.msra.mxu0 %v4947
    %5546 = vmatprep.subr.mxu0 0.0
    %5547 = vmatpush1.msra.mxu0 %v4952
    %5548 = vmatprep.subr.mxu0 0.0
    %5549 = vmatpush1.msra.mxu0 %v5542
    %5550 = vmatprep.subr.mxu0 0.0
    %5551 = vmatpush1.msra.mxu0 0.0
    %5552 = vmatprep.subr.mxu0 0.0
    %5553 = vmatpush1.msra.mxu0 0.0
    %5554 = vmatprep.subr.mxu0 0.0
    %5555 = vmatpush1.msra.mxu0 0.0
    %5556 = vmatprep.subr.mxu0 0.0
    %5557 = vmatpush1.msra.mxu0 0.0
    %5558 = vmatprep.subr.mxu0 0.0
    %5559 = vmatpush1.msra.mxu0 0.0
    %5560 = vmatprep.subr.mxu0 0.0
    %5561 = vmatpush1.msra.mxu0 0.0
    %5562 = vmatprep.subr.mxu0 0.0
    %5563 = vmatpush1.msra.mxu0 0.0
    %5564 = vmatprep.subr.mxu0 0.0
    %5565 = vmatpush1.msra.mxu0 0.0
    %5566 = vmatprep.subr.mxu0 0.0
    %5567 = vmatpush1.msra.mxu0 0.0
    %5568 = vmatprep.subr.mxu0 0.0
    %5569 = vmatpush1.msra.mxu0 0.0
    %5570 = vmatprep.subr.mxu0 0.0
    %5571 = vmatpush1.msra.mxu0 0.0
    %5572 = vmatprep.subr.mxu0 0.0
    %5573 = vmatpush1.msra.mxu0 0.0
    %5574 = vmatprep.subr.mxu0 0.0
    %5575 = vmatpush1.msra.mxu0 0.0
    %5576 = vmatprep.subr.mxu0 0.0
    %5577 = vmatpush1.msra.mxu0 0.0
    %5578 = vmatprep.subr.mxu0 0.0
    %5579 = vmatpush1.msra.mxu0 0.0
    %5580 = vmatprep.subr.mxu0 0.0
    %5581 = vmatpush1.msra.mxu0 0.0
    %5582 = vmatprep.subr.mxu0 0.0
    %5583 = vmatpush1.msra.mxu0 0.0
    %5584 = vmatprep.subr.mxu0 0.0
    %5585 = vmatpush1.msra.mxu0 0.0
    %5586 = vmatprep.subr.mxu0 0.0
    %5587 = vmatpush1.msra.mxu0 0.0
    %5588 = vmatprep.subr.mxu0 0.0
    %5589 = vmatpush1.msra.mxu0 0.0
    %5590 = vmatprep.subr.mxu0 0.0
    %5591 = vmatpush1.msra.mxu0 0.0
    %5592 = vmatprep.subr.mxu0 0.0
    %5593 = vmatpush1.msra.mxu0 0.0
    %5594 = vmatprep.subr.mxu0 0.0
    %5595 = vmatpush1.msra.mxu0 0.0
    %5596 = vmatprep.subr.mxu0 0.0
    %5597 = vmatpush1.msra.mxu0 0.0
    %5598 = vmatprep.subr.mxu0 0.0
    %5599 = vmatpush1.msra.mxu0 0.0
    %5600 = vmatprep.subr.mxu0 0.0
    %5601 = vmatpush1.msra.mxu0 0.0
    %5602 = vmatprep.subr.mxu0 0.0
    %5603 = vmatpush1.msra.mxu0 0.0
    %5604 = vmatprep.subr.mxu0 0.0
    %5605 = vmatpush1.msra.mxu0 0.0
    %5606 = vmatprep.subr.mxu0 0.0
    %5607 = vmatpush1.msra.mxu0 0.0
    %5608 = vmatprep.mubr.f32.mxu0 0.0
    %5609 = vmatmul.mubr.f32.gmra.mrb[0].mxu0 %v2007
    %v5610 = vpop.f32.mrb[0].mxu0
    %v5611 = vadd.f32 %v5518, %v5610
    %v5612 = vpop.f32.mrb[0].mxu0
    %5613 = vmatprep.mubr.f32.mxu0 0.0
    %5614 = vmatmul.mubr.f32.gmra.mrb[0].mxu0 %v2010
    %v5615 = vpop.f32.mrb[0].mxu0
    %v5616 = vadd.f32 %v5523, %v5615
    %v5617 = vpop.f32.mrb[0].mxu0
    %5618 = vmatprep.mubr.f32.mxu0 0.0
    %5619 = vmatmul.mubr.f32.gmra.mrb[0].mxu0 %v2013
    %v5620 = vpop.f32.mrb[0].mxu0
    %v5621 = vadd.f32 %v5528, %v5620
    %v5622 = vpop.f32.mrb[0].mxu0
    %5623 = vmatprep.mubr.f32.mxu0 0.0
    %5624 = vmatmul.mubr.f32.gmra.mrb[0].mxu0 %v2016
    %v5625 = vpop.f32.mrb[0].mxu0
    %v5626 = vadd.f32 %v5533, %v5625
    %v5627 = vpop.f32.mrb[0].mxu0
    %5628 = vmatprep.mubr.f32.mxu0 0.0
    %5629 = vmatmul.mubr.f32.gmra.mrb[0].mxu0 %v2019
    %v5630 = vpop.f32.mrb[0].mxu0
    %v5631 = vadd.f32 %v5538, %v5630
    %v5632 = vpop.f32.mrb[0].mxu0
    %5633 = vdwg.mxu0
    %v5634 = vmax.f32 %v5611, 0.0
    %v5635 = vmax.f32 %v5616, 0.0
    %v5636 = vmax.f32 %v5621, 0.0
    %v5637 = vmax.f32 %v5626, 0.0
    %v5638 = vmax.f32 %v5631, 0.0
    %s5639 = scalar_lea.vmem %s3, 120
    %5640 = vst.msk [vmem:[%s5639] sm:$0xff] %vm2119, %v5634
    %5641 = vst.msk [vmem:[%s5639 + $0x8] sm:$0xff] %vm2119, %v5635
    %5642 = vst.msk [vmem:[%s5639 + $0x10] sm:$0xff] %vm2119, %v5636
    %5643 = vst.msk [vmem:[%s5639 + $0x18] sm:$0xff] %vm2119, %v5637
    %5644 = vst.msk [vmem:[%s5639 + $0x20] sm:$0x3f] %vm2124, %v5638
    // Predicated region
    $region22: #{model_forward.1} parent=1 // pred_check
      _
    $region23: #{model_forward.1} parent=1 // pred_check_branch
      %5646 = sbr.rel (0) target = $region25
    $region24: #{model_forward.1} parent=1 // pred_region
      _
    $region25: #{model_forward.1} parent=1 // pred_fallthru
      _
    // Predicated region
    $region26: #{model_forward.1} parent=1 // pred_check
      _
    $region27: #{model_forward.1} parent=1 // pred_check_branch
      %5648 = sbr.rel (0) target = $region29
    $region28: #{model_forward.1} parent=1 // pred_region
      _
    $region29: #{model_forward.1} parent=1 // pred_fallthru
      _
    %5649 = vsyncpa [#allocation3], 1
    %5650 = vsyncpa [#allocation5], 1

</llo_original>
